<compile_context>
chip_gen: v5e
topology: v5e:2x2
jax: 0.10.0
libtpu: 0.0.40
codegen_flags: <defaults>
</compile_context>

<pallas_src>
import functools

import jax
import jax.numpy as jnp
from jax.experimental import pallas as pl
from jax.experimental.pallas import tpu as pltpu

# ---- model hyper-parameters (from RNN.__init__) ----
T = 25        # min_words_in_sentence (sequence length, also Linear in-features)
E = 100       # embedding_dim
H = 25        # hidden_size
VOCAB = 64    # synthetic vocab size (real one comes from big_vocab.json)
B = 8         # small demo batch (module uses 80)

GATE = 128                  # one 128-lane block per gate (lane-aligned slices)
HP = 128                    # padded hidden width (lanes of h / c, recurrent K)
GATE_ORDER = (0, 1, 3, 2)   # PyTorch gate order [i, f, g, o] -> blocks [i, f, o, g]


def lstm_recurrence_kernel(gx_ref, whh_ref, wlin_ref, blin_ref,
                           y_ref, hn_ref, cn_ref, *, h_real):
    """Serial LSTM recurrence + folded Linear(T->1) + sigmoid.

    gx_ref  : (T, Bb, 4*GATE) f32   precomputed x_t @ W_ih^T + bias, per-gate 128-lane
                                    blocks in [i, f, o, g] order (padded lanes zero)
    whh_ref : (HP, 4*GATE)    bf16  zero-padded W_hh^T slab (same gate layout)
    wlin_ref: (T,)            f32   Linear(25->1) weight, in SMEM
    blin_ref: (1,)            f32   Linear bias, in SMEM
    y_ref   : (Bb, 1)         f32   sigmoid(Linear(lstm_out[:, :, -1]))
    hn_ref  : (Bb, HP)        f32   final hidden state (lane-padded; wrapper slices)
    cn_ref  : (Bb, HP)        f32   final cell state   (lane-padded; wrapper slices)
    """
    t_steps, bb, g4 = gx_ref.shape
    gate = g4 // 4
    hp = hn_ref.shape[1]

    # Loop-invariant recurrent weight: read once, closed over by every step.
    whh = whh_ref[...]                                   # (HP, 4*GATE) bf16

    h = jnp.zeros((bb, hp), jnp.float32)                 # hidden=None in forward()
    c = jnp.zeros((bb, hp), jnp.float32)
    acc = jnp.zeros((bb, hp), jnp.float32)               # folded Linear accumulator

    # Fixed trip count (T=25): fully unrolled so the scheduler can overlap the
    # MXU push of step t with the VPU/EUP tail of step t-1.
    for t in range(t_steps):
        gates = gx_ref[t] + jnp.dot(h.astype(whh.dtype), whh,
                                    preferred_element_type=jnp.float32)  # (Bb, 4*GATE)
        sig = jax.nn.sigmoid(gates[:, :3 * gate])        # [ i | f | o ] in one call
        i_g = sig[:, 0 * gate:1 * gate]
        f_g = sig[:, 1 * gate:2 * gate]
        o_g = sig[:, 2 * gate:3 * gate]
        g_g = jnp.tanh(gates[:, 3 * gate:4 * gate])
        c = f_g * c + i_g * g_g                          # padded lanes stay exactly 0
        h = o_g * jnp.tanh(c)
        acc = acc + wlin_ref[t] * h                      # full-vreg FMA (scalar from SMEM)

    hn_ref[...] = h
    cn_ref[...] = c
    # lstm_out[:, :, -1] at step t lives in lane (h_real - 1) of h_t, so the logit is
    # acc[:, h_real-1] + b_lin  (single lane extraction, once).
    logit = acc[:, h_real - 1:h_real] + blin_ref[0]      # (Bb, 1)
    y_ref[...] = jax.nn.sigmoid(logit)


def _pack_gate_weight(w, rows_pad):
    """(4H, in_dim) PyTorch gate-stacked weight -> (rows_pad, 4*GATE) transposed slab.

    Zero-padded; one 128-lane block per gate, blocks ordered [i, f, o, g].
    """
    h = w.shape[0] // 4
    in_dim = w.shape[1]
    out = jnp.zeros((rows_pad, 4 * GATE), jnp.float32)
    for blk, g in enumerate(GATE_ORDER):
        out = out.at[:in_dim, blk * GATE: blk * GATE + h].set(w[g * h:(g + 1) * h, :].T)
    return out


@jax.jit
def rnn_forward(x, params):
    """x: (B, T) int32 token ids. Returns (y (B,1), (h_n (1,B,H), c_n (1,B,H)))."""
    emb_table, w_ih, w_hh, b_ih, b_hh, w_lin, b_lin = params
    Bq, Tq = x.shape
    Hq = w_hh.shape[1]

    B_pad = ((Bq + 7) // 8) * 8
    nb = 2 if (B_pad % 16 == 0 and B_pad >= 16) else 1   # v7x: split batch over 2 TCs
    Bb = B_pad // nb

    # ---- one-shot XLA glue (off the serial critical path) ----
    # Embedding gather + hoisted batched input projection for ALL timesteps at once.
    emb = jnp.take(emb_table, x, axis=0).astype(jnp.float32)         # (B, T, E)
    gx = jnp.einsum('bte,ge->btg', emb, w_ih.astype(jnp.float32)) \
        + (b_ih + b_hh).astype(jnp.float32)                          # (B, T, 4H)
    # Re-block into per-gate 128-lane blocks ([i,f,o,g]), time-major, batch-padded.
    gx_tm = jnp.transpose(gx, (1, 0, 2))                             # (T, B, 4H)
    gx_p = jnp.zeros((Tq, B_pad, 4 * GATE), jnp.float32)
    for blk, g in enumerate(GATE_ORDER):
        gx_p = gx_p.at[:, :Bq, blk * GATE: blk * GATE + Hq].set(
            gx_tm[:, :, g * Hq:(g + 1) * Hq])

    whh_p = _pack_gate_weight(w_hh, HP).astype(jnp.bfloat16)         # (128, 512) bf16 MXU operand
    wlin_v = w_lin.reshape(-1).astype(jnp.float32)                   # (T,)  -> SMEM
    blin_v = b_lin.reshape(-1).astype(jnp.float32)                   # (1,)  -> SMEM

    smem = pltpu.MemorySpace.SMEM
    grid_spec = pltpu.PrefetchScalarGridSpec(
        num_scalar_prefetch=0,
        grid=(nb,),
        in_specs=[
            pl.BlockSpec((Tq, Bb, 4 * GATE), lambda b: (0, b, 0)),   # gates_x (batch-blocked)
            pl.BlockSpec((HP, 4 * GATE), lambda b: (0, 0)),          # W_hh^T slab
            pl.BlockSpec(memory_space=smem),                         # Linear weight (T,)
            pl.BlockSpec(memory_space=smem),                         # Linear bias (1,)
        ],
        out_specs=[
            pl.BlockSpec((Bb, 1), lambda b: (b, 0)),                 # y
            pl.BlockSpec((Bb, HP), lambda b: (b, 0)),                # h_n (lane-dense)
            pl.BlockSpec((Bb, HP), lambda b: (b, 0)),                # c_n (lane-dense)
        ],
    )

    y_pad, hn_pad, cn_pad = pl.pallas_call(
        functools.partial(lstm_recurrence_kernel, h_real=Hq),
        out_shape=(jax.ShapeDtypeStruct((B_pad, 1), jnp.float32),
                   jax.ShapeDtypeStruct((B_pad, HP), jnp.float32),
                   jax.ShapeDtypeStruct((B_pad, HP), jnp.float32)),
        grid_spec=grid_spec,
        compiler_params=pltpu.CompilerParams(
            dimension_semantics=("parallel",)),
    )(gx_p, whh_p, wlin_v, blin_v)

    y = y_pad[:Bq]                                      # (B, 1)
    h_n = hn_pad[:Bq, :Hq][None, :, :]                  # (1, B, H) (PyTorch h_n)
    c_n = cn_pad[:Bq, :Hq][None, :, :]                  # (1, B, H) (PyTorch c_n)
    return y, (h_n, c_n)


def rnn_forward_ref(x, params):
    """Pure-JAX (f32) reference matching PyTorch semantics, for correctness check."""
    emb_table, w_ih, w_hh, b_ih, b_hh, w_lin, b_lin = params
    Bq, Tq = x.shape
    Hq = w_hh.shape[1]
    emb = jnp.take(emb_table, x, axis=0).astype(jnp.float32)   # (B, T, E)
    h = jnp.zeros((Bq, Hq), jnp.float32)
    c = jnp.zeros((Bq, Hq), jnp.float32)
    outs = []
    for t in range(Tq):
        gates = emb[:, t, :] @ w_ih.T + b_ih + h @ w_hh.T + b_hh
        i_g = jax.nn.sigmoid(gates[:, 0 * Hq:1 * Hq])
        f_g = jax.nn.sigmoid(gates[:, 1 * Hq:2 * Hq])
        g_g = jnp.tanh(gates[:, 2 * Hq:3 * Hq])
        o_g = jax.nn.sigmoid(gates[:, 3 * Hq:4 * Hq])
        c = f_g * c + i_g * g_g
        h = o_g * jnp.tanh(c)
        outs.append(h)
    lstm_out = jnp.stack(outs, axis=1)                          # (B, T, H)
    y = jax.nn.sigmoid(lstm_out[:, :, -1] @ w_lin.T + b_lin)    # (B, 1)
    return y, (h[None], c[None])


def init_params(key):
    """Deterministic synthetic parameters matching the PyTorch module's shapes."""
    ks = jax.random.split(key, 7)
    k_lstm = 1.0 / jnp.sqrt(jnp.float32(H))
    k_lin = 1.0 / jnp.sqrt(jnp.float32(T))
    emb_table = jax.random.normal(ks[0], (VOCAB, E), jnp.float32)          # nn.Embedding
    w_ih = jax.random.uniform(ks[1], (4 * H, E), jnp.float32, -k_lstm, k_lstm)
    w_hh = jax.random.uniform(ks[2], (4 * H, H), jnp.float32, -k_lstm, k_lstm)
    b_ih = jax.random.uniform(ks[3], (4 * H,), jnp.float32, -k_lstm, k_lstm)
    b_hh = jax.random.uniform(ks[4], (4 * H,), jnp.float32, -k_lstm, k_lstm)
    w_lin = jax.random.uniform(ks[5], (1, T), jnp.float32, -k_lin, k_lin)  # Linear(25, 1)
    b_lin = jax.random.uniform(ks[6], (1,), jnp.float32, -k_lin, k_lin)
    return (emb_table, w_ih, w_hh, b_ih, b_hh, w_lin, b_lin)


if __name__ == "__main__":
    key = jax.random.PRNGKey(0)
    k_par, k_x = jax.random.split(key)
    params = init_params(k_par)
    x = jax.random.randint(k_x, (B, T), 0, VOCAB, dtype=jnp.int32)  # token ids

    y, (h_n, c_n) = rnn_forward(x, params)
    jax.block_until_ready((y, h_n, c_n))

    # Correctness check against a pure-f32 reference. Tolerances account for the
    # bf16 MXU operands (h, W_hh) on the recurrent path (f32 accumulation kept).
    y_ref, (h_ref, c_ref) = rnn_forward_ref(x, params)
    assert y.shape == (B, 1) and h_n.shape == (1, B, H) and c_n.shape == (1, B, H)
    assert jnp.allclose(y, y_ref, atol=1e-2), "y mismatch"
    assert jnp.allclose(h_n, h_ref, atol=2e-2), "h_n mismatch"
    assert jnp.allclose(c_n, c_ref, atol=2e-2), "c_n mismatch"

    print("KERNEL_OK")
</pallas_src>

<mosaic_0001>
module attributes {stable_mosaic.version = 11 : i64} {
  func.func @lstm_recurrence_kernel(%arg0: i32, %arg1: memref<25x8x512xf32, #tpu.memory_space<vmem>>, %arg2: memref<128x512xbf16, #tpu.memory_space<vmem>>, %arg3: memref<25xf32, #tpu.memory_space<smem>>, %arg4: memref<1xf32, #tpu.memory_space<smem>>, %arg5: memref<8x1xf32, #tpu.memory_space<vmem>>, %arg6: memref<8x128xf32, #tpu.memory_space<vmem>>, %arg7: memref<8x128xf32, #tpu.memory_space<vmem>>) attributes {dimension_semantics = [#tpu.dimension_semantics<parallel>], iteration_bounds = array<i64: 1>, scalar_prefetch = 0 : i64, scratch_operands = 0 : i64, tpu.core_type = #tpu.core_type<tc>, window_params = [{transform_indices = @transform_0, window_bounds = array<i64: 25, 8, 512>}, {pipeline_mode = #tpu.pipeline_mode<synchronous>, transform_indices = @transform_1, window_bounds = array<i64: 128, 512>}, {transform_indices = @transform_2, window_bounds = array<i64: 25>}, {transform_indices = @transform_3, window_bounds = array<i64: 1>}, {transform_indices = @transform_4, window_bounds = array<i64: 8, 1>}, {transform_indices = @transform_5, window_bounds = array<i64: 8, 128>}, {transform_indices = @transform_6, window_bounds = array<i64: 8, 128>}]} {
    %c0 = arith.constant 0 : index
    %c0_0 = arith.constant 0 : index
    %0 = vector.load %arg2[%c0, %c0_0] : memref<128x512xbf16, #tpu.memory_space<vmem>>, vector<128x512xbf16>
    %cst = arith.constant 0.000000e+00 : f32
    %1 = vector.broadcast %cst : f32 to vector<8x128xf32>
    %cst_1 = arith.constant 0.000000e+00 : f32
    %2 = vector.broadcast %cst_1 : f32 to vector<8x128xf32>
    %cst_2 = arith.constant 0.000000e+00 : f32
    %3 = vector.broadcast %cst_2 : f32 to vector<8x128xf32>
    %c0_3 = arith.constant 0 : index
    %c0_4 = arith.constant 0 : index
    %c0_5 = arith.constant 0 : index
    %4 = vector.load %arg1[%c0_3, %c0_4, %c0_5] : memref<25x8x512xf32, #tpu.memory_space<vmem>>, vector<1x8x512xf32>
    %5 = vector.shape_cast %4 : vector<1x8x512xf32> to vector<8x512xf32>
    %6 = arith.truncf %1 : vector<8x128xf32> to vector<8x128xbf16>
    %cst_6 = arith.constant dense<0.000000e+00> : vector<8x512xf32>
    %7 = tpu.matmul %6, %0, %cst_6 {dimension_numbers = #tpu.dot_dimension_numbers<[1], [0], [0], [1], [0, 0, 1, 1], [], []>} : vector<8x128xbf16>, vector<128x512xbf16>, vector<8x512xf32> -> vector<8x512xf32>
    %8 = arith.addf %5, %7 : vector<8x512xf32>
    %9 = vector.extract_strided_slice %8 {offsets = [0, 0], sizes = [8, 384], strides = [1, 1]} : vector<8x512xf32> to vector<8x384xf32>
    %10 = arith.negf %9 : vector<8x384xf32>
    %11 = math.exp %10 : vector<8x384xf32>
    %cst_7 = arith.constant 1.000000e+00 : f32
    %12 = vector.broadcast %cst_7 : f32 to vector<8x384xf32>
    %13 = arith.addf %12, %11 : vector<8x384xf32>
    %14 = arith.divf %12, %13 : vector<8x384xf32>
    %15 = vector.extract_strided_slice %14 {offsets = [0, 0], sizes = [8, 128], strides = [1, 1]} : vector<8x384xf32> to vector<8x128xf32>
    %16 = vector.extract_strided_slice %14 {offsets = [0, 128], sizes = [8, 128], strides = [1, 1]} : vector<8x384xf32> to vector<8x128xf32>
    %17 = vector.extract_strided_slice %14 {offsets = [0, 256], sizes = [8, 128], strides = [1, 1]} : vector<8x384xf32> to vector<8x128xf32>
    %18 = vector.extract_strided_slice %8 {offsets = [0, 384], sizes = [8, 128], strides = [1, 1]} : vector<8x512xf32> to vector<8x128xf32>
    %19 = math.tanh %18 : vector<8x128xf32>
    %20 = arith.mulf %16, %2 : vector<8x128xf32>
    %21 = arith.mulf %15, %19 : vector<8x128xf32>
    %22 = arith.addf %20, %21 : vector<8x128xf32>
    %23 = math.tanh %22 : vector<8x128xf32>
    %24 = arith.mulf %17, %23 : vector<8x128xf32>
    %c0_8 = arith.constant 0 : index
    %25 = memref.load %arg3[%c0_8] : memref<25xf32, #tpu.memory_space<smem>>
    %26 = vector.broadcast %25 : f32 to vector<8x128xf32>
    %27 = arith.mulf %26, %24 : vector<8x128xf32>
    %28 = arith.addf %3, %27 : vector<8x128xf32>
    %c1 = arith.constant 1 : index
    %c0_9 = arith.constant 0 : index
    %c0_10 = arith.constant 0 : index
    %29 = vector.load %arg1[%c1, %c0_9, %c0_10] : memref<25x8x512xf32, #tpu.memory_space<vmem>>, vector<1x8x512xf32>
    %30 = vector.shape_cast %29 : vector<1x8x512xf32> to vector<8x512xf32>
    %31 = arith.truncf %24 : vector<8x128xf32> to vector<8x128xbf16>
    %cst_11 = arith.constant dense<0.000000e+00> : vector<8x512xf32>
    %32 = tpu.matmul %31, %0, %cst_11 {dimension_numbers = #tpu.dot_dimension_numbers<[1], [0], [0], [1], [0, 0, 1, 1], [], []>} : vector<8x128xbf16>, vector<128x512xbf16>, vector<8x512xf32> -> vector<8x512xf32>
    %33 = arith.addf %30, %32 : vector<8x512xf32>
    %34 = vector.extract_strided_slice %33 {offsets = [0, 0], sizes = [8, 384], strides = [1, 1]} : vector<8x512xf32> to vector<8x384xf32>
    %35 = arith.negf %34 : vector<8x384xf32>
    %36 = math.exp %35 : vector<8x384xf32>
    %cst_12 = arith.constant 1.000000e+00 : f32
    %37 = vector.broadcast %cst_12 : f32 to vector<8x384xf32>
    %38 = arith.addf %37, %36 : vector<8x384xf32>
    %39 = arith.divf %37, %38 : vector<8x384xf32>
    %40 = vector.extract_strided_slice %39 {offsets = [0, 0], sizes = [8, 128], strides = [1, 1]} : vector<8x384xf32> to vector<8x128xf32>
    %41 = vector.extract_strided_slice %39 {offsets = [0, 128], sizes = [8, 128], strides = [1, 1]} : vector<8x384xf32> to vector<8x128xf32>
    %42 = vector.extract_strided_slice %39 {offsets = [0, 256], sizes = [8, 128], strides = [1, 1]} : vector<8x384xf32> to vector<8x128xf32>
    %43 = vector.extract_strided_slice %33 {offsets = [0, 384], sizes = [8, 128], strides = [1, 1]} : vector<8x512xf32> to vector<8x128xf32>
    %44 = math.tanh %43 : vector<8x128xf32>
    %45 = arith.mulf %41, %22 : vector<8x128xf32>
    %46 = arith.mulf %40, %44 : vector<8x128xf32>
    %47 = arith.addf %45, %46 : vector<8x128xf32>
    %48 = math.tanh %47 : vector<8x128xf32>
    %49 = arith.mulf %42, %48 : vector<8x128xf32>
    %c1_13 = arith.constant 1 : index
    %50 = memref.load %arg3[%c1_13] : memref<25xf32, #tpu.memory_space<smem>>
    %51 = vector.broadcast %50 : f32 to vector<8x128xf32>
    %52 = arith.mulf %51, %49 : vector<8x128xf32>
    %53 = arith.addf %28, %52 : vector<8x128xf32>
    %c2 = arith.constant 2 : index
    %c0_14 = arith.constant 0 : index
    %c0_15 = arith.constant 0 : index
    %54 = vector.load %arg1[%c2, %c0_14, %c0_15] : memref<25x8x512xf32, #tpu.memory_space<vmem>>, vector<1x8x512xf32>
    %55 = vector.shape_cast %54 : vector<1x8x512xf32> to vector<8x512xf32>
    %56 = arith.truncf %49 : vector<8x128xf32> to vector<8x128xbf16>
    %cst_16 = arith.constant dense<0.000000e+00> : vector<8x512xf32>
    %57 = tpu.matmul %56, %0, %cst_16 {dimension_numbers = #tpu.dot_dimension_numbers<[1], [0], [0], [1], [0, 0, 1, 1], [], []>} : vector<8x128xbf16>, vector<128x512xbf16>, vector<8x512xf32> -> vector<8x512xf32>
    %58 = arith.addf %55, %57 : vector<8x512xf32>
    %59 = vector.extract_strided_slice %58 {offsets = [0, 0], sizes = [8, 384], strides = [1, 1]} : vector<8x512xf32> to vector<8x384xf32>
    %60 = arith.negf %59 : vector<8x384xf32>
    %61 = math.exp %60 : vector<8x384xf32>
    %cst_17 = arith.constant 1.000000e+00 : f32
    %62 = vector.broadcast %cst_17 : f32 to vector<8x384xf32>
    %63 = arith.addf %62, %61 : vector<8x384xf32>
    %64 = arith.divf %62, %63 : vector<8x384xf32>
    %65 = vector.extract_strided_slice %64 {offsets = [0, 0], sizes = [8, 128], strides = [1, 1]} : vector<8x384xf32> to vector<8x128xf32>
    %66 = vector.extract_strided_slice %64 {offsets = [0, 128], sizes = [8, 128], strides = [1, 1]} : vector<8x384xf32> to vector<8x128xf32>
    %67 = vector.extract_strided_slice %64 {offsets = [0, 256], sizes = [8, 128], strides = [1, 1]} : vector<8x384xf32> to vector<8x128xf32>
    %68 = vector.extract_strided_slice %58 {offsets = [0, 384], sizes = [8, 128], strides = [1, 1]} : vector<8x512xf32> to vector<8x128xf32>
    %69 = math.tanh %68 : vector<8x128xf32>
    %70 = arith.mulf %66, %47 : vector<8x128xf32>
    %71 = arith.mulf %65, %69 : vector<8x128xf32>
    %72 = arith.addf %70, %71 : vector<8x128xf32>
    %73 = math.tanh %72 : vector<8x128xf32>
    %74 = arith.mulf %67, %73 : vector<8x128xf32>
    %c2_18 = arith.constant 2 : index
    %75 = memref.load %arg3[%c2_18] : memref<25xf32, #tpu.memory_space<smem>>
    %76 = vector.broadcast %75 : f32 to vector<8x128xf32>
    %77 = arith.mulf %76, %74 : vector<8x128xf32>
    %78 = arith.addf %53, %77 : vector<8x128xf32>
    %c3 = arith.constant 3 : index
    %c0_19 = arith.constant 0 : index
    %c0_20 = arith.constant 0 : index
    %79 = vector.load %arg1[%c3, %c0_19, %c0_20] : memref<25x8x512xf32, #tpu.memory_space<vmem>>, vector<1x8x512xf32>
    %80 = vector.shape_cast %79 : vector<1x8x512xf32> to vector<8x512xf32>
    %81 = arith.truncf %74 : vector<8x128xf32> to vector<8x128xbf16>
    %cst_21 = arith.constant dense<0.000000e+00> : vector<8x512xf32>
    %82 = tpu.matmul %81, %0, %cst_21 {dimension_numbers = #tpu.dot_dimension_numbers<[1], [0], [0], [1], [0, 0, 1, 1], [], []>} : vector<8x128xbf16>, vector<128x512xbf16>, vector<8x512xf32> -> vector<8x512xf32>
    %83 = arith.addf %80, %82 : vector<8x512xf32>
    %84 = vector.extract_strided_slice %83 {offsets = [0, 0], sizes = [8, 384], strides = [1, 1]} : vector<8x512xf32> to vector<8x384xf32>
    %85 = arith.negf %84 : vector<8x384xf32>
    %86 = math.exp %85 : vector<8x384xf32>
    %cst_22 = arith.constant 1.000000e+00 : f32
    %87 = vector.broadcast %cst_22 : f32 to vector<8x384xf32>
    %88 = arith.addf %87, %86 : vector<8x384xf32>
    %89 = arith.divf %87, %88 : vector<8x384xf32>
    %90 = vector.extract_strided_slice %89 {offsets = [0, 0], sizes = [8, 128], strides = [1, 1]} : vector<8x384xf32> to vector<8x128xf32>
    %91 = vector.extract_strided_slice %89 {offsets = [0, 128], sizes = [8, 128], strides = [1, 1]} : vector<8x384xf32> to vector<8x128xf32>
    %92 = vector.extract_strided_slice %89 {offsets = [0, 256], sizes = [8, 128], strides = [1, 1]} : vector<8x384xf32> to vector<8x128xf32>
    %93 = vector.extract_strided_slice %83 {offsets = [0, 384], sizes = [8, 128], strides = [1, 1]} : vector<8x512xf32> to vector<8x128xf32>
    %94 = math.tanh %93 : vector<8x128xf32>
    %95 = arith.mulf %91, %72 : vector<8x128xf32>
    %96 = arith.mulf %90, %94 : vector<8x128xf32>
    %97 = arith.addf %95, %96 : vector<8x128xf32>
    %98 = math.tanh %97 : vector<8x128xf32>
    %99 = arith.mulf %92, %98 : vector<8x128xf32>
    %c3_23 = arith.constant 3 : index
    %100 = memref.load %arg3[%c3_23] : memref<25xf32, #tpu.memory_space<smem>>
    %101 = vector.broadcast %100 : f32 to vector<8x128xf32>
    %102 = arith.mulf %101, %99 : vector<8x128xf32>
    %103 = arith.addf %78, %102 : vector<8x128xf32>
    %c4 = arith.constant 4 : index
    %c0_24 = arith.constant 0 : index
    %c0_25 = arith.constant 0 : index
    %104 = vector.load %arg1[%c4, %c0_24, %c0_25] : memref<25x8x512xf32, #tpu.memory_space<vmem>>, vector<1x8x512xf32>
    %105 = vector.shape_cast %104 : vector<1x8x512xf32> to vector<8x512xf32>
    %106 = arith.truncf %99 : vector<8x128xf32> to vector<8x128xbf16>
    %cst_26 = arith.constant dense<0.000000e+00> : vector<8x512xf32>
    %107 = tpu.matmul %106, %0, %cst_26 {dimension_numbers = #tpu.dot_dimension_numbers<[1], [0], [0], [1], [0, 0, 1, 1], [], []>} : vector<8x128xbf16>, vector<128x512xbf16>, vector<8x512xf32> -> vector<8x512xf32>
    %108 = arith.addf %105, %107 : vector<8x512xf32>
    %109 = vector.extract_strided_slice %108 {offsets = [0, 0], sizes = [8, 384], strides = [1, 1]} : vector<8x512xf32> to vector<8x384xf32>
    %110 = arith.negf %109 : vector<8x384xf32>
    %111 = math.exp %110 : vector<8x384xf32>
    %cst_27 = arith.constant 1.000000e+00 : f32
    %112 = vector.broadcast %cst_27 : f32 to vector<8x384xf32>
    %113 = arith.addf %112, %111 : vector<8x384xf32>
    %114 = arith.divf %112, %113 : vector<8x384xf32>
    %115 = vector.extract_strided_slice %114 {offsets = [0, 0], sizes = [8, 128], strides = [1, 1]} : vector<8x384xf32> to vector<8x128xf32>
    %116 = vector.extract_strided_slice %114 {offsets = [0, 128], sizes = [8, 128], strides = [1, 1]} : vector<8x384xf32> to vector<8x128xf32>
    %117 = vector.extract_strided_slice %114 {offsets = [0, 256], sizes = [8, 128], strides = [1, 1]} : vector<8x384xf32> to vector<8x128xf32>
    %118 = vector.extract_strided_slice %108 {offsets = [0, 384], sizes = [8, 128], strides = [1, 1]} : vector<8x512xf32> to vector<8x128xf32>
    %119 = math.tanh %118 : vector<8x128xf32>
    %120 = arith.mulf %116, %97 : vector<8x128xf32>
    %121 = arith.mulf %115, %119 : vector<8x128xf32>
    %122 = arith.addf %120, %121 : vector<8x128xf32>
    %123 = math.tanh %122 : vector<8x128xf32>
    %124 = arith.mulf %117, %123 : vector<8x128xf32>
    %c4_28 = arith.constant 4 : index
    %125 = memref.load %arg3[%c4_28] : memref<25xf32, #tpu.memory_space<smem>>
    %126 = vector.broadcast %125 : f32 to vector<8x128xf32>
    %127 = arith.mulf %126, %124 : vector<8x128xf32>
    %128 = arith.addf %103, %127 : vector<8x128xf32>
    %c5 = arith.constant 5 : index
    %c0_29 = arith.constant 0 : index
    %c0_30 = arith.constant 0 : index
    %129 = vector.load %arg1[%c5, %c0_29, %c0_30] : memref<25x8x512xf32, #tpu.memory_space<vmem>>, vector<1x8x512xf32>
    %130 = vector.shape_cast %129 : vector<1x8x512xf32> to vector<8x512xf32>
    %131 = arith.truncf %124 : vector<8x128xf32> to vector<8x128xbf16>
    %cst_31 = arith.constant dense<0.000000e+00> : vector<8x512xf32>
    %132 = tpu.matmul %131, %0, %cst_31 {dimension_numbers = #tpu.dot_dimension_numbers<[1], [0], [0], [1], [0, 0, 1, 1], [], []>} : vector<8x128xbf16>, vector<128x512xbf16>, vector<8x512xf32> -> vector<8x512xf32>
    %133 = arith.addf %130, %132 : vector<8x512xf32>
    %134 = vector.extract_strided_slice %133 {offsets = [0, 0], sizes = [8, 384], strides = [1, 1]} : vector<8x512xf32> to vector<8x384xf32>
    %135 = arith.negf %134 : vector<8x384xf32>
    %136 = math.exp %135 : vector<8x384xf32>
    %cst_32 = arith.constant 1.000000e+00 : f32
    %137 = vector.broadcast %cst_32 : f32 to vector<8x384xf32>
    %138 = arith.addf %137, %136 : vector<8x384xf32>
    %139 = arith.divf %137, %138 : vector<8x384xf32>
    %140 = vector.extract_strided_slice %139 {offsets = [0, 0], sizes = [8, 128], strides = [1, 1]} : vector<8x384xf32> to vector<8x128xf32>
    %141 = vector.extract_strided_slice %139 {offsets = [0, 128], sizes = [8, 128], strides = [1, 1]} : vector<8x384xf32> to vector<8x128xf32>
    %142 = vector.extract_strided_slice %139 {offsets = [0, 256], sizes = [8, 128], strides = [1, 1]} : vector<8x384xf32> to vector<8x128xf32>
    %143 = vector.extract_strided_slice %133 {offsets = [0, 384], sizes = [8, 128], strides = [1, 1]} : vector<8x512xf32> to vector<8x128xf32>
    %144 = math.tanh %143 : vector<8x128xf32>
    %145 = arith.mulf %141, %122 : vector<8x128xf32>
    %146 = arith.mulf %140, %144 : vector<8x128xf32>
    %147 = arith.addf %145, %146 : vector<8x128xf32>
    %148 = math.tanh %147 : vector<8x128xf32>
    %149 = arith.mulf %142, %148 : vector<8x128xf32>
    %c5_33 = arith.constant 5 : index
    %150 = memref.load %arg3[%c5_33] : memref<25xf32, #tpu.memory_space<smem>>
    %151 = vector.broadcast %150 : f32 to vector<8x128xf32>
    %152 = arith.mulf %151, %149 : vector<8x128xf32>
    %153 = arith.addf %128, %152 : vector<8x128xf32>
    %c6 = arith.constant 6 : index
    %c0_34 = arith.constant 0 : index
    %c0_35 = arith.constant 0 : index
    %154 = vector.load %arg1[%c6, %c0_34, %c0_35] : memref<25x8x512xf32, #tpu.memory_space<vmem>>, vector<1x8x512xf32>
    %155 = vector.shape_cast %154 : vector<1x8x512xf32> to vector<8x512xf32>
    %156 = arith.truncf %149 : vector<8x128xf32> to vector<8x128xbf16>
    %cst_36 = arith.constant dense<0.000000e+00> : vector<8x512xf32>
    %157 = tpu.matmul %156, %0, %cst_36 {dimension_numbers = #tpu.dot_dimension_numbers<[1], [0], [0], [1], [0, 0, 1, 1], [], []>} : vector<8x128xbf16>, vector<128x512xbf16>, vector<8x512xf32> -> vector<8x512xf32>
    %158 = arith.addf %155, %157 : vector<8x512xf32>
    %159 = vector.extract_strided_slice %158 {offsets = [0, 0], sizes = [8, 384], strides = [1, 1]} : vector<8x512xf32> to vector<8x384xf32>
    %160 = arith.negf %159 : vector<8x384xf32>
    %161 = math.exp %160 : vector<8x384xf32>
    %cst_37 = arith.constant 1.000000e+00 : f32
    %162 = vector.broadcast %cst_37 : f32 to vector<8x384xf32>
    %163 = arith.addf %162, %161 : vector<8x384xf32>
    %164 = arith.divf %162, %163 : vector<8x384xf32>
    %165 = vector.extract_strided_slice %164 {offsets = [0, 0], sizes = [8, 128], strides = [1, 1]} : vector<8x384xf32> to vector<8x128xf32>
    %166 = vector.extract_strided_slice %164 {offsets = [0, 128], sizes = [8, 128], strides = [1, 1]} : vector<8x384xf32> to vector<8x128xf32>
    %167 = vector.extract_strided_slice %164 {offsets = [0, 256], sizes = [8, 128], strides = [1, 1]} : vector<8x384xf32> to vector<8x128xf32>
    %168 = vector.extract_strided_slice %158 {offsets = [0, 384], sizes = [8, 128], strides = [1, 1]} : vector<8x512xf32> to vector<8x128xf32>
    %169 = math.tanh %168 : vector<8x128xf32>
    %170 = arith.mulf %166, %147 : vector<8x128xf32>
    %171 = arith.mulf %165, %169 : vector<8x128xf32>
    %172 = arith.addf %170, %171 : vector<8x128xf32>
    %173 = math.tanh %172 : vector<8x128xf32>
    %174 = arith.mulf %167, %173 : vector<8x128xf32>
    %c6_38 = arith.constant 6 : index
    %175 = memref.load %arg3[%c6_38] : memref<25xf32, #tpu.memory_space<smem>>
    %176 = vector.broadcast %175 : f32 to vector<8x128xf32>
    %177 = arith.mulf %176, %174 : vector<8x128xf32>
    %178 = arith.addf %153, %177 : vector<8x128xf32>
    %c7 = arith.constant 7 : index
    %c0_39 = arith.constant 0 : index
    %c0_40 = arith.constant 0 : index
    %179 = vector.load %arg1[%c7, %c0_39, %c0_40] : memref<25x8x512xf32, #tpu.memory_space<vmem>>, vector<1x8x512xf32>
    %180 = vector.shape_cast %179 : vector<1x8x512xf32> to vector<8x512xf32>
    %181 = arith.truncf %174 : vector<8x128xf32> to vector<8x128xbf16>
    %cst_41 = arith.constant dense<0.000000e+00> : vector<8x512xf32>
    %182 = tpu.matmul %181, %0, %cst_41 {dimension_numbers = #tpu.dot_dimension_numbers<[1], [0], [0], [1], [0, 0, 1, 1], [], []>} : vector<8x128xbf16>, vector<128x512xbf16>, vector<8x512xf32> -> vector<8x512xf32>
    %183 = arith.addf %180, %182 : vector<8x512xf32>
    %184 = vector.extract_strided_slice %183 {offsets = [0, 0], sizes = [8, 384], strides = [1, 1]} : vector<8x512xf32> to vector<8x384xf32>
    %185 = arith.negf %184 : vector<8x384xf32>
    %186 = math.exp %185 : vector<8x384xf32>
    %cst_42 = arith.constant 1.000000e+00 : f32
    %187 = vector.broadcast %cst_42 : f32 to vector<8x384xf32>
    %188 = arith.addf %187, %186 : vector<8x384xf32>
    %189 = arith.divf %187, %188 : vector<8x384xf32>
    %190 = vector.extract_strided_slice %189 {offsets = [0, 0], sizes = [8, 128], strides = [1, 1]} : vector<8x384xf32> to vector<8x128xf32>
    %191 = vector.extract_strided_slice %189 {offsets = [0, 128], sizes = [8, 128], strides = [1, 1]} : vector<8x384xf32> to vector<8x128xf32>
    %192 = vector.extract_strided_slice %189 {offsets = [0, 256], sizes = [8, 128], strides = [1, 1]} : vector<8x384xf32> to vector<8x128xf32>
    %193 = vector.extract_strided_slice %183 {offsets = [0, 384], sizes = [8, 128], strides = [1, 1]} : vector<8x512xf32> to vector<8x128xf32>
    %194 = math.tanh %193 : vector<8x128xf32>
    %195 = arith.mulf %191, %172 : vector<8x128xf32>
    %196 = arith.mulf %190, %194 : vector<8x128xf32>
    %197 = arith.addf %195, %196 : vector<8x128xf32>
    %198 = math.tanh %197 : vector<8x128xf32>
    %199 = arith.mulf %192, %198 : vector<8x128xf32>
    %c7_43 = arith.constant 7 : index
    %200 = memref.load %arg3[%c7_43] : memref<25xf32, #tpu.memory_space<smem>>
    %201 = vector.broadcast %200 : f32 to vector<8x128xf32>
    %202 = arith.mulf %201, %199 : vector<8x128xf32>
    %203 = arith.addf %178, %202 : vector<8x128xf32>
    %c8 = arith.constant 8 : index
    %c0_44 = arith.constant 0 : index
    %c0_45 = arith.constant 0 : index
    %204 = vector.load %arg1[%c8, %c0_44, %c0_45] : memref<25x8x512xf32, #tpu.memory_space<vmem>>, vector<1x8x512xf32>
    %205 = vector.shape_cast %204 : vector<1x8x512xf32> to vector<8x512xf32>
    %206 = arith.truncf %199 : vector<8x128xf32> to vector<8x128xbf16>
    %cst_46 = arith.constant dense<0.000000e+00> : vector<8x512xf32>
    %207 = tpu.matmul %206, %0, %cst_46 {dimension_numbers = #tpu.dot_dimension_numbers<[1], [0], [0], [1], [0, 0, 1, 1], [], []>} : vector<8x128xbf16>, vector<128x512xbf16>, vector<8x512xf32> -> vector<8x512xf32>
    %208 = arith.addf %205, %207 : vector<8x512xf32>
    %209 = vector.extract_strided_slice %208 {offsets = [0, 0], sizes = [8, 384], strides = [1, 1]} : vector<8x512xf32> to vector<8x384xf32>
    %210 = arith.negf %209 : vector<8x384xf32>
    %211 = math.exp %210 : vector<8x384xf32>
    %cst_47 = arith.constant 1.000000e+00 : f32
    %212 = vector.broadcast %cst_47 : f32 to vector<8x384xf32>
    %213 = arith.addf %212, %211 : vector<8x384xf32>
    %214 = arith.divf %212, %213 : vector<8x384xf32>
    %215 = vector.extract_strided_slice %214 {offsets = [0, 0], sizes = [8, 128], strides = [1, 1]} : vector<8x384xf32> to vector<8x128xf32>
    %216 = vector.extract_strided_slice %214 {offsets = [0, 128], sizes = [8, 128], strides = [1, 1]} : vector<8x384xf32> to vector<8x128xf32>
    %217 = vector.extract_strided_slice %214 {offsets = [0, 256], sizes = [8, 128], strides = [1, 1]} : vector<8x384xf32> to vector<8x128xf32>
    %218 = vector.extract_strided_slice %208 {offsets = [0, 384], sizes = [8, 128], strides = [1, 1]} : vector<8x512xf32> to vector<8x128xf32>
    %219 = math.tanh %218 : vector<8x128xf32>
    %220 = arith.mulf %216, %197 : vector<8x128xf32>
    %221 = arith.mulf %215, %219 : vector<8x128xf32>
    %222 = arith.addf %220, %221 : vector<8x128xf32>
    %223 = math.tanh %222 : vector<8x128xf32>
    %224 = arith.mulf %217, %223 : vector<8x128xf32>
    %c8_48 = arith.constant 8 : index
    %225 = memref.load %arg3[%c8_48] : memref<25xf32, #tpu.memory_space<smem>>
    %226 = vector.broadcast %225 : f32 to vector<8x128xf32>
    %227 = arith.mulf %226, %224 : vector<8x128xf32>
    %228 = arith.addf %203, %227 : vector<8x128xf32>
    %c9 = arith.constant 9 : index
    %c0_49 = arith.constant 0 : index
    %c0_50 = arith.constant 0 : index
    %229 = vector.load %arg1[%c9, %c0_49, %c0_50] : memref<25x8x512xf32, #tpu.memory_space<vmem>>, vector<1x8x512xf32>
    %230 = vector.shape_cast %229 : vector<1x8x512xf32> to vector<8x512xf32>
    %231 = arith.truncf %224 : vector<8x128xf32> to vector<8x128xbf16>
    %cst_51 = arith.constant dense<0.000000e+00> : vector<8x512xf32>
    %232 = tpu.matmul %231, %0, %cst_51 {dimension_numbers = #tpu.dot_dimension_numbers<[1], [0], [0], [1], [0, 0, 1, 1], [], []>} : vector<8x128xbf16>, vector<128x512xbf16>, vector<8x512xf32> -> vector<8x512xf32>
    %233 = arith.addf %230, %232 : vector<8x512xf32>
    %234 = vector.extract_strided_slice %233 {offsets = [0, 0], sizes = [8, 384], strides = [1, 1]} : vector<8x512xf32> to vector<8x384xf32>
    %235 = arith.negf %234 : vector<8x384xf32>
    %236 = math.exp %235 : vector<8x384xf32>
    %cst_52 = arith.constant 1.000000e+00 : f32
    %237 = vector.broadcast %cst_52 : f32 to vector<8x384xf32>
    %238 = arith.addf %237, %236 : vector<8x384xf32>
    %239 = arith.divf %237, %238 : vector<8x384xf32>
    %240 = vector.extract_strided_slice %239 {offsets = [0, 0], sizes = [8, 128], strides = [1, 1]} : vector<8x384xf32> to vector<8x128xf32>
    %241 = vector.extract_strided_slice %239 {offsets = [0, 128], sizes = [8, 128], strides = [1, 1]} : vector<8x384xf32> to vector<8x128xf32>
    %242 = vector.extract_strided_slice %239 {offsets = [0, 256], sizes = [8, 128], strides = [1, 1]} : vector<8x384xf32> to vector<8x128xf32>
    %243 = vector.extract_strided_slice %233 {offsets = [0, 384], sizes = [8, 128], strides = [1, 1]} : vector<8x512xf32> to vector<8x128xf32>
    %244 = math.tanh %243 : vector<8x128xf32>
    %245 = arith.mulf %241, %222 : vector<8x128xf32>
    %246 = arith.mulf %240, %244 : vector<8x128xf32>
    %247 = arith.addf %245, %246 : vector<8x128xf32>
    %248 = math.tanh %247 : vector<8x128xf32>
    %249 = arith.mulf %242, %248 : vector<8x128xf32>
    %c9_53 = arith.constant 9 : index
    %250 = memref.load %arg3[%c9_53] : memref<25xf32, #tpu.memory_space<smem>>
    %251 = vector.broadcast %250 : f32 to vector<8x128xf32>
    %252 = arith.mulf %251, %249 : vector<8x128xf32>
    %253 = arith.addf %228, %252 : vector<8x128xf32>
    %c10 = arith.constant 10 : index
    %c0_54 = arith.constant 0 : index
    %c0_55 = arith.constant 0 : index
    %254 = vector.load %arg1[%c10, %c0_54, %c0_55] : memref<25x8x512xf32, #tpu.memory_space<vmem>>, vector<1x8x512xf32>
    %255 = vector.shape_cast %254 : vector<1x8x512xf32> to vector<8x512xf32>
    %256 = arith.truncf %249 : vector<8x128xf32> to vector<8x128xbf16>
    %cst_56 = arith.constant dense<0.000000e+00> : vector<8x512xf32>
    %257 = tpu.matmul %256, %0, %cst_56 {dimension_numbers = #tpu.dot_dimension_numbers<[1], [0], [0], [1], [0, 0, 1, 1], [], []>} : vector<8x128xbf16>, vector<128x512xbf16>, vector<8x512xf32> -> vector<8x512xf32>
    %258 = arith.addf %255, %257 : vector<8x512xf32>
    %259 = vector.extract_strided_slice %258 {offsets = [0, 0], sizes = [8, 384], strides = [1, 1]} : vector<8x512xf32> to vector<8x384xf32>
    %260 = arith.negf %259 : vector<8x384xf32>
    %261 = math.exp %260 : vector<8x384xf32>
    %cst_57 = arith.constant 1.000000e+00 : f32
    %262 = vector.broadcast %cst_57 : f32 to vector<8x384xf32>
    %263 = arith.addf %262, %261 : vector<8x384xf32>
    %264 = arith.divf %262, %263 : vector<8x384xf32>
    %265 = vector.extract_strided_slice %264 {offsets = [0, 0], sizes = [8, 128], strides = [1, 1]} : vector<8x384xf32> to vector<8x128xf32>
    %266 = vector.extract_strided_slice %264 {offsets = [0, 128], sizes = [8, 128], strides = [1, 1]} : vector<8x384xf32> to vector<8x128xf32>
    %267 = vector.extract_strided_slice %264 {offsets = [0, 256], sizes = [8, 128], strides = [1, 1]} : vector<8x384xf32> to vector<8x128xf32>
    %268 = vector.extract_strided_slice %258 {offsets = [0, 384], sizes = [8, 128], strides = [1, 1]} : vector<8x512xf32> to vector<8x128xf32>
    %269 = math.tanh %268 : vector<8x128xf32>
    %270 = arith.mulf %266, %247 : vector<8x128xf32>
    %271 = arith.mulf %265, %269 : vector<8x128xf32>
    %272 = arith.addf %270, %271 : vector<8x128xf32>
    %273 = math.tanh %272 : vector<8x128xf32>
    %274 = arith.mulf %267, %273 : vector<8x128xf32>
    %c10_58 = arith.constant 10 : index
    %275 = memref.load %arg3[%c10_58] : memref<25xf32, #tpu.memory_space<smem>>
    %276 = vector.broadcast %275 : f32 to vector<8x128xf32>
    %277 = arith.mulf %276, %274 : vector<8x128xf32>
    %278 = arith.addf %253, %277 : vector<8x128xf32>
    %c11 = arith.constant 11 : index
    %c0_59 = arith.constant 0 : index
    %c0_60 = arith.constant 0 : index
    %279 = vector.load %arg1[%c11, %c0_59, %c0_60] : memref<25x8x512xf32, #tpu.memory_space<vmem>>, vector<1x8x512xf32>
    %280 = vector.shape_cast %279 : vector<1x8x512xf32> to vector<8x512xf32>
    %281 = arith.truncf %274 : vector<8x128xf32> to vector<8x128xbf16>
    %cst_61 = arith.constant dense<0.000000e+00> : vector<8x512xf32>
    %282 = tpu.matmul %281, %0, %cst_61 {dimension_numbers = #tpu.dot_dimension_numbers<[1], [0], [0], [1], [0, 0, 1, 1], [], []>} : vector<8x128xbf16>, vector<128x512xbf16>, vector<8x512xf32> -> vector<8x512xf32>
    %283 = arith.addf %280, %282 : vector<8x512xf32>
    %284 = vector.extract_strided_slice %283 {offsets = [0, 0], sizes = [8, 384], strides = [1, 1]} : vector<8x512xf32> to vector<8x384xf32>
    %285 = arith.negf %284 : vector<8x384xf32>
    %286 = math.exp %285 : vector<8x384xf32>
    %cst_62 = arith.constant 1.000000e+00 : f32
    %287 = vector.broadcast %cst_62 : f32 to vector<8x384xf32>
    %288 = arith.addf %287, %286 : vector<8x384xf32>
    %289 = arith.divf %287, %288 : vector<8x384xf32>
    %290 = vector.extract_strided_slice %289 {offsets = [0, 0], sizes = [8, 128], strides = [1, 1]} : vector<8x384xf32> to vector<8x128xf32>
    %291 = vector.extract_strided_slice %289 {offsets = [0, 128], sizes = [8, 128], strides = [1, 1]} : vector<8x384xf32> to vector<8x128xf32>
    %292 = vector.extract_strided_slice %289 {offsets = [0, 256], sizes = [8, 128], strides = [1, 1]} : vector<8x384xf32> to vector<8x128xf32>
    %293 = vector.extract_strided_slice %283 {offsets = [0, 384], sizes = [8, 128], strides = [1, 1]} : vector<8x512xf32> to vector<8x128xf32>
    %294 = math.tanh %293 : vector<8x128xf32>
    %295 = arith.mulf %291, %272 : vector<8x128xf32>
    %296 = arith.mulf %290, %294 : vector<8x128xf32>
    %297 = arith.addf %295, %296 : vector<8x128xf32>
    %298 = math.tanh %297 : vector<8x128xf32>
    %299 = arith.mulf %292, %298 : vector<8x128xf32>
    %c11_63 = arith.constant 11 : index
    %300 = memref.load %arg3[%c11_63] : memref<25xf32, #tpu.memory_space<smem>>
    %301 = vector.broadcast %300 : f32 to vector<8x128xf32>
    %302 = arith.mulf %301, %299 : vector<8x128xf32>
    %303 = arith.addf %278, %302 : vector<8x128xf32>
    %c12 = arith.constant 12 : index
    %c0_64 = arith.constant 0 : index
    %c0_65 = arith.constant 0 : index
    %304 = vector.load %arg1[%c12, %c0_64, %c0_65] : memref<25x8x512xf32, #tpu.memory_space<vmem>>, vector<1x8x512xf32>
    %305 = vector.shape_cast %304 : vector<1x8x512xf32> to vector<8x512xf32>
    %306 = arith.truncf %299 : vector<8x128xf32> to vector<8x128xbf16>
    %cst_66 = arith.constant dense<0.000000e+00> : vector<8x512xf32>
    %307 = tpu.matmul %306, %0, %cst_66 {dimension_numbers = #tpu.dot_dimension_numbers<[1], [0], [0], [1], [0, 0, 1, 1], [], []>} : vector<8x128xbf16>, vector<128x512xbf16>, vector<8x512xf32> -> vector<8x512xf32>
    %308 = arith.addf %305, %307 : vector<8x512xf32>
    %309 = vector.extract_strided_slice %308 {offsets = [0, 0], sizes = [8, 384], strides = [1, 1]} : vector<8x512xf32> to vector<8x384xf32>
    %310 = arith.negf %309 : vector<8x384xf32>
    %311 = math.exp %310 : vector<8x384xf32>
    %cst_67 = arith.constant 1.000000e+00 : f32
    %312 = vector.broadcast %cst_67 : f32 to vector<8x384xf32>
    %313 = arith.addf %312, %311 : vector<8x384xf32>
    %314 = arith.divf %312, %313 : vector<8x384xf32>
    %315 = vector.extract_strided_slice %314 {offsets = [0, 0], sizes = [8, 128], strides = [1, 1]} : vector<8x384xf32> to vector<8x128xf32>
    %316 = vector.extract_strided_slice %314 {offsets = [0, 128], sizes = [8, 128], strides = [1, 1]} : vector<8x384xf32> to vector<8x128xf32>
    %317 = vector.extract_strided_slice %314 {offsets = [0, 256], sizes = [8, 128], strides = [1, 1]} : vector<8x384xf32> to vector<8x128xf32>
    %318 = vector.extract_strided_slice %308 {offsets = [0, 384], sizes = [8, 128], strides = [1, 1]} : vector<8x512xf32> to vector<8x128xf32>
    %319 = math.tanh %318 : vector<8x128xf32>
    %320 = arith.mulf %316, %297 : vector<8x128xf32>
    %321 = arith.mulf %315, %319 : vector<8x128xf32>
    %322 = arith.addf %320, %321 : vector<8x128xf32>
    %323 = math.tanh %322 : vector<8x128xf32>
    %324 = arith.mulf %317, %323 : vector<8x128xf32>
    %c12_68 = arith.constant 12 : index
    %325 = memref.load %arg3[%c12_68] : memref<25xf32, #tpu.memory_space<smem>>
    %326 = vector.broadcast %325 : f32 to vector<8x128xf32>
    %327 = arith.mulf %326, %324 : vector<8x128xf32>
    %328 = arith.addf %303, %327 : vector<8x128xf32>
    %c13 = arith.constant 13 : index
    %c0_69 = arith.constant 0 : index
    %c0_70 = arith.constant 0 : index
    %329 = vector.load %arg1[%c13, %c0_69, %c0_70] : memref<25x8x512xf32, #tpu.memory_space<vmem>>, vector<1x8x512xf32>
    %330 = vector.shape_cast %329 : vector<1x8x512xf32> to vector<8x512xf32>
    %331 = arith.truncf %324 : vector<8x128xf32> to vector<8x128xbf16>
    %cst_71 = arith.constant dense<0.000000e+00> : vector<8x512xf32>
    %332 = tpu.matmul %331, %0, %cst_71 {dimension_numbers = #tpu.dot_dimension_numbers<[1], [0], [0], [1], [0, 0, 1, 1], [], []>} : vector<8x128xbf16>, vector<128x512xbf16>, vector<8x512xf32> -> vector<8x512xf32>
    %333 = arith.addf %330, %332 : vector<8x512xf32>
    %334 = vector.extract_strided_slice %333 {offsets = [0, 0], sizes = [8, 384], strides = [1, 1]} : vector<8x512xf32> to vector<8x384xf32>
    %335 = arith.negf %334 : vector<8x384xf32>
    %336 = math.exp %335 : vector<8x384xf32>
    %cst_72 = arith.constant 1.000000e+00 : f32
    %337 = vector.broadcast %cst_72 : f32 to vector<8x384xf32>
    %338 = arith.addf %337, %336 : vector<8x384xf32>
    %339 = arith.divf %337, %338 : vector<8x384xf32>
    %340 = vector.extract_strided_slice %339 {offsets = [0, 0], sizes = [8, 128], strides = [1, 1]} : vector<8x384xf32> to vector<8x128xf32>
    %341 = vector.extract_strided_slice %339 {offsets = [0, 128], sizes = [8, 128], strides = [1, 1]} : vector<8x384xf32> to vector<8x128xf32>
    %342 = vector.extract_strided_slice %339 {offsets = [0, 256], sizes = [8, 128], strides = [1, 1]} : vector<8x384xf32> to vector<8x128xf32>
    %343 = vector.extract_strided_slice %333 {offsets = [0, 384], sizes = [8, 128], strides = [1, 1]} : vector<8x512xf32> to vector<8x128xf32>
    %344 = math.tanh %343 : vector<8x128xf32>
    %345 = arith.mulf %341, %322 : vector<8x128xf32>
    %346 = arith.mulf %340, %344 : vector<8x128xf32>
    %347 = arith.addf %345, %346 : vector<8x128xf32>
    %348 = math.tanh %347 : vector<8x128xf32>
    %349 = arith.mulf %342, %348 : vector<8x128xf32>
    %c13_73 = arith.constant 13 : index
    %350 = memref.load %arg3[%c13_73] : memref<25xf32, #tpu.memory_space<smem>>
    %351 = vector.broadcast %350 : f32 to vector<8x128xf32>
    %352 = arith.mulf %351, %349 : vector<8x128xf32>
    %353 = arith.addf %328, %352 : vector<8x128xf32>
    %c14 = arith.constant 14 : index
    %c0_74 = arith.constant 0 : index
    %c0_75 = arith.constant 0 : index
    %354 = vector.load %arg1[%c14, %c0_74, %c0_75] : memref<25x8x512xf32, #tpu.memory_space<vmem>>, vector<1x8x512xf32>
    %355 = vector.shape_cast %354 : vector<1x8x512xf32> to vector<8x512xf32>
    %356 = arith.truncf %349 : vector<8x128xf32> to vector<8x128xbf16>
    %cst_76 = arith.constant dense<0.000000e+00> : vector<8x512xf32>
    %357 = tpu.matmul %356, %0, %cst_76 {dimension_numbers = #tpu.dot_dimension_numbers<[1], [0], [0], [1], [0, 0, 1, 1], [], []>} : vector<8x128xbf16>, vector<128x512xbf16>, vector<8x512xf32> -> vector<8x512xf32>
    %358 = arith.addf %355, %357 : vector<8x512xf32>
    %359 = vector.extract_strided_slice %358 {offsets = [0, 0], sizes = [8, 384], strides = [1, 1]} : vector<8x512xf32> to vector<8x384xf32>
    %360 = arith.negf %359 : vector<8x384xf32>
    %361 = math.exp %360 : vector<8x384xf32>
    %cst_77 = arith.constant 1.000000e+00 : f32
    %362 = vector.broadcast %cst_77 : f32 to vector<8x384xf32>
    %363 = arith.addf %362, %361 : vector<8x384xf32>
    %364 = arith.divf %362, %363 : vector<8x384xf32>
    %365 = vector.extract_strided_slice %364 {offsets = [0, 0], sizes = [8, 128], strides = [1, 1]} : vector<8x384xf32> to vector<8x128xf32>
    %366 = vector.extract_strided_slice %364 {offsets = [0, 128], sizes = [8, 128], strides = [1, 1]} : vector<8x384xf32> to vector<8x128xf32>
    %367 = vector.extract_strided_slice %364 {offsets = [0, 256], sizes = [8, 128], strides = [1, 1]} : vector<8x384xf32> to vector<8x128xf32>
    %368 = vector.extract_strided_slice %358 {offsets = [0, 384], sizes = [8, 128], strides = [1, 1]} : vector<8x512xf32> to vector<8x128xf32>
    %369 = math.tanh %368 : vector<8x128xf32>
    %370 = arith.mulf %366, %347 : vector<8x128xf32>
    %371 = arith.mulf %365, %369 : vector<8x128xf32>
    %372 = arith.addf %370, %371 : vector<8x128xf32>
    %373 = math.tanh %372 : vector<8x128xf32>
    %374 = arith.mulf %367, %373 : vector<8x128xf32>
    %c14_78 = arith.constant 14 : index
    %375 = memref.load %arg3[%c14_78] : memref<25xf32, #tpu.memory_space<smem>>
    %376 = vector.broadcast %375 : f32 to vector<8x128xf32>
    %377 = arith.mulf %376, %374 : vector<8x128xf32>
    %378 = arith.addf %353, %377 : vector<8x128xf32>
    %c15 = arith.constant 15 : index
    %c0_79 = arith.constant 0 : index
    %c0_80 = arith.constant 0 : index
    %379 = vector.load %arg1[%c15, %c0_79, %c0_80] : memref<25x8x512xf32, #tpu.memory_space<vmem>>, vector<1x8x512xf32>
    %380 = vector.shape_cast %379 : vector<1x8x512xf32> to vector<8x512xf32>
    %381 = arith.truncf %374 : vector<8x128xf32> to vector<8x128xbf16>
    %cst_81 = arith.constant dense<0.000000e+00> : vector<8x512xf32>
    %382 = tpu.matmul %381, %0, %cst_81 {dimension_numbers = #tpu.dot_dimension_numbers<[1], [0], [0], [1], [0, 0, 1, 1], [], []>} : vector<8x128xbf16>, vector<128x512xbf16>, vector<8x512xf32> -> vector<8x512xf32>
    %383 = arith.addf %380, %382 : vector<8x512xf32>
    %384 = vector.extract_strided_slice %383 {offsets = [0, 0], sizes = [8, 384], strides = [1, 1]} : vector<8x512xf32> to vector<8x384xf32>
    %385 = arith.negf %384 : vector<8x384xf32>
    %386 = math.exp %385 : vector<8x384xf32>
    %cst_82 = arith.constant 1.000000e+00 : f32
    %387 = vector.broadcast %cst_82 : f32 to vector<8x384xf32>
    %388 = arith.addf %387, %386 : vector<8x384xf32>
    %389 = arith.divf %387, %388 : vector<8x384xf32>
    %390 = vector.extract_strided_slice %389 {offsets = [0, 0], sizes = [8, 128], strides = [1, 1]} : vector<8x384xf32> to vector<8x128xf32>
    %391 = vector.extract_strided_slice %389 {offsets = [0, 128], sizes = [8, 128], strides = [1, 1]} : vector<8x384xf32> to vector<8x128xf32>
    %392 = vector.extract_strided_slice %389 {offsets = [0, 256], sizes = [8, 128], strides = [1, 1]} : vector<8x384xf32> to vector<8x128xf32>
    %393 = vector.extract_strided_slice %383 {offsets = [0, 384], sizes = [8, 128], strides = [1, 1]} : vector<8x512xf32> to vector<8x128xf32>
    %394 = math.tanh %393 : vector<8x128xf32>
    %395 = arith.mulf %391, %372 : vector<8x128xf32>
    %396 = arith.mulf %390, %394 : vector<8x128xf32>
    %397 = arith.addf %395, %396 : vector<8x128xf32>
    %398 = math.tanh %397 : vector<8x128xf32>
    %399 = arith.mulf %392, %398 : vector<8x128xf32>
    %c15_83 = arith.constant 15 : index
    %400 = memref.load %arg3[%c15_83] : memref<25xf32, #tpu.memory_space<smem>>
    %401 = vector.broadcast %400 : f32 to vector<8x128xf32>
    %402 = arith.mulf %401, %399 : vector<8x128xf32>
    %403 = arith.addf %378, %402 : vector<8x128xf32>
    %c16 = arith.constant 16 : index
    %c0_84 = arith.constant 0 : index
    %c0_85 = arith.constant 0 : index
    %404 = vector.load %arg1[%c16, %c0_84, %c0_85] : memref<25x8x512xf32, #tpu.memory_space<vmem>>, vector<1x8x512xf32>
    %405 = vector.shape_cast %404 : vector<1x8x512xf32> to vector<8x512xf32>
    %406 = arith.truncf %399 : vector<8x128xf32> to vector<8x128xbf16>
    %cst_86 = arith.constant dense<0.000000e+00> : vector<8x512xf32>
    %407 = tpu.matmul %406, %0, %cst_86 {dimension_numbers = #tpu.dot_dimension_numbers<[1], [0], [0], [1], [0, 0, 1, 1], [], []>} : vector<8x128xbf16>, vector<128x512xbf16>, vector<8x512xf32> -> vector<8x512xf32>
    %408 = arith.addf %405, %407 : vector<8x512xf32>
    %409 = vector.extract_strided_slice %408 {offsets = [0, 0], sizes = [8, 384], strides = [1, 1]} : vector<8x512xf32> to vector<8x384xf32>
    %410 = arith.negf %409 : vector<8x384xf32>
    %411 = math.exp %410 : vector<8x384xf32>
    %cst_87 = arith.constant 1.000000e+00 : f32
    %412 = vector.broadcast %cst_87 : f32 to vector<8x384xf32>
    %413 = arith.addf %412, %411 : vector<8x384xf32>
    %414 = arith.divf %412, %413 : vector<8x384xf32>
    %415 = vector.extract_strided_slice %414 {offsets = [0, 0], sizes = [8, 128], strides = [1, 1]} : vector<8x384xf32> to vector<8x128xf32>
    %416 = vector.extract_strided_slice %414 {offsets = [0, 128], sizes = [8, 128], strides = [1, 1]} : vector<8x384xf32> to vector<8x128xf32>
    %417 = vector.extract_strided_slice %414 {offsets = [0, 256], sizes = [8, 128], strides = [1, 1]} : vector<8x384xf32> to vector<8x128xf32>
    %418 = vector.extract_strided_slice %408 {offsets = [0, 384], sizes = [8, 128], strides = [1, 1]} : vector<8x512xf32> to vector<8x128xf32>
    %419 = math.tanh %418 : vector<8x128xf32>
    %420 = arith.mulf %416, %397 : vector<8x128xf32>
    %421 = arith.mulf %415, %419 : vector<8x128xf32>
    %422 = arith.addf %420, %421 : vector<8x128xf32>
    %423 = math.tanh %422 : vector<8x128xf32>
    %424 = arith.mulf %417, %423 : vector<8x128xf32>
    %c16_88 = arith.constant 16 : index
    %425 = memref.load %arg3[%c16_88] : memref<25xf32, #tpu.memory_space<smem>>
    %426 = vector.broadcast %425 : f32 to vector<8x128xf32>
    %427 = arith.mulf %426, %424 : vector<8x128xf32>
    %428 = arith.addf %403, %427 : vector<8x128xf32>
    %c17 = arith.constant 17 : index
    %c0_89 = arith.constant 0 : index
    %c0_90 = arith.constant 0 : index
    %429 = vector.load %arg1[%c17, %c0_89, %c0_90] : memref<25x8x512xf32, #tpu.memory_space<vmem>>, vector<1x8x512xf32>
    %430 = vector.shape_cast %429 : vector<1x8x512xf32> to vector<8x512xf32>
    %431 = arith.truncf %424 : vector<8x128xf32> to vector<8x128xbf16>
    %cst_91 = arith.constant dense<0.000000e+00> : vector<8x512xf32>
    %432 = tpu.matmul %431, %0, %cst_91 {dimension_numbers = #tpu.dot_dimension_numbers<[1], [0], [0], [1], [0, 0, 1, 1], [], []>} : vector<8x128xbf16>, vector<128x512xbf16>, vector<8x512xf32> -> vector<8x512xf32>
    %433 = arith.addf %430, %432 : vector<8x512xf32>
    %434 = vector.extract_strided_slice %433 {offsets = [0, 0], sizes = [8, 384], strides = [1, 1]} : vector<8x512xf32> to vector<8x384xf32>
    %435 = arith.negf %434 : vector<8x384xf32>
    %436 = math.exp %435 : vector<8x384xf32>
    %cst_92 = arith.constant 1.000000e+00 : f32
    %437 = vector.broadcast %cst_92 : f32 to vector<8x384xf32>
    %438 = arith.addf %437, %436 : vector<8x384xf32>
    %439 = arith.divf %437, %438 : vector<8x384xf32>
    %440 = vector.extract_strided_slice %439 {offsets = [0, 0], sizes = [8, 128], strides = [1, 1]} : vector<8x384xf32> to vector<8x128xf32>
    %441 = vector.extract_strided_slice %439 {offsets = [0, 128], sizes = [8, 128], strides = [1, 1]} : vector<8x384xf32> to vector<8x128xf32>
    %442 = vector.extract_strided_slice %439 {offsets = [0, 256], sizes = [8, 128], strides = [1, 1]} : vector<8x384xf32> to vector<8x128xf32>
    %443 = vector.extract_strided_slice %433 {offsets = [0, 384], sizes = [8, 128], strides = [1, 1]} : vector<8x512xf32> to vector<8x128xf32>
    %444 = math.tanh %443 : vector<8x128xf32>
    %445 = arith.mulf %441, %422 : vector<8x128xf32>
    %446 = arith.mulf %440, %444 : vector<8x128xf32>
    %447 = arith.addf %445, %446 : vector<8x128xf32>
    %448 = math.tanh %447 : vector<8x128xf32>
    %449 = arith.mulf %442, %448 : vector<8x128xf32>
    %c17_93 = arith.constant 17 : index
    %450 = memref.load %arg3[%c17_93] : memref<25xf32, #tpu.memory_space<smem>>
    %451 = vector.broadcast %450 : f32 to vector<8x128xf32>
    %452 = arith.mulf %451, %449 : vector<8x128xf32>
    %453 = arith.addf %428, %452 : vector<8x128xf32>
    %c18 = arith.constant 18 : index
    %c0_94 = arith.constant 0 : index
    %c0_95 = arith.constant 0 : index
    %454 = vector.load %arg1[%c18, %c0_94, %c0_95] : memref<25x8x512xf32, #tpu.memory_space<vmem>>, vector<1x8x512xf32>
    %455 = vector.shape_cast %454 : vector<1x8x512xf32> to vector<8x512xf32>
    %456 = arith.truncf %449 : vector<8x128xf32> to vector<8x128xbf16>
    %cst_96 = arith.constant dense<0.000000e+00> : vector<8x512xf32>
    %457 = tpu.matmul %456, %0, %cst_96 {dimension_numbers = #tpu.dot_dimension_numbers<[1], [0], [0], [1], [0, 0, 1, 1], [], []>} : vector<8x128xbf16>, vector<128x512xbf16>, vector<8x512xf32> -> vector<8x512xf32>
    %458 = arith.addf %455, %457 : vector<8x512xf32>
    %459 = vector.extract_strided_slice %458 {offsets = [0, 0], sizes = [8, 384], strides = [1, 1]} : vector<8x512xf32> to vector<8x384xf32>
    %460 = arith.negf %459 : vector<8x384xf32>
    %461 = math.exp %460 : vector<8x384xf32>
    %cst_97 = arith.constant 1.000000e+00 : f32
    %462 = vector.broadcast %cst_97 : f32 to vector<8x384xf32>
    %463 = arith.addf %462, %461 : vector<8x384xf32>
    %464 = arith.divf %462, %463 : vector<8x384xf32>
    %465 = vector.extract_strided_slice %464 {offsets = [0, 0], sizes = [8, 128], strides = [1, 1]} : vector<8x384xf32> to vector<8x128xf32>
    %466 = vector.extract_strided_slice %464 {offsets = [0, 128], sizes = [8, 128], strides = [1, 1]} : vector<8x384xf32> to vector<8x128xf32>
    %467 = vector.extract_strided_slice %464 {offsets = [0, 256], sizes = [8, 128], strides = [1, 1]} : vector<8x384xf32> to vector<8x128xf32>
    %468 = vector.extract_strided_slice %458 {offsets = [0, 384], sizes = [8, 128], strides = [1, 1]} : vector<8x512xf32> to vector<8x128xf32>
    %469 = math.tanh %468 : vector<8x128xf32>
    %470 = arith.mulf %466, %447 : vector<8x128xf32>
    %471 = arith.mulf %465, %469 : vector<8x128xf32>
    %472 = arith.addf %470, %471 : vector<8x128xf32>
    %473 = math.tanh %472 : vector<8x128xf32>
    %474 = arith.mulf %467, %473 : vector<8x128xf32>
    %c18_98 = arith.constant 18 : index
    %475 = memref.load %arg3[%c18_98] : memref<25xf32, #tpu.memory_space<smem>>
    %476 = vector.broadcast %475 : f32 to vector<8x128xf32>
    %477 = arith.mulf %476, %474 : vector<8x128xf32>
    %478 = arith.addf %453, %477 : vector<8x128xf32>
    %c19 = arith.constant 19 : index
    %c0_99 = arith.constant 0 : index
    %c0_100 = arith.constant 0 : index
    %479 = vector.load %arg1[%c19, %c0_99, %c0_100] : memref<25x8x512xf32, #tpu.memory_space<vmem>>, vector<1x8x512xf32>
    %480 = vector.shape_cast %479 : vector<1x8x512xf32> to vector<8x512xf32>
    %481 = arith.truncf %474 : vector<8x128xf32> to vector<8x128xbf16>
    %cst_101 = arith.constant dense<0.000000e+00> : vector<8x512xf32>
    %482 = tpu.matmul %481, %0, %cst_101 {dimension_numbers = #tpu.dot_dimension_numbers<[1], [0], [0], [1], [0, 0, 1, 1], [], []>} : vector<8x128xbf16>, vector<128x512xbf16>, vector<8x512xf32> -> vector<8x512xf32>
    %483 = arith.addf %480, %482 : vector<8x512xf32>
    %484 = vector.extract_strided_slice %483 {offsets = [0, 0], sizes = [8, 384], strides = [1, 1]} : vector<8x512xf32> to vector<8x384xf32>
    %485 = arith.negf %484 : vector<8x384xf32>
    %486 = math.exp %485 : vector<8x384xf32>
    %cst_102 = arith.constant 1.000000e+00 : f32
    %487 = vector.broadcast %cst_102 : f32 to vector<8x384xf32>
    %488 = arith.addf %487, %486 : vector<8x384xf32>
    %489 = arith.divf %487, %488 : vector<8x384xf32>
    %490 = vector.extract_strided_slice %489 {offsets = [0, 0], sizes = [8, 128], strides = [1, 1]} : vector<8x384xf32> to vector<8x128xf32>
    %491 = vector.extract_strided_slice %489 {offsets = [0, 128], sizes = [8, 128], strides = [1, 1]} : vector<8x384xf32> to vector<8x128xf32>
    %492 = vector.extract_strided_slice %489 {offsets = [0, 256], sizes = [8, 128], strides = [1, 1]} : vector<8x384xf32> to vector<8x128xf32>
    %493 = vector.extract_strided_slice %483 {offsets = [0, 384], sizes = [8, 128], strides = [1, 1]} : vector<8x512xf32> to vector<8x128xf32>
    %494 = math.tanh %493 : vector<8x128xf32>
    %495 = arith.mulf %491, %472 : vector<8x128xf32>
    %496 = arith.mulf %490, %494 : vector<8x128xf32>
    %497 = arith.addf %495, %496 : vector<8x128xf32>
    %498 = math.tanh %497 : vector<8x128xf32>
    %499 = arith.mulf %492, %498 : vector<8x128xf32>
    %c19_103 = arith.constant 19 : index
    %500 = memref.load %arg3[%c19_103] : memref<25xf32, #tpu.memory_space<smem>>
    %501 = vector.broadcast %500 : f32 to vector<8x128xf32>
    %502 = arith.mulf %501, %499 : vector<8x128xf32>
    %503 = arith.addf %478, %502 : vector<8x128xf32>
    %c20 = arith.constant 20 : index
    %c0_104 = arith.constant 0 : index
    %c0_105 = arith.constant 0 : index
    %504 = vector.load %arg1[%c20, %c0_104, %c0_105] : memref<25x8x512xf32, #tpu.memory_space<vmem>>, vector<1x8x512xf32>
    %505 = vector.shape_cast %504 : vector<1x8x512xf32> to vector<8x512xf32>
    %506 = arith.truncf %499 : vector<8x128xf32> to vector<8x128xbf16>
    %cst_106 = arith.constant dense<0.000000e+00> : vector<8x512xf32>
    %507 = tpu.matmul %506, %0, %cst_106 {dimension_numbers = #tpu.dot_dimension_numbers<[1], [0], [0], [1], [0, 0, 1, 1], [], []>} : vector<8x128xbf16>, vector<128x512xbf16>, vector<8x512xf32> -> vector<8x512xf32>
    %508 = arith.addf %505, %507 : vector<8x512xf32>
    %509 = vector.extract_strided_slice %508 {offsets = [0, 0], sizes = [8, 384], strides = [1, 1]} : vector<8x512xf32> to vector<8x384xf32>
    %510 = arith.negf %509 : vector<8x384xf32>
    %511 = math.exp %510 : vector<8x384xf32>
    %cst_107 = arith.constant 1.000000e+00 : f32
    %512 = vector.broadcast %cst_107 : f32 to vector<8x384xf32>
    %513 = arith.addf %512, %511 : vector<8x384xf32>
    %514 = arith.divf %512, %513 : vector<8x384xf32>
    %515 = vector.extract_strided_slice %514 {offsets = [0, 0], sizes = [8, 128], strides = [1, 1]} : vector<8x384xf32> to vector<8x128xf32>
    %516 = vector.extract_strided_slice %514 {offsets = [0, 128], sizes = [8, 128], strides = [1, 1]} : vector<8x384xf32> to vector<8x128xf32>
    %517 = vector.extract_strided_slice %514 {offsets = [0, 256], sizes = [8, 128], strides = [1, 1]} : vector<8x384xf32> to vector<8x128xf32>
    %518 = vector.extract_strided_slice %508 {offsets = [0, 384], sizes = [8, 128], strides = [1, 1]} : vector<8x512xf32> to vector<8x128xf32>
    %519 = math.tanh %518 : vector<8x128xf32>
    %520 = arith.mulf %516, %497 : vector<8x128xf32>
    %521 = arith.mulf %515, %519 : vector<8x128xf32>
    %522 = arith.addf %520, %521 : vector<8x128xf32>
    %523 = math.tanh %522 : vector<8x128xf32>
    %524 = arith.mulf %517, %523 : vector<8x128xf32>
    %c20_108 = arith.constant 20 : index
    %525 = memref.load %arg3[%c20_108] : memref<25xf32, #tpu.memory_space<smem>>
    %526 = vector.broadcast %525 : f32 to vector<8x128xf32>
    %527 = arith.mulf %526, %524 : vector<8x128xf32>
    %528 = arith.addf %503, %527 : vector<8x128xf32>
    %c21 = arith.constant 21 : index
    %c0_109 = arith.constant 0 : index
    %c0_110 = arith.constant 0 : index
    %529 = vector.load %arg1[%c21, %c0_109, %c0_110] : memref<25x8x512xf32, #tpu.memory_space<vmem>>, vector<1x8x512xf32>
    %530 = vector.shape_cast %529 : vector<1x8x512xf32> to vector<8x512xf32>
    %531 = arith.truncf %524 : vector<8x128xf32> to vector<8x128xbf16>
    %cst_111 = arith.constant dense<0.000000e+00> : vector<8x512xf32>
    %532 = tpu.matmul %531, %0, %cst_111 {dimension_numbers = #tpu.dot_dimension_numbers<[1], [0], [0], [1], [0, 0, 1, 1], [], []>} : vector<8x128xbf16>, vector<128x512xbf16>, vector<8x512xf32> -> vector<8x512xf32>
    %533 = arith.addf %530, %532 : vector<8x512xf32>
    %534 = vector.extract_strided_slice %533 {offsets = [0, 0], sizes = [8, 384], strides = [1, 1]} : vector<8x512xf32> to vector<8x384xf32>
    %535 = arith.negf %534 : vector<8x384xf32>
    %536 = math.exp %535 : vector<8x384xf32>
    %cst_112 = arith.constant 1.000000e+00 : f32
    %537 = vector.broadcast %cst_112 : f32 to vector<8x384xf32>
    %538 = arith.addf %537, %536 : vector<8x384xf32>
    %539 = arith.divf %537, %538 : vector<8x384xf32>
    %540 = vector.extract_strided_slice %539 {offsets = [0, 0], sizes = [8, 128], strides = [1, 1]} : vector<8x384xf32> to vector<8x128xf32>
    %541 = vector.extract_strided_slice %539 {offsets = [0, 128], sizes = [8, 128], strides = [1, 1]} : vector<8x384xf32> to vector<8x128xf32>
    %542 = vector.extract_strided_slice %539 {offsets = [0, 256], sizes = [8, 128], strides = [1, 1]} : vector<8x384xf32> to vector<8x128xf32>
    %543 = vector.extract_strided_slice %533 {offsets = [0, 384], sizes = [8, 128], strides = [1, 1]} : vector<8x512xf32> to vector<8x128xf32>
    %544 = math.tanh %543 : vector<8x128xf32>
    %545 = arith.mulf %541, %522 : vector<8x128xf32>
    %546 = arith.mulf %540, %544 : vector<8x128xf32>
    %547 = arith.addf %545, %546 : vector<8x128xf32>
    %548 = math.tanh %547 : vector<8x128xf32>
    %549 = arith.mulf %542, %548 : vector<8x128xf32>
    %c21_113 = arith.constant 21 : index
    %550 = memref.load %arg3[%c21_113] : memref<25xf32, #tpu.memory_space<smem>>
    %551 = vector.broadcast %550 : f32 to vector<8x128xf32>
    %552 = arith.mulf %551, %549 : vector<8x128xf32>
    %553 = arith.addf %528, %552 : vector<8x128xf32>
    %c22 = arith.constant 22 : index
    %c0_114 = arith.constant 0 : index
    %c0_115 = arith.constant 0 : index
    %554 = vector.load %arg1[%c22, %c0_114, %c0_115] : memref<25x8x512xf32, #tpu.memory_space<vmem>>, vector<1x8x512xf32>
    %555 = vector.shape_cast %554 : vector<1x8x512xf32> to vector<8x512xf32>
    %556 = arith.truncf %549 : vector<8x128xf32> to vector<8x128xbf16>
    %cst_116 = arith.constant dense<0.000000e+00> : vector<8x512xf32>
    %557 = tpu.matmul %556, %0, %cst_116 {dimension_numbers = #tpu.dot_dimension_numbers<[1], [0], [0], [1], [0, 0, 1, 1], [], []>} : vector<8x128xbf16>, vector<128x512xbf16>, vector<8x512xf32> -> vector<8x512xf32>
    %558 = arith.addf %555, %557 : vector<8x512xf32>
    %559 = vector.extract_strided_slice %558 {offsets = [0, 0], sizes = [8, 384], strides = [1, 1]} : vector<8x512xf32> to vector<8x384xf32>
    %560 = arith.negf %559 : vector<8x384xf32>
    %561 = math.exp %560 : vector<8x384xf32>
    %cst_117 = arith.constant 1.000000e+00 : f32
    %562 = vector.broadcast %cst_117 : f32 to vector<8x384xf32>
    %563 = arith.addf %562, %561 : vector<8x384xf32>
    %564 = arith.divf %562, %563 : vector<8x384xf32>
    %565 = vector.extract_strided_slice %564 {offsets = [0, 0], sizes = [8, 128], strides = [1, 1]} : vector<8x384xf32> to vector<8x128xf32>
    %566 = vector.extract_strided_slice %564 {offsets = [0, 128], sizes = [8, 128], strides = [1, 1]} : vector<8x384xf32> to vector<8x128xf32>
    %567 = vector.extract_strided_slice %564 {offsets = [0, 256], sizes = [8, 128], strides = [1, 1]} : vector<8x384xf32> to vector<8x128xf32>
    %568 = vector.extract_strided_slice %558 {offsets = [0, 384], sizes = [8, 128], strides = [1, 1]} : vector<8x512xf32> to vector<8x128xf32>
    %569 = math.tanh %568 : vector<8x128xf32>
    %570 = arith.mulf %566, %547 : vector<8x128xf32>
    %571 = arith.mulf %565, %569 : vector<8x128xf32>
    %572 = arith.addf %570, %571 : vector<8x128xf32>
    %573 = math.tanh %572 : vector<8x128xf32>
    %574 = arith.mulf %567, %573 : vector<8x128xf32>
    %c22_118 = arith.constant 22 : index
    %575 = memref.load %arg3[%c22_118] : memref<25xf32, #tpu.memory_space<smem>>
    %576 = vector.broadcast %575 : f32 to vector<8x128xf32>
    %577 = arith.mulf %576, %574 : vector<8x128xf32>
    %578 = arith.addf %553, %577 : vector<8x128xf32>
    %c23 = arith.constant 23 : index
    %c0_119 = arith.constant 0 : index
    %c0_120 = arith.constant 0 : index
    %579 = vector.load %arg1[%c23, %c0_119, %c0_120] : memref<25x8x512xf32, #tpu.memory_space<vmem>>, vector<1x8x512xf32>
    %580 = vector.shape_cast %579 : vector<1x8x512xf32> to vector<8x512xf32>
    %581 = arith.truncf %574 : vector<8x128xf32> to vector<8x128xbf16>
    %cst_121 = arith.constant dense<0.000000e+00> : vector<8x512xf32>
    %582 = tpu.matmul %581, %0, %cst_121 {dimension_numbers = #tpu.dot_dimension_numbers<[1], [0], [0], [1], [0, 0, 1, 1], [], []>} : vector<8x128xbf16>, vector<128x512xbf16>, vector<8x512xf32> -> vector<8x512xf32>
    %583 = arith.addf %580, %582 : vector<8x512xf32>
    %584 = vector.extract_strided_slice %583 {offsets = [0, 0], sizes = [8, 384], strides = [1, 1]} : vector<8x512xf32> to vector<8x384xf32>
    %585 = arith.negf %584 : vector<8x384xf32>
    %586 = math.exp %585 : vector<8x384xf32>
    %cst_122 = arith.constant 1.000000e+00 : f32
    %587 = vector.broadcast %cst_122 : f32 to vector<8x384xf32>
    %588 = arith.addf %587, %586 : vector<8x384xf32>
    %589 = arith.divf %587, %588 : vector<8x384xf32>
    %590 = vector.extract_strided_slice %589 {offsets = [0, 0], sizes = [8, 128], strides = [1, 1]} : vector<8x384xf32> to vector<8x128xf32>
    %591 = vector.extract_strided_slice %589 {offsets = [0, 128], sizes = [8, 128], strides = [1, 1]} : vector<8x384xf32> to vector<8x128xf32>
    %592 = vector.extract_strided_slice %589 {offsets = [0, 256], sizes = [8, 128], strides = [1, 1]} : vector<8x384xf32> to vector<8x128xf32>
    %593 = vector.extract_strided_slice %583 {offsets = [0, 384], sizes = [8, 128], strides = [1, 1]} : vector<8x512xf32> to vector<8x128xf32>
    %594 = math.tanh %593 : vector<8x128xf32>
    %595 = arith.mulf %591, %572 : vector<8x128xf32>
    %596 = arith.mulf %590, %594 : vector<8x128xf32>
    %597 = arith.addf %595, %596 : vector<8x128xf32>
    %598 = math.tanh %597 : vector<8x128xf32>
    %599 = arith.mulf %592, %598 : vector<8x128xf32>
    %c23_123 = arith.constant 23 : index
    %600 = memref.load %arg3[%c23_123] : memref<25xf32, #tpu.memory_space<smem>>
    %601 = vector.broadcast %600 : f32 to vector<8x128xf32>
    %602 = arith.mulf %601, %599 : vector<8x128xf32>
    %603 = arith.addf %578, %602 : vector<8x128xf32>
    %c24 = arith.constant 24 : index
    %c0_124 = arith.constant 0 : index
    %c0_125 = arith.constant 0 : index
    %604 = vector.load %arg1[%c24, %c0_124, %c0_125] : memref<25x8x512xf32, #tpu.memory_space<vmem>>, vector<1x8x512xf32>
    %605 = vector.shape_cast %604 : vector<1x8x512xf32> to vector<8x512xf32>
    %606 = arith.truncf %599 : vector<8x128xf32> to vector<8x128xbf16>
    %cst_126 = arith.constant dense<0.000000e+00> : vector<8x512xf32>
    %607 = tpu.matmul %606, %0, %cst_126 {dimension_numbers = #tpu.dot_dimension_numbers<[1], [0], [0], [1], [0, 0, 1, 1], [], []>} : vector<8x128xbf16>, vector<128x512xbf16>, vector<8x512xf32> -> vector<8x512xf32>
    %608 = arith.addf %605, %607 : vector<8x512xf32>
    %609 = vector.extract_strided_slice %608 {offsets = [0, 0], sizes = [8, 384], strides = [1, 1]} : vector<8x512xf32> to vector<8x384xf32>
    %610 = arith.negf %609 : vector<8x384xf32>
    %611 = math.exp %610 : vector<8x384xf32>
    %cst_127 = arith.constant 1.000000e+00 : f32
    %612 = vector.broadcast %cst_127 : f32 to vector<8x384xf32>
    %613 = arith.addf %612, %611 : vector<8x384xf32>
    %614 = arith.divf %612, %613 : vector<8x384xf32>
    %615 = vector.extract_strided_slice %614 {offsets = [0, 0], sizes = [8, 128], strides = [1, 1]} : vector<8x384xf32> to vector<8x128xf32>
    %616 = vector.extract_strided_slice %614 {offsets = [0, 128], sizes = [8, 128], strides = [1, 1]} : vector<8x384xf32> to vector<8x128xf32>
    %617 = vector.extract_strided_slice %614 {offsets = [0, 256], sizes = [8, 128], strides = [1, 1]} : vector<8x384xf32> to vector<8x128xf32>
    %618 = vector.extract_strided_slice %608 {offsets = [0, 384], sizes = [8, 128], strides = [1, 1]} : vector<8x512xf32> to vector<8x128xf32>
    %619 = math.tanh %618 : vector<8x128xf32>
    %620 = arith.mulf %616, %597 : vector<8x128xf32>
    %621 = arith.mulf %615, %619 : vector<8x128xf32>
    %622 = arith.addf %620, %621 : vector<8x128xf32>
    %623 = math.tanh %622 : vector<8x128xf32>
    %624 = arith.mulf %617, %623 : vector<8x128xf32>
    %c24_128 = arith.constant 24 : index
    %625 = memref.load %arg3[%c24_128] : memref<25xf32, #tpu.memory_space<smem>>
    %626 = vector.broadcast %625 : f32 to vector<8x128xf32>
    %627 = arith.mulf %626, %624 : vector<8x128xf32>
    %628 = arith.addf %603, %627 : vector<8x128xf32>
    %c0_129 = arith.constant 0 : index
    %c0_130 = arith.constant 0 : index
    %629 = vector.load %arg6[%c0_129, %c0_130] : memref<8x128xf32, #tpu.memory_space<vmem>>, vector<8x128xf32>
    tpu.vector_store %arg6[%c0_129, %c0_130], %624 {strides = array<i32>} : memref<8x128xf32, #tpu.memory_space<vmem>>, vector<8x128xf32>,
    %c0_131 = arith.constant 0 : index
    %c0_132 = arith.constant 0 : index
    %630 = vector.load %arg7[%c0_131, %c0_132] : memref<8x128xf32, #tpu.memory_space<vmem>>, vector<8x128xf32>
    tpu.vector_store %arg7[%c0_131, %c0_132], %622 {strides = array<i32>} : memref<8x128xf32, #tpu.memory_space<vmem>>, vector<8x128xf32>,
    %631 = vector.extract_strided_slice %628 {offsets = [0, 24], sizes = [8, 1], strides = [1, 1]} : vector<8x128xf32> to vector<8x1xf32>
    %c0_133 = arith.constant 0 : index
    %632 = memref.load %arg4[%c0_133] : memref<1xf32, #tpu.memory_space<smem>>
    %633 = vector.broadcast %632 : f32 to vector<8x1xf32>
    %634 = arith.addf %631, %633 : vector<8x1xf32>
    %635 = arith.negf %634 : vector<8x1xf32>
    %636 = math.exp %635 : vector<8x1xf32>
    %cst_134 = arith.constant 1.000000e+00 : f32
    %637 = vector.broadcast %cst_134 : f32 to vector<8x1xf32>
    %638 = arith.addf %637, %636 : vector<8x1xf32>
    %639 = arith.divf %637, %638 : vector<8x1xf32>
    %c0_135 = arith.constant 0 : index
    %c0_136 = arith.constant 0 : index
    %640 = vector.load %arg5[%c0_135, %c0_136] : memref<8x1xf32, #tpu.memory_space<vmem>>, vector<8x1xf32>
    tpu.vector_store %arg5[%c0_135, %c0_136], %639 {strides = array<i32>} : memref<8x1xf32, #tpu.memory_space<vmem>>, vector<8x1xf32>,
    return
  }
  func.func @transform_0(%arg0: i32) -> (i32, i32, i32) {
    %c0_i32 = arith.constant 0 : i32
    %c0_i32_0 = arith.constant 0 : i32
    %c0_i32_1 = arith.constant 0 : i32
    return %c0_i32, %arg0, %c0_i32_0 : i32, i32, i32
  }
  func.func @transform_1(%arg0: i32) -> (i32, i32) {
    %c0_i32 = arith.constant 0 : i32
    %c0_i32_0 = arith.constant 0 : i32
    %c0_i32_1 = arith.constant 0 : i32
    return %c0_i32, %c0_i32_0 : i32, i32
  }
  func.func @transform_2(%arg0: i32) -> i32 {
    %c0_i32 = arith.constant 0 : i32
    %c0_i32_0 = arith.constant 0 : i32
    return %c0_i32 : i32
  }
  func.func @transform_3(%arg0: i32) -> i32 {
    %c0_i32 = arith.constant 0 : i32
    %c0_i32_0 = arith.constant 0 : i32
    return %c0_i32 : i32
  }
  func.func @transform_4(%arg0: i32) -> (i32, i32) {
    %c0_i32 = arith.constant 0 : i32
    %c0_i32_0 = arith.constant 0 : i32
    return %arg0, %c0_i32 : i32, i32
  }
  func.func @transform_5(%arg0: i32) -> (i32, i32) {
    %c0_i32 = arith.constant 0 : i32
    %c0_i32_0 = arith.constant 0 : i32
    return %arg0, %c0_i32 : i32, i32
  }
  func.func @transform_6(%arg0: i32) -> (i32, i32) {
    %c0_i32 = arith.constant 0 : i32
    %c0_i32_0 = arith.constant 0 : i32
    return %arg0, %c0_i32 : i32, i32
  }
}

</mosaic_0001>

<llo_original>
// kernel: rnn_forward.1
$region0: #{rnn_forward.1}
  #allocation0 [shape = 'u32[]', space=smem, size = 0x4, offset = 0x4, fixed_abs, tag = 'smem constant byte address 0x4 - core index']
  #allocation1 [shape = 'u32[72,128]{1,0:T(1,128)}', space=vmem, size = 0x9000, scoped, tag = 'internal scratch']
  #allocation2 [shape = 'f32[1]{0:T(128)S(6)}', space=smem, size = 0x200, scoped, tag = 'scoped memory for rnn_forward.1']
  %s0 = inlined_call_operand.vmem [shape: f32[25,8,512], index: 0, kind: input, shape index: {}]
  %s1 = inlined_call_operand.vmem [shape: bf16[128,512], index: 1, kind: input, shape index: {}]
  %s2 = inlined_call_operand.vmem [shape: f32[25], index: 2, kind: input, shape index: {}]
  %s3 = inlined_call_operand.<no memory space> [shape: f32[1], index: 3, kind: input, shape index: {}]
  %s4 = inlined_call_operand.vmem [shape: f32[8,1], index: 4, kind: output, shape index: {0}]
  %s5 = inlined_call_operand.vmem [shape: f32[8,128], index: 5, kind: output, shape index: {1}]
  %s6 = inlined_call_operand.vmem [shape: f32[8,128], index: 6, kind: output, shape index: {2}]
  %7 = xla_tuple %s4, %s5, %s6
  %s8 = sld [smem:[#allocation0]]
  $region46: #{rnn_forward.1} parent=0
    _
  %s10 = ssub.s32 1, %s8
  %s11 = scalar_select 0, %s10, %s8
  %12 = sst [smem:[#allocation2]] %s3
  $region1: #{rnn_forward.1} parent=0
    #allocation3 [shape = 'u8[512]{0}', space=smem, size = 0x200, scoped, tag = 'input window, operand 2, single buffered']
    #allocation4 [shape = 's32[1]{0}', space=sflag, size = 0x4, scoped, tag = 'scoped memory for rnn_forward.1']
    %13 = vsyncpa [#allocation4], 0
    // Predicated region
    $region2: #{rnn_forward.1} parent=1 // pred_check
      _
    $region3: #{rnn_forward.1} parent=1 // pred_check_branch
      %15 = sbr.rel (0) target = $region5
    $region4: #{rnn_forward.1} parent=1 // pred_region
      _
    $region5: #{rnn_forward.1} parent=1 // pred_fallthru
      _
    // Predicated region
    $region6: #{rnn_forward.1} parent=1 // pred_check
      _
    $region7: #{rnn_forward.1} parent=1 // pred_check_branch
      %17 = sbr.rel (0) target = $region9
    $region8: #{rnn_forward.1} parent=1 // pred_region
      _
    $region9: #{rnn_forward.1} parent=1 // pred_fallthru
      _
    // Predicated region
    $region10: #{rnn_forward.1} parent=1 // pred_check
      _
    $region11: #{rnn_forward.1} parent=1 // pred_check_branch
      %19 = sbr.rel (0) target = $region13
    $region12: #{rnn_forward.1} parent=1 // pred_region
      %21 = vsyncadd [#allocation4], 0
      %s23 = sshll.u32 %s2, 4
      %s24 = int_to_ptr.vmem [resolvable:$true] %s23
      %26 = dma.vmem_to_smem %s24, 16, [#allocation3], [#allocation4]
    $region13: #{rnn_forward.1} parent=1 // pred_fallthru
      _
    // Predicated region
    $region14: #{rnn_forward.1} parent=1 // pred_check
      _
    $region15: #{rnn_forward.1} parent=1 // pred_check_branch
      %28 = sbr.rel (0) target = $region17
    $region16: #{rnn_forward.1} parent=1 // pred_region
      _
    $region17: #{rnn_forward.1} parent=1 // pred_fallthru
      _
    // Predicated region
    $region18: #{rnn_forward.1} parent=1 // pred_check
      _
    $region19: #{rnn_forward.1} parent=1 // pred_check_branch
      %30 = sbr.rel (0) target = $region21
    $region20: #{rnn_forward.1} parent=1 // pred_region
      %32 = dma.done [#allocation4], 16
    $region21: #{rnn_forward.1} parent=1 // pred_fallthru
      _
    %33 = sfence
    %v35 = vld [vmem:[%s1] sm:$0xff]
    %v36 = vld [vmem:[%s1 + $0x8] sm:$0xff]
    %v37 = vld [vmem:[%s1 + $0x10] sm:$0xff]
    %v38 = vld [vmem:[%s1 + $0x18] sm:$0xff]
    %v39 = vld [vmem:[%s1 + $0x20] sm:$0xff]
    %v40 = vld [vmem:[%s1 + $0x28] sm:$0xff]
    %v41 = vld [vmem:[%s1 + $0x30] sm:$0xff]
    %v42 = vld [vmem:[%s1 + $0x38] sm:$0xff]
    %v43 = vld [vmem:[%s1 + $0x40] sm:$0xff]
    %v44 = vld [vmem:[%s1 + $0x48] sm:$0xff]
    %v45 = vld [vmem:[%s1 + $0x50] sm:$0xff]
    %v46 = vld [vmem:[%s1 + $0x58] sm:$0xff]
    %v47 = vld [vmem:[%s1 + $0x60] sm:$0xff]
    %v48 = vld [vmem:[%s1 + $0x68] sm:$0xff]
    %v49 = vld [vmem:[%s1 + $0x70] sm:$0xff]
    %v50 = vld [vmem:[%s1 + $0x78] sm:$0xff]
    %v51 = vld [vmem:[%s1 + $0x80] sm:$0xff]
    %v52 = vld [vmem:[%s1 + $0x88] sm:$0xff]
    %v53 = vld [vmem:[%s1 + $0x90] sm:$0xff]
    %v54 = vld [vmem:[%s1 + $0x98] sm:$0xff]
    %v55 = vld [vmem:[%s1 + $0xa0] sm:$0xff]
    %v56 = vld [vmem:[%s1 + $0xa8] sm:$0xff]
    %v57 = vld [vmem:[%s1 + $0xb0] sm:$0xff]
    %v58 = vld [vmem:[%s1 + $0xb8] sm:$0xff]
    %v59 = vld [vmem:[%s1 + $0xc0] sm:$0xff]
    %v60 = vld [vmem:[%s1 + $0xc8] sm:$0xff]
    %v61 = vld [vmem:[%s1 + $0xd0] sm:$0xff]
    %v62 = vld [vmem:[%s1 + $0xd8] sm:$0xff]
    %v63 = vld [vmem:[%s1 + $0xe0] sm:$0xff]
    %v64 = vld [vmem:[%s1 + $0xe8] sm:$0xff]
    %v65 = vld [vmem:[%s1 + $0xf0] sm:$0xff]
    %v66 = vld [vmem:[%s1 + $0xf8] sm:$0xff]
    %v67 = vld [vmem:[%s0] sm:$0xff]
    %v68 = vld [vmem:[%s0 + $0x8] sm:$0xff]
    %v69 = vld [vmem:[%s0 + $0x10] sm:$0xff]
    %v70 = vld [vmem:[%s0 + $0x18] sm:$0xff]
    %v103 = vunpack.c.l.b16 %v35
    %v104 = vunpack.c.h.b16 %v35
    %v105 = vunpack.c.l.b16 %v36
    %v106 = vunpack.c.h.b16 %v36
    %v107 = vunpack.c.l.b16 %v37
    %v108 = vunpack.c.h.b16 %v37
    %v109 = vunpack.c.l.b16 %v38
    %v110 = vunpack.c.h.b16 %v38
    %v111 = vunpack.c.l.b16 %v39
    %v112 = vunpack.c.h.b16 %v39
    %v113 = vunpack.c.l.b16 %v40
    %v114 = vunpack.c.h.b16 %v40
    %v115 = vunpack.c.l.b16 %v41
    %v116 = vunpack.c.h.b16 %v41
    %v117 = vunpack.c.l.b16 %v42
    %v118 = vunpack.c.h.b16 %v42
    %v119 = vunpack.c.l.b16 %v43
    %v120 = vunpack.c.h.b16 %v43
    %v121 = vunpack.c.l.b16 %v44
    %v122 = vunpack.c.h.b16 %v44
    %v123 = vunpack.c.l.b16 %v45
    %v124 = vunpack.c.h.b16 %v45
    %v125 = vunpack.c.l.b16 %v46
    %v126 = vunpack.c.h.b16 %v46
    %v127 = vunpack.c.l.b16 %v47
    %v128 = vunpack.c.h.b16 %v47
    %v129 = vunpack.c.l.b16 %v48
    %v130 = vunpack.c.h.b16 %v48
    %v131 = vunpack.c.l.b16 %v49
    %v132 = vunpack.c.h.b16 %v49
    %v133 = vunpack.c.l.b16 %v50
    %v134 = vunpack.c.h.b16 %v50
    %v135 = vunpack.c.l.b16 %v51
    %v136 = vunpack.c.h.b16 %v51
    %v137 = vunpack.c.l.b16 %v52
    %v138 = vunpack.c.h.b16 %v52
    %v139 = vunpack.c.l.b16 %v53
    %v140 = vunpack.c.h.b16 %v53
    %v141 = vunpack.c.l.b16 %v54
    %v142 = vunpack.c.h.b16 %v54
    %v143 = vunpack.c.l.b16 %v55
    %v144 = vunpack.c.h.b16 %v55
    %v145 = vunpack.c.l.b16 %v56
    %v146 = vunpack.c.h.b16 %v56
    %v147 = vunpack.c.l.b16 %v57
    %v148 = vunpack.c.h.b16 %v57
    %v149 = vunpack.c.l.b16 %v58
    %v150 = vunpack.c.h.b16 %v58
    %v151 = vunpack.c.l.b16 %v59
    %v152 = vunpack.c.h.b16 %v59
    %v153 = vunpack.c.l.b16 %v60
    %v154 = vunpack.c.h.b16 %v60
    %v155 = vunpack.c.l.b16 %v61
    %v156 = vunpack.c.h.b16 %v61
    %v157 = vunpack.c.l.b16 %v62
    %v158 = vunpack.c.h.b16 %v62
    %v159 = vunpack.c.l.b16 %v63
    %v160 = vunpack.c.h.b16 %v63
    %v161 = vunpack.c.l.b16 %v64
    %v162 = vunpack.c.h.b16 %v64
    %v163 = vunpack.c.l.b16 %v65
    %v164 = vunpack.c.h.b16 %v65
    %v165 = vunpack.c.l.b16 %v66
    %v166 = vunpack.c.h.b16 %v66
    %v167 = vpack.c.b16 %v107, %v103
    %v168 = vpack.c.b16 %v108, %v104
    %v169 = vpack.c.b16 %v109, %v105
    %v170 = vpack.c.b16 %v110, %v106
    %v171 = vpack.c.b16 %v115, %v111
    %v172 = vpack.c.b16 %v116, %v112
    %v173 = vpack.c.b16 %v117, %v113
    %v174 = vpack.c.b16 %v118, %v114
    %v175 = vpack.c.b16 %v123, %v119
    %v176 = vpack.c.b16 %v124, %v120
    %v177 = vpack.c.b16 %v125, %v121
    %v178 = vpack.c.b16 %v126, %v122
    %v179 = vpack.c.b16 %v131, %v127
    %v180 = vpack.c.b16 %v132, %v128
    %v181 = vpack.c.b16 %v133, %v129
    %v182 = vpack.c.b16 %v134, %v130
    %v183 = vpack.c.b16 %v139, %v135
    %v184 = vpack.c.b16 %v140, %v136
    %v185 = vpack.c.b16 %v141, %v137
    %v186 = vpack.c.b16 %v142, %v138
    %v187 = vpack.c.b16 %v147, %v143
    %v188 = vpack.c.b16 %v148, %v144
    %v189 = vpack.c.b16 %v149, %v145
    %v190 = vpack.c.b16 %v150, %v146
    %v191 = vpack.c.b16 %v155, %v151
    %v192 = vpack.c.b16 %v156, %v152
    %v193 = vpack.c.b16 %v157, %v153
    %v194 = vpack.c.b16 %v158, %v154
    %v195 = vpack.c.b16 %v163, %v159
    %v196 = vpack.c.b16 %v164, %v160
    %v197 = vpack.c.b16 %v165, %v161
    %v198 = vpack.c.b16 %v166, %v162
    %231 = vmatpush.bf16.msra.mxu0 %v195
    %232 = vmatpush.bf16.msra.mxu0 %v191
    %233 = vmatpush.bf16.msra.mxu0 %v187
    %234 = vmatpush.bf16.msra.mxu0 %v183
    %235 = vmatpush.bf16.msra.mxu0 %v179
    %236 = vmatpush.bf16.msra.mxu0 %v175
    %237 = vmatpush.bf16.msra.mxu0 %v171
    %238 = vmatpush.bf16.msra.mxu0 %v167
    %239 = vmatmul.bf16.gmra.mxu0 0
    %v240 = vpop.f32.mrf.mxu0
    %v241 = vadd.f32 0.0, %v240
    %v242 = vpop.f32.mrf.mxu0
    %243 = vdwg.mxu0
    %244 = vmatpush.bf16.msra.mxu0 %v196
    %245 = vmatpush.bf16.msra.mxu0 %v192
    %246 = vmatpush.bf16.msra.mxu0 %v188
    %247 = vmatpush.bf16.msra.mxu0 %v184
    %248 = vmatpush.bf16.msra.mxu0 %v180
    %249 = vmatpush.bf16.msra.mxu0 %v176
    %250 = vmatpush.bf16.msra.mxu0 %v172
    %251 = vmatpush.bf16.msra.mxu0 %v168
    %252 = vmatmul.bf16.gmra.mxu0 0
    %v253 = vpop.f32.mrf.mxu0
    %v254 = vadd.f32 0.0, %v253
    %v255 = vpop.f32.mrf.mxu0
    %256 = vdwg.mxu0
    %257 = vmatpush.bf16.msra.mxu0 %v197
    %258 = vmatpush.bf16.msra.mxu0 %v193
    %259 = vmatpush.bf16.msra.mxu0 %v189
    %260 = vmatpush.bf16.msra.mxu0 %v185
    %261 = vmatpush.bf16.msra.mxu0 %v181
    %262 = vmatpush.bf16.msra.mxu0 %v177
    %263 = vmatpush.bf16.msra.mxu0 %v173
    %264 = vmatpush.bf16.msra.mxu0 %v169
    %265 = vmatmul.bf16.gmra.mxu0 0
    %v266 = vpop.f32.mrf.mxu0
    %v267 = vadd.f32 0.0, %v266
    %v268 = vpop.f32.mrf.mxu0
    %269 = vdwg.mxu0
    %270 = vmatpush.bf16.msra.mxu0 %v198
    %271 = vmatpush.bf16.msra.mxu0 %v194
    %272 = vmatpush.bf16.msra.mxu0 %v190
    %273 = vmatpush.bf16.msra.mxu0 %v186
    %274 = vmatpush.bf16.msra.mxu0 %v182
    %275 = vmatpush.bf16.msra.mxu0 %v178
    %276 = vmatpush.bf16.msra.mxu0 %v174
    %277 = vmatpush.bf16.msra.mxu0 %v170
    %278 = vmatmul.bf16.gmra.mxu0 0
    %v279 = vpop.f32.mrf.mxu0
    %v280 = vadd.f32 0.0, %v279
    %v281 = vpop.f32.mrf.mxu0
    %282 = vdwg.mxu0
    %v283 = vadd.f32 %v67, %v241
    %v284 = vadd.f32 %v68, %v254
    %v285 = vadd.f32 %v69, %v267
    %v286 = vadd.f32 %v70, %v280
    %v287 = vxor.u32 %v283, 2147483648
    %v288 = vxor.u32 %v284, 2147483648
    %v289 = vxor.u32 %v285, 2147483648
    %v290 = vmul.f32 %v287, 1.442695
    %v291 = vpow.pop %v290
    %v292 = vmul.f32 %v288, 1.442695
    %v293 = vpow.pop %v292
    %v294 = vmul.f32 %v289, 1.442695
    %v295 = vpow.pop %v294
    %v296 = vadd.f32 %v291, 1.0
    %v297 = vadd.f32 %v293, 1.0
    %v298 = vadd.f32 %v295, 1.0
    %v299 = vrcp.pop %v296
    %v300 = vmul.f32 %v296, %v299
    %v301 = vsub.f32 1.0, %v300
    %v302 = vmul.f32 %v299, %v301
    %v303 = vadd.f32 %v299, %v302
    %vm304 = vweird.f32 %v296
    %vm305 = vweird.f32 %v299
    %vm306 = vmor %vm304, %vm305
    %v307 = vsel %vm306, %v299, %v303
    %v308 = vand.u32 2147483647, %v296
    %vm309 = vcmp.eq.f32.partialorder %v308, 8.507059e+37
    %v310 = vand.u32 %v296, 2147483648
    %v311 = vor.u32 1.1754944e-38, %v310
    %v312 = vsel %vm309, %v311, %v307
    %v313 = vmul.f32 1.0, %v312
    %v314 = vrcp.pop %v297
    %v315 = vmul.f32 %v297, %v314
    %v316 = vsub.f32 1.0, %v315
    %v317 = vmul.f32 %v314, %v316
    %v318 = vadd.f32 %v314, %v317
    %vm319 = vweird.f32 %v297
    %vm320 = vweird.f32 %v314
    %vm321 = vmor %vm319, %vm320
    %v322 = vsel %vm321, %v314, %v318
    %v323 = vand.u32 2147483647, %v297
    %vm324 = vcmp.eq.f32.partialorder %v323, 8.507059e+37
    %v325 = vand.u32 %v297, 2147483648
    %v326 = vor.u32 1.1754944e-38, %v325
    %v327 = vsel %vm324, %v326, %v322
    %v328 = vmul.f32 1.0, %v327
    %v329 = vrcp.pop %v298
    %v330 = vmul.f32 %v298, %v329
    %v331 = vsub.f32 1.0, %v330
    %v332 = vmul.f32 %v329, %v331
    %v333 = vadd.f32 %v329, %v332
    %vm334 = vweird.f32 %v298
    %vm335 = vweird.f32 %v329
    %vm336 = vmor %vm334, %vm335
    %v337 = vsel %vm336, %v329, %v333
    %v338 = vand.u32 2147483647, %v298
    %vm339 = vcmp.eq.f32.partialorder %v338, 8.507059e+37
    %v340 = vand.u32 %v298, 2147483648
    %v341 = vor.u32 1.1754944e-38, %v340
    %v342 = vsel %vm339, %v341, %v337
    %v343 = vmul.f32 1.0, %v342
    %v344 = vtanh.pop %v286
    %v345 = vmul.f32 %v328, 0.0
    %v346 = vmul.f32 %v313, %v344
    %v347 = vadd.f32 %v345, %v346
    %v348 = vtanh.pop %v347
    %v349 = vmul.f32 %v343, %v348
    %s350 = sld [smem:[#allocation3]]
    %v351 = vstv %s350
    %v352 = vmul.f32 %v351, %v349
    %v353 = vadd.f32 %v352, 0.0
    %s354 = scalar_lea.vmem %s0, 32
    %v355 = vld [vmem:[%s354] sm:$0xff]
    %v356 = vld [vmem:[%s354 + $0x8] sm:$0xff]
    %v357 = vld [vmem:[%s354 + $0x10] sm:$0xff]
    %v358 = vld [vmem:[%s354 + $0x18] sm:$0xff]
    %v359 = vpack.c.bf16 %v349, %v349
    %360 = vmatpush.bf16.msra.mxu0 %v195
    %361 = vmatpush.bf16.msra.mxu0 %v191
    %362 = vmatpush.bf16.msra.mxu0 %v187
    %363 = vmatpush.bf16.msra.mxu0 %v183
    %364 = vmatpush.bf16.msra.mxu0 %v179
    %365 = vmatpush.bf16.msra.mxu0 %v175
    %366 = vmatpush.bf16.msra.mxu0 %v171
    %367 = vmatpush.bf16.msra.mxu0 %v167
    %368 = vmatmul.bf16.gmra.mxu0 %v359
    %v369 = vpop.f32.mrf.mxu0
    %v370 = vadd.f32 0.0, %v369
    %v371 = vpop.f32.mrf.mxu0
    %372 = vdwg.mxu0
    %373 = vmatpush.bf16.msra.mxu0 %v196
    %374 = vmatpush.bf16.msra.mxu0 %v192
    %375 = vmatpush.bf16.msra.mxu0 %v188
    %376 = vmatpush.bf16.msra.mxu0 %v184
    %377 = vmatpush.bf16.msra.mxu0 %v180
    %378 = vmatpush.bf16.msra.mxu0 %v176
    %379 = vmatpush.bf16.msra.mxu0 %v172
    %380 = vmatpush.bf16.msra.mxu0 %v168
    %381 = vmatmul.bf16.gmra.mxu0 %v359
    %v382 = vpop.f32.mrf.mxu0
    %v383 = vadd.f32 0.0, %v382
    %v384 = vpop.f32.mrf.mxu0
    %385 = vdwg.mxu0
    %386 = vmatpush.bf16.msra.mxu0 %v197
    %387 = vmatpush.bf16.msra.mxu0 %v193
    %388 = vmatpush.bf16.msra.mxu0 %v189
    %389 = vmatpush.bf16.msra.mxu0 %v185
    %390 = vmatpush.bf16.msra.mxu0 %v181
    %391 = vmatpush.bf16.msra.mxu0 %v177
    %392 = vmatpush.bf16.msra.mxu0 %v173
    %393 = vmatpush.bf16.msra.mxu0 %v169
    %394 = vmatmul.bf16.gmra.mxu0 %v359
    %v395 = vpop.f32.mrf.mxu0
    %v396 = vadd.f32 0.0, %v395
    %v397 = vpop.f32.mrf.mxu0
    %398 = vdwg.mxu0
    %399 = vmatpush.bf16.msra.mxu0 %v198
    %400 = vmatpush.bf16.msra.mxu0 %v194
    %401 = vmatpush.bf16.msra.mxu0 %v190
    %402 = vmatpush.bf16.msra.mxu0 %v186
    %403 = vmatpush.bf16.msra.mxu0 %v182
    %404 = vmatpush.bf16.msra.mxu0 %v178
    %405 = vmatpush.bf16.msra.mxu0 %v174
    %406 = vmatpush.bf16.msra.mxu0 %v170
    %407 = vmatmul.bf16.gmra.mxu0 %v359
    %v408 = vpop.f32.mrf.mxu0
    %v409 = vadd.f32 0.0, %v408
    %v410 = vpop.f32.mrf.mxu0
    %411 = vdwg.mxu0
    %v412 = vadd.f32 %v355, %v370
    %v413 = vadd.f32 %v356, %v383
    %v414 = vadd.f32 %v357, %v396
    %v415 = vadd.f32 %v358, %v409
    %v416 = vxor.u32 %v412, 2147483648
    %v417 = vxor.u32 %v413, 2147483648
    %v418 = vxor.u32 %v414, 2147483648
    %v419 = vmul.f32 %v416, 1.442695
    %v420 = vpow.pop %v419
    %v421 = vmul.f32 %v417, 1.442695
    %v422 = vpow.pop %v421
    %v423 = vmul.f32 %v418, 1.442695
    %v424 = vpow.pop %v423
    %v425 = vadd.f32 %v420, 1.0
    %v426 = vadd.f32 %v422, 1.0
    %v427 = vadd.f32 %v424, 1.0
    %v428 = vrcp.pop %v425
    %v429 = vmul.f32 %v425, %v428
    %v430 = vsub.f32 1.0, %v429
    %v431 = vmul.f32 %v428, %v430
    %v432 = vadd.f32 %v428, %v431
    %vm433 = vweird.f32 %v425
    %vm434 = vweird.f32 %v428
    %vm435 = vmor %vm433, %vm434
    %v436 = vsel %vm435, %v428, %v432
    %v437 = vand.u32 2147483647, %v425
    %vm438 = vcmp.eq.f32.partialorder %v437, 8.507059e+37
    %v439 = vand.u32 %v425, 2147483648
    %v440 = vor.u32 1.1754944e-38, %v439
    %v441 = vsel %vm438, %v440, %v436
    %v442 = vmul.f32 1.0, %v441
    %v443 = vrcp.pop %v426
    %v444 = vmul.f32 %v426, %v443
    %v445 = vsub.f32 1.0, %v444
    %v446 = vmul.f32 %v443, %v445
    %v447 = vadd.f32 %v443, %v446
    %vm448 = vweird.f32 %v426
    %vm449 = vweird.f32 %v443
    %vm450 = vmor %vm448, %vm449
    %v451 = vsel %vm450, %v443, %v447
    %v452 = vand.u32 2147483647, %v426
    %vm453 = vcmp.eq.f32.partialorder %v452, 8.507059e+37
    %v454 = vand.u32 %v426, 2147483648
    %v455 = vor.u32 1.1754944e-38, %v454
    %v456 = vsel %vm453, %v455, %v451
    %v457 = vmul.f32 1.0, %v456
    %v458 = vrcp.pop %v427
    %v459 = vmul.f32 %v427, %v458
    %v460 = vsub.f32 1.0, %v459
    %v461 = vmul.f32 %v458, %v460
    %v462 = vadd.f32 %v458, %v461
    %vm463 = vweird.f32 %v427
    %vm464 = vweird.f32 %v458
    %vm465 = vmor %vm463, %vm464
    %v466 = vsel %vm465, %v458, %v462
    %v467 = vand.u32 2147483647, %v427
    %vm468 = vcmp.eq.f32.partialorder %v467, 8.507059e+37
    %v469 = vand.u32 %v427, 2147483648
    %v470 = vor.u32 1.1754944e-38, %v469
    %v471 = vsel %vm468, %v470, %v466
    %v472 = vmul.f32 1.0, %v471
    %v473 = vtanh.pop %v415
    %v474 = vmul.f32 %v457, %v347
    %v475 = vmul.f32 %v442, %v473
    %v476 = vadd.f32 %v474, %v475
    %v477 = vtanh.pop %v476
    %v478 = vmul.f32 %v472, %v477
    %s479 = sld [smem:[#allocation3 + $0x1]]
    %v480 = vstv %s479
    %v481 = vmul.f32 %v480, %v478
    %v482 = vadd.f32 %v353, %v481
    %s483 = scalar_lea.vmem %s0, 64
    %v484 = vld [vmem:[%s483] sm:$0xff]
    %v485 = vld [vmem:[%s483 + $0x8] sm:$0xff]
    %v486 = vld [vmem:[%s483 + $0x10] sm:$0xff]
    %v487 = vld [vmem:[%s483 + $0x18] sm:$0xff]
    %v488 = vpack.c.bf16 %v478, %v478
    %489 = vmatpush.bf16.msra.mxu0 %v195
    %490 = vmatpush.bf16.msra.mxu0 %v191
    %491 = vmatpush.bf16.msra.mxu0 %v187
    %492 = vmatpush.bf16.msra.mxu0 %v183
    %493 = vmatpush.bf16.msra.mxu0 %v179
    %494 = vmatpush.bf16.msra.mxu0 %v175
    %495 = vmatpush.bf16.msra.mxu0 %v171
    %496 = vmatpush.bf16.msra.mxu0 %v167
    %497 = vmatmul.bf16.gmra.mxu0 %v488
    %v498 = vpop.f32.mrf.mxu0
    %v499 = vadd.f32 0.0, %v498
    %v500 = vpop.f32.mrf.mxu0
    %501 = vdwg.mxu0
    %502 = vmatpush.bf16.msra.mxu0 %v196
    %503 = vmatpush.bf16.msra.mxu0 %v192
    %504 = vmatpush.bf16.msra.mxu0 %v188
    %505 = vmatpush.bf16.msra.mxu0 %v184
    %506 = vmatpush.bf16.msra.mxu0 %v180
    %507 = vmatpush.bf16.msra.mxu0 %v176
    %508 = vmatpush.bf16.msra.mxu0 %v172
    %509 = vmatpush.bf16.msra.mxu0 %v168
    %510 = vmatmul.bf16.gmra.mxu0 %v488
    %v511 = vpop.f32.mrf.mxu0
    %v512 = vadd.f32 0.0, %v511
    %v513 = vpop.f32.mrf.mxu0
    %514 = vdwg.mxu0
    %515 = vmatpush.bf16.msra.mxu0 %v197
    %516 = vmatpush.bf16.msra.mxu0 %v193
    %517 = vmatpush.bf16.msra.mxu0 %v189
    %518 = vmatpush.bf16.msra.mxu0 %v185
    %519 = vmatpush.bf16.msra.mxu0 %v181
    %520 = vmatpush.bf16.msra.mxu0 %v177
    %521 = vmatpush.bf16.msra.mxu0 %v173
    %522 = vmatpush.bf16.msra.mxu0 %v169
    %523 = vmatmul.bf16.gmra.mxu0 %v488
    %v524 = vpop.f32.mrf.mxu0
    %v525 = vadd.f32 0.0, %v524
    %v526 = vpop.f32.mrf.mxu0
    %527 = vdwg.mxu0
    %528 = vmatpush.bf16.msra.mxu0 %v198
    %529 = vmatpush.bf16.msra.mxu0 %v194
    %530 = vmatpush.bf16.msra.mxu0 %v190
    %531 = vmatpush.bf16.msra.mxu0 %v186
    %532 = vmatpush.bf16.msra.mxu0 %v182
    %533 = vmatpush.bf16.msra.mxu0 %v178
    %534 = vmatpush.bf16.msra.mxu0 %v174
    %535 = vmatpush.bf16.msra.mxu0 %v170
    %536 = vmatmul.bf16.gmra.mxu0 %v488
    %v537 = vpop.f32.mrf.mxu0
    %v538 = vadd.f32 0.0, %v537
    %v539 = vpop.f32.mrf.mxu0
    %540 = vdwg.mxu0
    %v541 = vadd.f32 %v484, %v499
    %v542 = vadd.f32 %v485, %v512
    %v543 = vadd.f32 %v486, %v525
    %v544 = vadd.f32 %v487, %v538
    %v545 = vxor.u32 %v541, 2147483648
    %v546 = vxor.u32 %v542, 2147483648
    %v547 = vxor.u32 %v543, 2147483648
    %v548 = vmul.f32 %v545, 1.442695
    %v549 = vpow.pop %v548
    %v550 = vmul.f32 %v546, 1.442695
    %v551 = vpow.pop %v550
    %v552 = vmul.f32 %v547, 1.442695
    %v553 = vpow.pop %v552
    %v554 = vadd.f32 %v549, 1.0
    %v555 = vadd.f32 %v551, 1.0
    %v556 = vadd.f32 %v553, 1.0
    %v557 = vrcp.pop %v554
    %v558 = vmul.f32 %v554, %v557
    %v559 = vsub.f32 1.0, %v558
    %v560 = vmul.f32 %v557, %v559
    %v561 = vadd.f32 %v557, %v560
    %vm562 = vweird.f32 %v554
    %vm563 = vweird.f32 %v557
    %vm564 = vmor %vm562, %vm563
    %v565 = vsel %vm564, %v557, %v561
    %v566 = vand.u32 2147483647, %v554
    %vm567 = vcmp.eq.f32.partialorder %v566, 8.507059e+37
    %v568 = vand.u32 %v554, 2147483648
    %v569 = vor.u32 1.1754944e-38, %v568
    %v570 = vsel %vm567, %v569, %v565
    %v571 = vmul.f32 1.0, %v570
    %v572 = vrcp.pop %v555
    %v573 = vmul.f32 %v555, %v572
    %v574 = vsub.f32 1.0, %v573
    %v575 = vmul.f32 %v572, %v574
    %v576 = vadd.f32 %v572, %v575
    %vm577 = vweird.f32 %v555
    %vm578 = vweird.f32 %v572
    %vm579 = vmor %vm577, %vm578
    %v580 = vsel %vm579, %v572, %v576
    %v581 = vand.u32 2147483647, %v555
    %vm582 = vcmp.eq.f32.partialorder %v581, 8.507059e+37
    %v583 = vand.u32 %v555, 2147483648
    %v584 = vor.u32 1.1754944e-38, %v583
    %v585 = vsel %vm582, %v584, %v580
    %v586 = vmul.f32 1.0, %v585
    %v587 = vrcp.pop %v556
    %v588 = vmul.f32 %v556, %v587
    %v589 = vsub.f32 1.0, %v588
    %v590 = vmul.f32 %v587, %v589
    %v591 = vadd.f32 %v587, %v590
    %vm592 = vweird.f32 %v556
    %vm593 = vweird.f32 %v587
    %vm594 = vmor %vm592, %vm593
    %v595 = vsel %vm594, %v587, %v591
    %v596 = vand.u32 2147483647, %v556
    %vm597 = vcmp.eq.f32.partialorder %v596, 8.507059e+37
    %v598 = vand.u32 %v556, 2147483648
    %v599 = vor.u32 1.1754944e-38, %v598
    %v600 = vsel %vm597, %v599, %v595
    %v601 = vmul.f32 1.0, %v600
    %v602 = vtanh.pop %v544
    %v603 = vmul.f32 %v586, %v476
    %v604 = vmul.f32 %v571, %v602
    %v605 = vadd.f32 %v603, %v604
    %v606 = vtanh.pop %v605
    %v607 = vmul.f32 %v601, %v606
    %s608 = sld [smem:[#allocation3 + $0x2]]
    %v609 = vstv %s608
    %v610 = vmul.f32 %v609, %v607
    %v611 = vadd.f32 %v482, %v610
    %s612 = scalar_lea.vmem %s0, 96
    %v613 = vld [vmem:[%s612] sm:$0xff]
    %v614 = vld [vmem:[%s612 + $0x8] sm:$0xff]
    %v615 = vld [vmem:[%s612 + $0x10] sm:$0xff]
    %v616 = vld [vmem:[%s612 + $0x18] sm:$0xff]
    %v617 = vpack.c.bf16 %v607, %v607
    %618 = vmatpush.bf16.msra.mxu0 %v195
    %619 = vmatpush.bf16.msra.mxu0 %v191
    %620 = vmatpush.bf16.msra.mxu0 %v187
    %621 = vmatpush.bf16.msra.mxu0 %v183
    %622 = vmatpush.bf16.msra.mxu0 %v179
    %623 = vmatpush.bf16.msra.mxu0 %v175
    %624 = vmatpush.bf16.msra.mxu0 %v171
    %625 = vmatpush.bf16.msra.mxu0 %v167
    %626 = vmatmul.bf16.gmra.mxu0 %v617
    %v627 = vpop.f32.mrf.mxu0
    %v628 = vadd.f32 0.0, %v627
    %v629 = vpop.f32.mrf.mxu0
    %630 = vdwg.mxu0
    %631 = vmatpush.bf16.msra.mxu0 %v196
    %632 = vmatpush.bf16.msra.mxu0 %v192
    %633 = vmatpush.bf16.msra.mxu0 %v188
    %634 = vmatpush.bf16.msra.mxu0 %v184
    %635 = vmatpush.bf16.msra.mxu0 %v180
    %636 = vmatpush.bf16.msra.mxu0 %v176
    %637 = vmatpush.bf16.msra.mxu0 %v172
    %638 = vmatpush.bf16.msra.mxu0 %v168
    %639 = vmatmul.bf16.gmra.mxu0 %v617
    %v640 = vpop.f32.mrf.mxu0
    %v641 = vadd.f32 0.0, %v640
    %v642 = vpop.f32.mrf.mxu0
    %643 = vdwg.mxu0
    %644 = vmatpush.bf16.msra.mxu0 %v197
    %645 = vmatpush.bf16.msra.mxu0 %v193
    %646 = vmatpush.bf16.msra.mxu0 %v189
    %647 = vmatpush.bf16.msra.mxu0 %v185
    %648 = vmatpush.bf16.msra.mxu0 %v181
    %649 = vmatpush.bf16.msra.mxu0 %v177
    %650 = vmatpush.bf16.msra.mxu0 %v173
    %651 = vmatpush.bf16.msra.mxu0 %v169
    %652 = vmatmul.bf16.gmra.mxu0 %v617
    %v653 = vpop.f32.mrf.mxu0
    %v654 = vadd.f32 0.0, %v653
    %v655 = vpop.f32.mrf.mxu0
    %656 = vdwg.mxu0
    %657 = vmatpush.bf16.msra.mxu0 %v198
    %658 = vmatpush.bf16.msra.mxu0 %v194
    %659 = vmatpush.bf16.msra.mxu0 %v190
    %660 = vmatpush.bf16.msra.mxu0 %v186
    %661 = vmatpush.bf16.msra.mxu0 %v182
    %662 = vmatpush.bf16.msra.mxu0 %v178
    %663 = vmatpush.bf16.msra.mxu0 %v174
    %664 = vmatpush.bf16.msra.mxu0 %v170
    %665 = vmatmul.bf16.gmra.mxu0 %v617
    %v666 = vpop.f32.mrf.mxu0
    %v667 = vadd.f32 0.0, %v666
    %v668 = vpop.f32.mrf.mxu0
    %669 = vdwg.mxu0
    %v670 = vadd.f32 %v613, %v628
    %v671 = vadd.f32 %v614, %v641
    %v672 = vadd.f32 %v615, %v654
    %v673 = vadd.f32 %v616, %v667
    %v674 = vxor.u32 %v670, 2147483648
    %v675 = vxor.u32 %v671, 2147483648
    %v676 = vxor.u32 %v672, 2147483648
    %v677 = vmul.f32 %v674, 1.442695
    %v678 = vpow.pop %v677
    %v679 = vmul.f32 %v675, 1.442695
    %v680 = vpow.pop %v679
    %v681 = vmul.f32 %v676, 1.442695
    %v682 = vpow.pop %v681
    %v683 = vadd.f32 %v678, 1.0
    %v684 = vadd.f32 %v680, 1.0
    %v685 = vadd.f32 %v682, 1.0
    %v686 = vrcp.pop %v683
    %v687 = vmul.f32 %v683, %v686
    %v688 = vsub.f32 1.0, %v687
    %v689 = vmul.f32 %v686, %v688
    %v690 = vadd.f32 %v686, %v689
    %vm691 = vweird.f32 %v683
    %vm692 = vweird.f32 %v686
    %vm693 = vmor %vm691, %vm692
    %v694 = vsel %vm693, %v686, %v690
    %v695 = vand.u32 2147483647, %v683
    %vm696 = vcmp.eq.f32.partialorder %v695, 8.507059e+37
    %v697 = vand.u32 %v683, 2147483648
    %v698 = vor.u32 1.1754944e-38, %v697
    %v699 = vsel %vm696, %v698, %v694
    %v700 = vmul.f32 1.0, %v699
    %v701 = vrcp.pop %v684
    %v702 = vmul.f32 %v684, %v701
    %v703 = vsub.f32 1.0, %v702
    %v704 = vmul.f32 %v701, %v703
    %v705 = vadd.f32 %v701, %v704
    %vm706 = vweird.f32 %v684
    %vm707 = vweird.f32 %v701
    %vm708 = vmor %vm706, %vm707
    %v709 = vsel %vm708, %v701, %v705
    %v710 = vand.u32 2147483647, %v684
    %vm711 = vcmp.eq.f32.partialorder %v710, 8.507059e+37
    %v712 = vand.u32 %v684, 2147483648
    %v713 = vor.u32 1.1754944e-38, %v712
    %v714 = vsel %vm711, %v713, %v709
    %v715 = vmul.f32 1.0, %v714
    %v716 = vrcp.pop %v685
    %v717 = vmul.f32 %v685, %v716
    %v718 = vsub.f32 1.0, %v717
    %v719 = vmul.f32 %v716, %v718
    %v720 = vadd.f32 %v716, %v719
    %vm721 = vweird.f32 %v685
    %vm722 = vweird.f32 %v716
    %vm723 = vmor %vm721, %vm722
    %v724 = vsel %vm723, %v716, %v720
    %v725 = vand.u32 2147483647, %v685
    %vm726 = vcmp.eq.f32.partialorder %v725, 8.507059e+37
    %v727 = vand.u32 %v685, 2147483648
    %v728 = vor.u32 1.1754944e-38, %v727
    %v729 = vsel %vm726, %v728, %v724
    %v730 = vmul.f32 1.0, %v729
    %v731 = vtanh.pop %v673
    %v732 = vmul.f32 %v715, %v605
    %v733 = vmul.f32 %v700, %v731
    %v734 = vadd.f32 %v732, %v733
    %v735 = vtanh.pop %v734
    %v736 = vmul.f32 %v730, %v735
    %s737 = sld [smem:[#allocation3 + $0x3]]
    %v738 = vstv %s737
    %v739 = vmul.f32 %v738, %v736
    %v740 = vadd.f32 %v611, %v739
    %s741 = scalar_lea.vmem %s0, 128
    %v742 = vld [vmem:[%s741] sm:$0xff]
    %v743 = vld [vmem:[%s741 + $0x8] sm:$0xff]
    %v744 = vld [vmem:[%s741 + $0x10] sm:$0xff]
    %v745 = vld [vmem:[%s741 + $0x18] sm:$0xff]
    %v746 = vpack.c.bf16 %v736, %v736
    %747 = vmatpush.bf16.msra.mxu0 %v195
    %748 = vmatpush.bf16.msra.mxu0 %v191
    %749 = vmatpush.bf16.msra.mxu0 %v187
    %750 = vmatpush.bf16.msra.mxu0 %v183
    %751 = vmatpush.bf16.msra.mxu0 %v179
    %752 = vmatpush.bf16.msra.mxu0 %v175
    %753 = vmatpush.bf16.msra.mxu0 %v171
    %754 = vmatpush.bf16.msra.mxu0 %v167
    %755 = vmatmul.bf16.gmra.mxu0 %v746
    %v756 = vpop.f32.mrf.mxu0
    %v757 = vadd.f32 0.0, %v756
    %v758 = vpop.f32.mrf.mxu0
    %759 = vdwg.mxu0
    %760 = vmatpush.bf16.msra.mxu0 %v196
    %761 = vmatpush.bf16.msra.mxu0 %v192
    %762 = vmatpush.bf16.msra.mxu0 %v188
    %763 = vmatpush.bf16.msra.mxu0 %v184
    %764 = vmatpush.bf16.msra.mxu0 %v180
    %765 = vmatpush.bf16.msra.mxu0 %v176
    %766 = vmatpush.bf16.msra.mxu0 %v172
    %767 = vmatpush.bf16.msra.mxu0 %v168
    %768 = vmatmul.bf16.gmra.mxu0 %v746
    %v769 = vpop.f32.mrf.mxu0
    %v770 = vadd.f32 0.0, %v769
    %v771 = vpop.f32.mrf.mxu0
    %772 = vdwg.mxu0
    %773 = vmatpush.bf16.msra.mxu0 %v197
    %774 = vmatpush.bf16.msra.mxu0 %v193
    %775 = vmatpush.bf16.msra.mxu0 %v189
    %776 = vmatpush.bf16.msra.mxu0 %v185
    %777 = vmatpush.bf16.msra.mxu0 %v181
    %778 = vmatpush.bf16.msra.mxu0 %v177
    %779 = vmatpush.bf16.msra.mxu0 %v173
    %780 = vmatpush.bf16.msra.mxu0 %v169
    %781 = vmatmul.bf16.gmra.mxu0 %v746
    %v782 = vpop.f32.mrf.mxu0
    %v783 = vadd.f32 0.0, %v782
    %v784 = vpop.f32.mrf.mxu0
    %785 = vdwg.mxu0
    %786 = vmatpush.bf16.msra.mxu0 %v198
    %787 = vmatpush.bf16.msra.mxu0 %v194
    %788 = vmatpush.bf16.msra.mxu0 %v190
    %789 = vmatpush.bf16.msra.mxu0 %v186
    %790 = vmatpush.bf16.msra.mxu0 %v182
    %791 = vmatpush.bf16.msra.mxu0 %v178
    %792 = vmatpush.bf16.msra.mxu0 %v174
    %793 = vmatpush.bf16.msra.mxu0 %v170
    %794 = vmatmul.bf16.gmra.mxu0 %v746
    %v795 = vpop.f32.mrf.mxu0
    %v796 = vadd.f32 0.0, %v795
    %v797 = vpop.f32.mrf.mxu0
    %798 = vdwg.mxu0
    %v799 = vadd.f32 %v742, %v757
    %v800 = vadd.f32 %v743, %v770
    %v801 = vadd.f32 %v744, %v783
    %v802 = vadd.f32 %v745, %v796
    %v803 = vxor.u32 %v799, 2147483648
    %v804 = vxor.u32 %v800, 2147483648
    %v805 = vxor.u32 %v801, 2147483648
    %v806 = vmul.f32 %v803, 1.442695
    %v807 = vpow.pop %v806
    %v808 = vmul.f32 %v804, 1.442695
    %v809 = vpow.pop %v808
    %v810 = vmul.f32 %v805, 1.442695
    %v811 = vpow.pop %v810
    %v812 = vadd.f32 %v807, 1.0
    %v813 = vadd.f32 %v809, 1.0
    %v814 = vadd.f32 %v811, 1.0
    %v815 = vrcp.pop %v812
    %v816 = vmul.f32 %v812, %v815
    %v817 = vsub.f32 1.0, %v816
    %v818 = vmul.f32 %v815, %v817
    %v819 = vadd.f32 %v815, %v818
    %vm820 = vweird.f32 %v812
    %vm821 = vweird.f32 %v815
    %vm822 = vmor %vm820, %vm821
    %v823 = vsel %vm822, %v815, %v819
    %v824 = vand.u32 2147483647, %v812
    %vm825 = vcmp.eq.f32.partialorder %v824, 8.507059e+37
    %v826 = vand.u32 %v812, 2147483648
    %v827 = vor.u32 1.1754944e-38, %v826
    %v828 = vsel %vm825, %v827, %v823
    %v829 = vmul.f32 1.0, %v828
    %v830 = vrcp.pop %v813
    %v831 = vmul.f32 %v813, %v830
    %v832 = vsub.f32 1.0, %v831
    %v833 = vmul.f32 %v830, %v832
    %v834 = vadd.f32 %v830, %v833
    %vm835 = vweird.f32 %v813
    %vm836 = vweird.f32 %v830
    %vm837 = vmor %vm835, %vm836
    %v838 = vsel %vm837, %v830, %v834
    %v839 = vand.u32 2147483647, %v813
    %vm840 = vcmp.eq.f32.partialorder %v839, 8.507059e+37
    %v841 = vand.u32 %v813, 2147483648
    %v842 = vor.u32 1.1754944e-38, %v841
    %v843 = vsel %vm840, %v842, %v838
    %v844 = vmul.f32 1.0, %v843
    %v845 = vrcp.pop %v814
    %v846 = vmul.f32 %v814, %v845
    %v847 = vsub.f32 1.0, %v846
    %v848 = vmul.f32 %v845, %v847
    %v849 = vadd.f32 %v845, %v848
    %vm850 = vweird.f32 %v814
    %vm851 = vweird.f32 %v845
    %vm852 = vmor %vm850, %vm851
    %v853 = vsel %vm852, %v845, %v849
    %v854 = vand.u32 2147483647, %v814
    %vm855 = vcmp.eq.f32.partialorder %v854, 8.507059e+37
    %v856 = vand.u32 %v814, 2147483648
    %v857 = vor.u32 1.1754944e-38, %v856
    %v858 = vsel %vm855, %v857, %v853
    %v859 = vmul.f32 1.0, %v858
    %v860 = vtanh.pop %v802
    %v861 = vmul.f32 %v844, %v734
    %v862 = vmul.f32 %v829, %v860
    %v863 = vadd.f32 %v861, %v862
    %v864 = vtanh.pop %v863
    %v865 = vmul.f32 %v859, %v864
    %s866 = sld [smem:[#allocation3 + $0x4]]
    %v867 = vstv %s866
    %v868 = vmul.f32 %v867, %v865
    %v869 = vadd.f32 %v740, %v868
    %s870 = scalar_lea.vmem %s0, 160
    %v871 = vld [vmem:[%s870] sm:$0xff]
    %v872 = vld [vmem:[%s870 + $0x8] sm:$0xff]
    %v873 = vld [vmem:[%s870 + $0x10] sm:$0xff]
    %v874 = vld [vmem:[%s870 + $0x18] sm:$0xff]
    %v875 = vpack.c.bf16 %v865, %v865
    %876 = vmatpush.bf16.msra.mxu0 %v195
    %877 = vmatpush.bf16.msra.mxu0 %v191
    %878 = vmatpush.bf16.msra.mxu0 %v187
    %879 = vmatpush.bf16.msra.mxu0 %v183
    %880 = vmatpush.bf16.msra.mxu0 %v179
    %881 = vmatpush.bf16.msra.mxu0 %v175
    %882 = vmatpush.bf16.msra.mxu0 %v171
    %883 = vmatpush.bf16.msra.mxu0 %v167
    %884 = vmatmul.bf16.gmra.mxu0 %v875
    %v885 = vpop.f32.mrf.mxu0
    %v886 = vadd.f32 0.0, %v885
    %v887 = vpop.f32.mrf.mxu0
    %888 = vdwg.mxu0
    %889 = vmatpush.bf16.msra.mxu0 %v196
    %890 = vmatpush.bf16.msra.mxu0 %v192
    %891 = vmatpush.bf16.msra.mxu0 %v188
    %892 = vmatpush.bf16.msra.mxu0 %v184
    %893 = vmatpush.bf16.msra.mxu0 %v180
    %894 = vmatpush.bf16.msra.mxu0 %v176
    %895 = vmatpush.bf16.msra.mxu0 %v172
    %896 = vmatpush.bf16.msra.mxu0 %v168
    %897 = vmatmul.bf16.gmra.mxu0 %v875
    %v898 = vpop.f32.mrf.mxu0
    %v899 = vadd.f32 0.0, %v898
    %v900 = vpop.f32.mrf.mxu0
    %901 = vdwg.mxu0
    %902 = vmatpush.bf16.msra.mxu0 %v197
    %903 = vmatpush.bf16.msra.mxu0 %v193
    %904 = vmatpush.bf16.msra.mxu0 %v189
    %905 = vmatpush.bf16.msra.mxu0 %v185
    %906 = vmatpush.bf16.msra.mxu0 %v181
    %907 = vmatpush.bf16.msra.mxu0 %v177
    %908 = vmatpush.bf16.msra.mxu0 %v173
    %909 = vmatpush.bf16.msra.mxu0 %v169
    %910 = vmatmul.bf16.gmra.mxu0 %v875
    %v911 = vpop.f32.mrf.mxu0
    %v912 = vadd.f32 0.0, %v911
    %v913 = vpop.f32.mrf.mxu0
    %914 = vdwg.mxu0
    %915 = vmatpush.bf16.msra.mxu0 %v198
    %916 = vmatpush.bf16.msra.mxu0 %v194
    %917 = vmatpush.bf16.msra.mxu0 %v190
    %918 = vmatpush.bf16.msra.mxu0 %v186
    %919 = vmatpush.bf16.msra.mxu0 %v182
    %920 = vmatpush.bf16.msra.mxu0 %v178
    %921 = vmatpush.bf16.msra.mxu0 %v174
    %922 = vmatpush.bf16.msra.mxu0 %v170
    %923 = vmatmul.bf16.gmra.mxu0 %v875
    %v924 = vpop.f32.mrf.mxu0
    %v925 = vadd.f32 0.0, %v924
    %v926 = vpop.f32.mrf.mxu0
    %927 = vdwg.mxu0
    %v928 = vadd.f32 %v871, %v886
    %v929 = vadd.f32 %v872, %v899
    %v930 = vadd.f32 %v873, %v912
    %v931 = vadd.f32 %v874, %v925
    %v932 = vxor.u32 %v928, 2147483648
    %v933 = vxor.u32 %v929, 2147483648
    %v934 = vxor.u32 %v930, 2147483648
    %v935 = vmul.f32 %v932, 1.442695
    %v936 = vpow.pop %v935
    %v937 = vmul.f32 %v933, 1.442695
    %v938 = vpow.pop %v937
    %v939 = vmul.f32 %v934, 1.442695
    %v940 = vpow.pop %v939
    %v941 = vadd.f32 %v936, 1.0
    %v942 = vadd.f32 %v938, 1.0
    %v943 = vadd.f32 %v940, 1.0
    %v944 = vrcp.pop %v941
    %v945 = vmul.f32 %v941, %v944
    %v946 = vsub.f32 1.0, %v945
    %v947 = vmul.f32 %v944, %v946
    %v948 = vadd.f32 %v944, %v947
    %vm949 = vweird.f32 %v941
    %vm950 = vweird.f32 %v944
    %vm951 = vmor %vm949, %vm950
    %v952 = vsel %vm951, %v944, %v948
    %v953 = vand.u32 2147483647, %v941
    %vm954 = vcmp.eq.f32.partialorder %v953, 8.507059e+37
    %v955 = vand.u32 %v941, 2147483648
    %v956 = vor.u32 1.1754944e-38, %v955
    %v957 = vsel %vm954, %v956, %v952
    %v958 = vmul.f32 1.0, %v957
    %v959 = vrcp.pop %v942
    %v960 = vmul.f32 %v942, %v959
    %v961 = vsub.f32 1.0, %v960
    %v962 = vmul.f32 %v959, %v961
    %v963 = vadd.f32 %v959, %v962
    %vm964 = vweird.f32 %v942
    %vm965 = vweird.f32 %v959
    %vm966 = vmor %vm964, %vm965
    %v967 = vsel %vm966, %v959, %v963
    %v968 = vand.u32 2147483647, %v942
    %vm969 = vcmp.eq.f32.partialorder %v968, 8.507059e+37
    %v970 = vand.u32 %v942, 2147483648
    %v971 = vor.u32 1.1754944e-38, %v970
    %v972 = vsel %vm969, %v971, %v967
    %v973 = vmul.f32 1.0, %v972
    %v974 = vrcp.pop %v943
    %v975 = vmul.f32 %v943, %v974
    %v976 = vsub.f32 1.0, %v975
    %v977 = vmul.f32 %v974, %v976
    %v978 = vadd.f32 %v974, %v977
    %vm979 = vweird.f32 %v943
    %vm980 = vweird.f32 %v974
    %vm981 = vmor %vm979, %vm980
    %v982 = vsel %vm981, %v974, %v978
    %v983 = vand.u32 2147483647, %v943
    %vm984 = vcmp.eq.f32.partialorder %v983, 8.507059e+37
    %v985 = vand.u32 %v943, 2147483648
    %v986 = vor.u32 1.1754944e-38, %v985
    %v987 = vsel %vm984, %v986, %v982
    %v988 = vmul.f32 1.0, %v987
    %v989 = vtanh.pop %v931
    %v990 = vmul.f32 %v973, %v863
    %v991 = vmul.f32 %v958, %v989
    %v992 = vadd.f32 %v990, %v991
    %v993 = vtanh.pop %v992
    %v994 = vmul.f32 %v988, %v993
    %s995 = sld [smem:[#allocation3 + $0x5]]
    %v996 = vstv %s995
    %v997 = vmul.f32 %v996, %v994
    %v998 = vadd.f32 %v869, %v997
    %s999 = scalar_lea.vmem %s0, 192
    %v1000 = vld [vmem:[%s999] sm:$0xff]
    %v1001 = vld [vmem:[%s999 + $0x8] sm:$0xff]
    %v1002 = vld [vmem:[%s999 + $0x10] sm:$0xff]
    %v1003 = vld [vmem:[%s999 + $0x18] sm:$0xff]
    %v1004 = vpack.c.bf16 %v994, %v994
    %1005 = vmatpush.bf16.msra.mxu0 %v195
    %1006 = vmatpush.bf16.msra.mxu0 %v191
    %1007 = vmatpush.bf16.msra.mxu0 %v187
    %1008 = vmatpush.bf16.msra.mxu0 %v183
    %1009 = vmatpush.bf16.msra.mxu0 %v179
    %1010 = vmatpush.bf16.msra.mxu0 %v175
    %1011 = vmatpush.bf16.msra.mxu0 %v171
    %1012 = vmatpush.bf16.msra.mxu0 %v167
    %1013 = vmatmul.bf16.gmra.mxu0 %v1004
    %v1014 = vpop.f32.mrf.mxu0
    %v1015 = vadd.f32 0.0, %v1014
    %v1016 = vpop.f32.mrf.mxu0
    %1017 = vdwg.mxu0
    %1018 = vmatpush.bf16.msra.mxu0 %v196
    %1019 = vmatpush.bf16.msra.mxu0 %v192
    %1020 = vmatpush.bf16.msra.mxu0 %v188
    %1021 = vmatpush.bf16.msra.mxu0 %v184
    %1022 = vmatpush.bf16.msra.mxu0 %v180
    %1023 = vmatpush.bf16.msra.mxu0 %v176
    %1024 = vmatpush.bf16.msra.mxu0 %v172
    %1025 = vmatpush.bf16.msra.mxu0 %v168
    %1026 = vmatmul.bf16.gmra.mxu0 %v1004
    %v1027 = vpop.f32.mrf.mxu0
    %v1028 = vadd.f32 0.0, %v1027
    %v1029 = vpop.f32.mrf.mxu0
    %1030 = vdwg.mxu0
    %1031 = vmatpush.bf16.msra.mxu0 %v197
    %1032 = vmatpush.bf16.msra.mxu0 %v193
    %1033 = vmatpush.bf16.msra.mxu0 %v189
    %1034 = vmatpush.bf16.msra.mxu0 %v185
    %1035 = vmatpush.bf16.msra.mxu0 %v181
    %1036 = vmatpush.bf16.msra.mxu0 %v177
    %1037 = vmatpush.bf16.msra.mxu0 %v173
    %1038 = vmatpush.bf16.msra.mxu0 %v169
    %1039 = vmatmul.bf16.gmra.mxu0 %v1004
    %v1040 = vpop.f32.mrf.mxu0
    %v1041 = vadd.f32 0.0, %v1040
    %v1042 = vpop.f32.mrf.mxu0
    %1043 = vdwg.mxu0
    %1044 = vmatpush.bf16.msra.mxu0 %v198
    %1045 = vmatpush.bf16.msra.mxu0 %v194
    %1046 = vmatpush.bf16.msra.mxu0 %v190
    %1047 = vmatpush.bf16.msra.mxu0 %v186
    %1048 = vmatpush.bf16.msra.mxu0 %v182
    %1049 = vmatpush.bf16.msra.mxu0 %v178
    %1050 = vmatpush.bf16.msra.mxu0 %v174
    %1051 = vmatpush.bf16.msra.mxu0 %v170
    %1052 = vmatmul.bf16.gmra.mxu0 %v1004
    %v1053 = vpop.f32.mrf.mxu0
    %v1054 = vadd.f32 0.0, %v1053
    %v1055 = vpop.f32.mrf.mxu0
    %1056 = vdwg.mxu0
    %v1057 = vadd.f32 %v1000, %v1015
    %v1058 = vadd.f32 %v1001, %v1028
    %v1059 = vadd.f32 %v1002, %v1041
    %v1060 = vadd.f32 %v1003, %v1054
    %v1061 = vxor.u32 %v1057, 2147483648
    %v1062 = vxor.u32 %v1058, 2147483648
    %v1063 = vxor.u32 %v1059, 2147483648
    %v1064 = vmul.f32 %v1061, 1.442695
    %v1065 = vpow.pop %v1064
    %v1066 = vmul.f32 %v1062, 1.442695
    %v1067 = vpow.pop %v1066
    %v1068 = vmul.f32 %v1063, 1.442695
    %v1069 = vpow.pop %v1068
    %v1070 = vadd.f32 %v1065, 1.0
    %v1071 = vadd.f32 %v1067, 1.0
    %v1072 = vadd.f32 %v1069, 1.0
    %v1073 = vrcp.pop %v1070
    %v1074 = vmul.f32 %v1070, %v1073
    %v1075 = vsub.f32 1.0, %v1074
    %v1076 = vmul.f32 %v1073, %v1075
    %v1077 = vadd.f32 %v1073, %v1076
    %vm1078 = vweird.f32 %v1070
    %vm1079 = vweird.f32 %v1073
    %vm1080 = vmor %vm1078, %vm1079
    %v1081 = vsel %vm1080, %v1073, %v1077
    %v1082 = vand.u32 2147483647, %v1070
    %vm1083 = vcmp.eq.f32.partialorder %v1082, 8.507059e+37
    %v1084 = vand.u32 %v1070, 2147483648
    %v1085 = vor.u32 1.1754944e-38, %v1084
    %v1086 = vsel %vm1083, %v1085, %v1081
    %v1087 = vmul.f32 1.0, %v1086
    %v1088 = vrcp.pop %v1071
    %v1089 = vmul.f32 %v1071, %v1088
    %v1090 = vsub.f32 1.0, %v1089
    %v1091 = vmul.f32 %v1088, %v1090
    %v1092 = vadd.f32 %v1088, %v1091
    %vm1093 = vweird.f32 %v1071
    %vm1094 = vweird.f32 %v1088
    %vm1095 = vmor %vm1093, %vm1094
    %v1096 = vsel %vm1095, %v1088, %v1092
    %v1097 = vand.u32 2147483647, %v1071
    %vm1098 = vcmp.eq.f32.partialorder %v1097, 8.507059e+37
    %v1099 = vand.u32 %v1071, 2147483648
    %v1100 = vor.u32 1.1754944e-38, %v1099
    %v1101 = vsel %vm1098, %v1100, %v1096
    %v1102 = vmul.f32 1.0, %v1101
    %v1103 = vrcp.pop %v1072
    %v1104 = vmul.f32 %v1072, %v1103
    %v1105 = vsub.f32 1.0, %v1104
    %v1106 = vmul.f32 %v1103, %v1105
    %v1107 = vadd.f32 %v1103, %v1106
    %vm1108 = vweird.f32 %v1072
    %vm1109 = vweird.f32 %v1103
    %vm1110 = vmor %vm1108, %vm1109
    %v1111 = vsel %vm1110, %v1103, %v1107
    %v1112 = vand.u32 2147483647, %v1072
    %vm1113 = vcmp.eq.f32.partialorder %v1112, 8.507059e+37
    %v1114 = vand.u32 %v1072, 2147483648
    %v1115 = vor.u32 1.1754944e-38, %v1114
    %v1116 = vsel %vm1113, %v1115, %v1111
    %v1117 = vmul.f32 1.0, %v1116
    %v1118 = vtanh.pop %v1060
    %v1119 = vmul.f32 %v1102, %v992
    %v1120 = vmul.f32 %v1087, %v1118
    %v1121 = vadd.f32 %v1119, %v1120
    %v1122 = vtanh.pop %v1121
    %v1123 = vmul.f32 %v1117, %v1122
    %s1124 = sld [smem:[#allocation3 + $0x6]]
    %v1125 = vstv %s1124
    %v1126 = vmul.f32 %v1125, %v1123
    %v1127 = vadd.f32 %v998, %v1126
    %s1128 = scalar_lea.vmem %s0, 224
    %v1129 = vld [vmem:[%s1128] sm:$0xff]
    %v1130 = vld [vmem:[%s1128 + $0x8] sm:$0xff]
    %v1131 = vld [vmem:[%s1128 + $0x10] sm:$0xff]
    %v1132 = vld [vmem:[%s1128 + $0x18] sm:$0xff]
    %v1133 = vpack.c.bf16 %v1123, %v1123
    %1134 = vmatpush.bf16.msra.mxu0 %v195
    %1135 = vmatpush.bf16.msra.mxu0 %v191
    %1136 = vmatpush.bf16.msra.mxu0 %v187
    %1137 = vmatpush.bf16.msra.mxu0 %v183
    %1138 = vmatpush.bf16.msra.mxu0 %v179
    %1139 = vmatpush.bf16.msra.mxu0 %v175
    %1140 = vmatpush.bf16.msra.mxu0 %v171
    %1141 = vmatpush.bf16.msra.mxu0 %v167
    %1142 = vmatmul.bf16.gmra.mxu0 %v1133
    %v1143 = vpop.f32.mrf.mxu0
    %v1144 = vadd.f32 0.0, %v1143
    %v1145 = vpop.f32.mrf.mxu0
    %1146 = vdwg.mxu0
    %1147 = vmatpush.bf16.msra.mxu0 %v196
    %1148 = vmatpush.bf16.msra.mxu0 %v192
    %1149 = vmatpush.bf16.msra.mxu0 %v188
    %1150 = vmatpush.bf16.msra.mxu0 %v184
    %1151 = vmatpush.bf16.msra.mxu0 %v180
    %1152 = vmatpush.bf16.msra.mxu0 %v176
    %1153 = vmatpush.bf16.msra.mxu0 %v172
    %1154 = vmatpush.bf16.msra.mxu0 %v168
    %1155 = vmatmul.bf16.gmra.mxu0 %v1133
    %v1156 = vpop.f32.mrf.mxu0
    %v1157 = vadd.f32 0.0, %v1156
    %v1158 = vpop.f32.mrf.mxu0
    %1159 = vdwg.mxu0
    %1160 = vmatpush.bf16.msra.mxu0 %v197
    %1161 = vmatpush.bf16.msra.mxu0 %v193
    %1162 = vmatpush.bf16.msra.mxu0 %v189
    %1163 = vmatpush.bf16.msra.mxu0 %v185
    %1164 = vmatpush.bf16.msra.mxu0 %v181
    %1165 = vmatpush.bf16.msra.mxu0 %v177
    %1166 = vmatpush.bf16.msra.mxu0 %v173
    %1167 = vmatpush.bf16.msra.mxu0 %v169
    %1168 = vmatmul.bf16.gmra.mxu0 %v1133
    %v1169 = vpop.f32.mrf.mxu0
    %v1170 = vadd.f32 0.0, %v1169
    %v1171 = vpop.f32.mrf.mxu0
    %1172 = vdwg.mxu0
    %1173 = vmatpush.bf16.msra.mxu0 %v198
    %1174 = vmatpush.bf16.msra.mxu0 %v194
    %1175 = vmatpush.bf16.msra.mxu0 %v190
    %1176 = vmatpush.bf16.msra.mxu0 %v186
    %1177 = vmatpush.bf16.msra.mxu0 %v182
    %1178 = vmatpush.bf16.msra.mxu0 %v178
    %1179 = vmatpush.bf16.msra.mxu0 %v174
    %1180 = vmatpush.bf16.msra.mxu0 %v170
    %1181 = vmatmul.bf16.gmra.mxu0 %v1133
    %v1182 = vpop.f32.mrf.mxu0
    %v1183 = vadd.f32 0.0, %v1182
    %v1184 = vpop.f32.mrf.mxu0
    %1185 = vdwg.mxu0
    %v1186 = vadd.f32 %v1129, %v1144
    %v1187 = vadd.f32 %v1130, %v1157
    %v1188 = vadd.f32 %v1131, %v1170
    %v1189 = vadd.f32 %v1132, %v1183
    %v1190 = vxor.u32 %v1186, 2147483648
    %v1191 = vxor.u32 %v1187, 2147483648
    %v1192 = vxor.u32 %v1188, 2147483648
    %v1193 = vmul.f32 %v1190, 1.442695
    %v1194 = vpow.pop %v1193
    %v1195 = vmul.f32 %v1191, 1.442695
    %v1196 = vpow.pop %v1195
    %v1197 = vmul.f32 %v1192, 1.442695
    %v1198 = vpow.pop %v1197
    %v1199 = vadd.f32 %v1194, 1.0
    %v1200 = vadd.f32 %v1196, 1.0
    %v1201 = vadd.f32 %v1198, 1.0
    %v1202 = vrcp.pop %v1199
    %v1203 = vmul.f32 %v1199, %v1202
    %v1204 = vsub.f32 1.0, %v1203
    %v1205 = vmul.f32 %v1202, %v1204
    %v1206 = vadd.f32 %v1202, %v1205
    %vm1207 = vweird.f32 %v1199
    %vm1208 = vweird.f32 %v1202
    %vm1209 = vmor %vm1207, %vm1208
    %v1210 = vsel %vm1209, %v1202, %v1206
    %v1211 = vand.u32 2147483647, %v1199
    %vm1212 = vcmp.eq.f32.partialorder %v1211, 8.507059e+37
    %v1213 = vand.u32 %v1199, 2147483648
    %v1214 = vor.u32 1.1754944e-38, %v1213
    %v1215 = vsel %vm1212, %v1214, %v1210
    %v1216 = vmul.f32 1.0, %v1215
    %v1217 = vrcp.pop %v1200
    %v1218 = vmul.f32 %v1200, %v1217
    %v1219 = vsub.f32 1.0, %v1218
    %v1220 = vmul.f32 %v1217, %v1219
    %v1221 = vadd.f32 %v1217, %v1220
    %vm1222 = vweird.f32 %v1200
    %vm1223 = vweird.f32 %v1217
    %vm1224 = vmor %vm1222, %vm1223
    %v1225 = vsel %vm1224, %v1217, %v1221
    %v1226 = vand.u32 2147483647, %v1200
    %vm1227 = vcmp.eq.f32.partialorder %v1226, 8.507059e+37
    %v1228 = vand.u32 %v1200, 2147483648
    %v1229 = vor.u32 1.1754944e-38, %v1228
    %v1230 = vsel %vm1227, %v1229, %v1225
    %v1231 = vmul.f32 1.0, %v1230
    %v1232 = vrcp.pop %v1201
    %v1233 = vmul.f32 %v1201, %v1232
    %v1234 = vsub.f32 1.0, %v1233
    %v1235 = vmul.f32 %v1232, %v1234
    %v1236 = vadd.f32 %v1232, %v1235
    %vm1237 = vweird.f32 %v1201
    %vm1238 = vweird.f32 %v1232
    %vm1239 = vmor %vm1237, %vm1238
    %v1240 = vsel %vm1239, %v1232, %v1236
    %v1241 = vand.u32 2147483647, %v1201
    %vm1242 = vcmp.eq.f32.partialorder %v1241, 8.507059e+37
    %v1243 = vand.u32 %v1201, 2147483648
    %v1244 = vor.u32 1.1754944e-38, %v1243
    %v1245 = vsel %vm1242, %v1244, %v1240
    %v1246 = vmul.f32 1.0, %v1245
    %v1247 = vtanh.pop %v1189
    %v1248 = vmul.f32 %v1231, %v1121
    %v1249 = vmul.f32 %v1216, %v1247
    %v1250 = vadd.f32 %v1248, %v1249
    %v1251 = vtanh.pop %v1250
    %v1252 = vmul.f32 %v1246, %v1251
    %s1253 = sld [smem:[#allocation3 + $0x7]]
    %v1254 = vstv %s1253
    %v1255 = vmul.f32 %v1254, %v1252
    %v1256 = vadd.f32 %v1127, %v1255
    %s1257 = scalar_lea.vmem %s0, 256
    %v1258 = vld [vmem:[%s1257] sm:$0xff]
    %v1259 = vld [vmem:[%s1257 + $0x8] sm:$0xff]
    %v1260 = vld [vmem:[%s1257 + $0x10] sm:$0xff]
    %v1261 = vld [vmem:[%s1257 + $0x18] sm:$0xff]
    %v1262 = vpack.c.bf16 %v1252, %v1252
    %1263 = vmatpush.bf16.msra.mxu0 %v195
    %1264 = vmatpush.bf16.msra.mxu0 %v191
    %1265 = vmatpush.bf16.msra.mxu0 %v187
    %1266 = vmatpush.bf16.msra.mxu0 %v183
    %1267 = vmatpush.bf16.msra.mxu0 %v179
    %1268 = vmatpush.bf16.msra.mxu0 %v175
    %1269 = vmatpush.bf16.msra.mxu0 %v171
    %1270 = vmatpush.bf16.msra.mxu0 %v167
    %1271 = vmatmul.bf16.gmra.mxu0 %v1262
    %v1272 = vpop.f32.mrf.mxu0
    %v1273 = vadd.f32 0.0, %v1272
    %v1274 = vpop.f32.mrf.mxu0
    %1275 = vdwg.mxu0
    %1276 = vmatpush.bf16.msra.mxu0 %v196
    %1277 = vmatpush.bf16.msra.mxu0 %v192
    %1278 = vmatpush.bf16.msra.mxu0 %v188
    %1279 = vmatpush.bf16.msra.mxu0 %v184
    %1280 = vmatpush.bf16.msra.mxu0 %v180
    %1281 = vmatpush.bf16.msra.mxu0 %v176
    %1282 = vmatpush.bf16.msra.mxu0 %v172
    %1283 = vmatpush.bf16.msra.mxu0 %v168
    %1284 = vmatmul.bf16.gmra.mxu0 %v1262
    %v1285 = vpop.f32.mrf.mxu0
    %v1286 = vadd.f32 0.0, %v1285
    %v1287 = vpop.f32.mrf.mxu0
    %1288 = vdwg.mxu0
    %1289 = vmatpush.bf16.msra.mxu0 %v197
    %1290 = vmatpush.bf16.msra.mxu0 %v193
    %1291 = vmatpush.bf16.msra.mxu0 %v189
    %1292 = vmatpush.bf16.msra.mxu0 %v185
    %1293 = vmatpush.bf16.msra.mxu0 %v181
    %1294 = vmatpush.bf16.msra.mxu0 %v177
    %1295 = vmatpush.bf16.msra.mxu0 %v173
    %1296 = vmatpush.bf16.msra.mxu0 %v169
    %1297 = vmatmul.bf16.gmra.mxu0 %v1262
    %v1298 = vpop.f32.mrf.mxu0
    %v1299 = vadd.f32 0.0, %v1298
    %v1300 = vpop.f32.mrf.mxu0
    %1301 = vdwg.mxu0
    %1302 = vmatpush.bf16.msra.mxu0 %v198
    %1303 = vmatpush.bf16.msra.mxu0 %v194
    %1304 = vmatpush.bf16.msra.mxu0 %v190
    %1305 = vmatpush.bf16.msra.mxu0 %v186
    %1306 = vmatpush.bf16.msra.mxu0 %v182
    %1307 = vmatpush.bf16.msra.mxu0 %v178
    %1308 = vmatpush.bf16.msra.mxu0 %v174
    %1309 = vmatpush.bf16.msra.mxu0 %v170
    %1310 = vmatmul.bf16.gmra.mxu0 %v1262
    %v1311 = vpop.f32.mrf.mxu0
    %v1312 = vadd.f32 0.0, %v1311
    %v1313 = vpop.f32.mrf.mxu0
    %1314 = vdwg.mxu0
    %v1315 = vadd.f32 %v1258, %v1273
    %v1316 = vadd.f32 %v1259, %v1286
    %v1317 = vadd.f32 %v1260, %v1299
    %v1318 = vadd.f32 %v1261, %v1312
    %v1319 = vxor.u32 %v1315, 2147483648
    %v1320 = vxor.u32 %v1316, 2147483648
    %v1321 = vxor.u32 %v1317, 2147483648
    %v1322 = vmul.f32 %v1319, 1.442695
    %v1323 = vpow.pop %v1322
    %v1324 = vmul.f32 %v1320, 1.442695
    %v1325 = vpow.pop %v1324
    %v1326 = vmul.f32 %v1321, 1.442695
    %v1327 = vpow.pop %v1326
    %v1328 = vadd.f32 %v1323, 1.0
    %v1329 = vadd.f32 %v1325, 1.0
    %v1330 = vadd.f32 %v1327, 1.0
    %v1331 = vrcp.pop %v1328
    %v1332 = vmul.f32 %v1328, %v1331
    %v1333 = vsub.f32 1.0, %v1332
    %v1334 = vmul.f32 %v1331, %v1333
    %v1335 = vadd.f32 %v1331, %v1334
    %vm1336 = vweird.f32 %v1328
    %vm1337 = vweird.f32 %v1331
    %vm1338 = vmor %vm1336, %vm1337
    %v1339 = vsel %vm1338, %v1331, %v1335
    %v1340 = vand.u32 2147483647, %v1328
    %vm1341 = vcmp.eq.f32.partialorder %v1340, 8.507059e+37
    %v1342 = vand.u32 %v1328, 2147483648
    %v1343 = vor.u32 1.1754944e-38, %v1342
    %v1344 = vsel %vm1341, %v1343, %v1339
    %v1345 = vmul.f32 1.0, %v1344
    %v1346 = vrcp.pop %v1329
    %v1347 = vmul.f32 %v1329, %v1346
    %v1348 = vsub.f32 1.0, %v1347
    %v1349 = vmul.f32 %v1346, %v1348
    %v1350 = vadd.f32 %v1346, %v1349
    %vm1351 = vweird.f32 %v1329
    %vm1352 = vweird.f32 %v1346
    %vm1353 = vmor %vm1351, %vm1352
    %v1354 = vsel %vm1353, %v1346, %v1350
    %v1355 = vand.u32 2147483647, %v1329
    %vm1356 = vcmp.eq.f32.partialorder %v1355, 8.507059e+37
    %v1357 = vand.u32 %v1329, 2147483648
    %v1358 = vor.u32 1.1754944e-38, %v1357
    %v1359 = vsel %vm1356, %v1358, %v1354
    %v1360 = vmul.f32 1.0, %v1359
    %v1361 = vrcp.pop %v1330
    %v1362 = vmul.f32 %v1330, %v1361
    %v1363 = vsub.f32 1.0, %v1362
    %v1364 = vmul.f32 %v1361, %v1363
    %v1365 = vadd.f32 %v1361, %v1364
    %vm1366 = vweird.f32 %v1330
    %vm1367 = vweird.f32 %v1361
    %vm1368 = vmor %vm1366, %vm1367
    %v1369 = vsel %vm1368, %v1361, %v1365
    %v1370 = vand.u32 2147483647, %v1330
    %vm1371 = vcmp.eq.f32.partialorder %v1370, 8.507059e+37
    %v1372 = vand.u32 %v1330, 2147483648
    %v1373 = vor.u32 1.1754944e-38, %v1372
    %v1374 = vsel %vm1371, %v1373, %v1369
    %v1375 = vmul.f32 1.0, %v1374
    %v1376 = vtanh.pop %v1318
    %v1377 = vmul.f32 %v1360, %v1250
    %v1378 = vmul.f32 %v1345, %v1376
    %v1379 = vadd.f32 %v1377, %v1378
    %v1380 = vtanh.pop %v1379
    %v1381 = vmul.f32 %v1375, %v1380
    %s1382 = sld [smem:[#allocation3 + $0x8]]
    %v1383 = vstv %s1382
    %v1384 = vmul.f32 %v1383, %v1381
    %v1385 = vadd.f32 %v1256, %v1384
    %s1386 = scalar_lea.vmem %s0, 288
    %v1387 = vld [vmem:[%s1386] sm:$0xff]
    %v1388 = vld [vmem:[%s1386 + $0x8] sm:$0xff]
    %v1389 = vld [vmem:[%s1386 + $0x10] sm:$0xff]
    %v1390 = vld [vmem:[%s1386 + $0x18] sm:$0xff]
    %v1391 = vpack.c.bf16 %v1381, %v1381
    %1392 = vmatpush.bf16.msra.mxu0 %v195
    %1393 = vmatpush.bf16.msra.mxu0 %v191
    %1394 = vmatpush.bf16.msra.mxu0 %v187
    %1395 = vmatpush.bf16.msra.mxu0 %v183
    %1396 = vmatpush.bf16.msra.mxu0 %v179
    %1397 = vmatpush.bf16.msra.mxu0 %v175
    %1398 = vmatpush.bf16.msra.mxu0 %v171
    %1399 = vmatpush.bf16.msra.mxu0 %v167
    %1400 = vmatmul.bf16.gmra.mxu0 %v1391
    %v1401 = vpop.f32.mrf.mxu0
    %v1402 = vadd.f32 0.0, %v1401
    %v1403 = vpop.f32.mrf.mxu0
    %1404 = vdwg.mxu0
    %1405 = vmatpush.bf16.msra.mxu0 %v196
    %1406 = vmatpush.bf16.msra.mxu0 %v192
    %1407 = vmatpush.bf16.msra.mxu0 %v188
    %1408 = vmatpush.bf16.msra.mxu0 %v184
    %1409 = vmatpush.bf16.msra.mxu0 %v180
    %1410 = vmatpush.bf16.msra.mxu0 %v176
    %1411 = vmatpush.bf16.msra.mxu0 %v172
    %1412 = vmatpush.bf16.msra.mxu0 %v168
    %1413 = vmatmul.bf16.gmra.mxu0 %v1391
    %v1414 = vpop.f32.mrf.mxu0
    %v1415 = vadd.f32 0.0, %v1414
    %v1416 = vpop.f32.mrf.mxu0
    %1417 = vdwg.mxu0
    %1418 = vmatpush.bf16.msra.mxu0 %v197
    %1419 = vmatpush.bf16.msra.mxu0 %v193
    %1420 = vmatpush.bf16.msra.mxu0 %v189
    %1421 = vmatpush.bf16.msra.mxu0 %v185
    %1422 = vmatpush.bf16.msra.mxu0 %v181
    %1423 = vmatpush.bf16.msra.mxu0 %v177
    %1424 = vmatpush.bf16.msra.mxu0 %v173
    %1425 = vmatpush.bf16.msra.mxu0 %v169
    %1426 = vmatmul.bf16.gmra.mxu0 %v1391
    %v1427 = vpop.f32.mrf.mxu0
    %v1428 = vadd.f32 0.0, %v1427
    %v1429 = vpop.f32.mrf.mxu0
    %1430 = vdwg.mxu0
    %1431 = vmatpush.bf16.msra.mxu0 %v198
    %1432 = vmatpush.bf16.msra.mxu0 %v194
    %1433 = vmatpush.bf16.msra.mxu0 %v190
    %1434 = vmatpush.bf16.msra.mxu0 %v186
    %1435 = vmatpush.bf16.msra.mxu0 %v182
    %1436 = vmatpush.bf16.msra.mxu0 %v178
    %1437 = vmatpush.bf16.msra.mxu0 %v174
    %1438 = vmatpush.bf16.msra.mxu0 %v170
    %1439 = vmatmul.bf16.gmra.mxu0 %v1391
    %v1440 = vpop.f32.mrf.mxu0
    %v1441 = vadd.f32 0.0, %v1440
    %v1442 = vpop.f32.mrf.mxu0
    %1443 = vdwg.mxu0
    %v1444 = vadd.f32 %v1387, %v1402
    %v1445 = vadd.f32 %v1388, %v1415
    %v1446 = vadd.f32 %v1389, %v1428
    %v1447 = vadd.f32 %v1390, %v1441
    %v1448 = vxor.u32 %v1444, 2147483648
    %v1449 = vxor.u32 %v1445, 2147483648
    %v1450 = vxor.u32 %v1446, 2147483648
    %v1451 = vmul.f32 %v1448, 1.442695
    %v1452 = vpow.pop %v1451
    %v1453 = vmul.f32 %v1449, 1.442695
    %v1454 = vpow.pop %v1453
    %v1455 = vmul.f32 %v1450, 1.442695
    %v1456 = vpow.pop %v1455
    %v1457 = vadd.f32 %v1452, 1.0
    %v1458 = vadd.f32 %v1454, 1.0
    %v1459 = vadd.f32 %v1456, 1.0
    %v1460 = vrcp.pop %v1457
    %v1461 = vmul.f32 %v1457, %v1460
    %v1462 = vsub.f32 1.0, %v1461
    %v1463 = vmul.f32 %v1460, %v1462
    %v1464 = vadd.f32 %v1460, %v1463
    %vm1465 = vweird.f32 %v1457
    %vm1466 = vweird.f32 %v1460
    %vm1467 = vmor %vm1465, %vm1466
    %v1468 = vsel %vm1467, %v1460, %v1464
    %v1469 = vand.u32 2147483647, %v1457
    %vm1470 = vcmp.eq.f32.partialorder %v1469, 8.507059e+37
    %v1471 = vand.u32 %v1457, 2147483648
    %v1472 = vor.u32 1.1754944e-38, %v1471
    %v1473 = vsel %vm1470, %v1472, %v1468
    %v1474 = vmul.f32 1.0, %v1473
    %v1475 = vrcp.pop %v1458
    %v1476 = vmul.f32 %v1458, %v1475
    %v1477 = vsub.f32 1.0, %v1476
    %v1478 = vmul.f32 %v1475, %v1477
    %v1479 = vadd.f32 %v1475, %v1478
    %vm1480 = vweird.f32 %v1458
    %vm1481 = vweird.f32 %v1475
    %vm1482 = vmor %vm1480, %vm1481
    %v1483 = vsel %vm1482, %v1475, %v1479
    %v1484 = vand.u32 2147483647, %v1458
    %vm1485 = vcmp.eq.f32.partialorder %v1484, 8.507059e+37
    %v1486 = vand.u32 %v1458, 2147483648
    %v1487 = vor.u32 1.1754944e-38, %v1486
    %v1488 = vsel %vm1485, %v1487, %v1483
    %v1489 = vmul.f32 1.0, %v1488
    %v1490 = vrcp.pop %v1459
    %v1491 = vmul.f32 %v1459, %v1490
    %v1492 = vsub.f32 1.0, %v1491
    %v1493 = vmul.f32 %v1490, %v1492
    %v1494 = vadd.f32 %v1490, %v1493
    %vm1495 = vweird.f32 %v1459
    %vm1496 = vweird.f32 %v1490
    %vm1497 = vmor %vm1495, %vm1496
    %v1498 = vsel %vm1497, %v1490, %v1494
    %v1499 = vand.u32 2147483647, %v1459
    %vm1500 = vcmp.eq.f32.partialorder %v1499, 8.507059e+37
    %v1501 = vand.u32 %v1459, 2147483648
    %v1502 = vor.u32 1.1754944e-38, %v1501
    %v1503 = vsel %vm1500, %v1502, %v1498
    %v1504 = vmul.f32 1.0, %v1503
    %v1505 = vtanh.pop %v1447
    %v1506 = vmul.f32 %v1489, %v1379
    %v1507 = vmul.f32 %v1474, %v1505
    %v1508 = vadd.f32 %v1506, %v1507
    %v1509 = vtanh.pop %v1508
    %v1510 = vmul.f32 %v1504, %v1509
    %s1511 = sld [smem:[#allocation3 + $0x9]]
    %v1512 = vstv %s1511
    %v1513 = vmul.f32 %v1512, %v1510
    %v1514 = vadd.f32 %v1385, %v1513
    %s1515 = scalar_lea.vmem %s0, 320
    %v1516 = vld [vmem:[%s1515] sm:$0xff]
    %v1517 = vld [vmem:[%s1515 + $0x8] sm:$0xff]
    %v1518 = vld [vmem:[%s1515 + $0x10] sm:$0xff]
    %v1519 = vld [vmem:[%s1515 + $0x18] sm:$0xff]
    %v1520 = vpack.c.bf16 %v1510, %v1510
    %1521 = vmatpush.bf16.msra.mxu0 %v195
    %1522 = vmatpush.bf16.msra.mxu0 %v191
    %1523 = vmatpush.bf16.msra.mxu0 %v187
    %1524 = vmatpush.bf16.msra.mxu0 %v183
    %1525 = vmatpush.bf16.msra.mxu0 %v179
    %1526 = vmatpush.bf16.msra.mxu0 %v175
    %1527 = vmatpush.bf16.msra.mxu0 %v171
    %1528 = vmatpush.bf16.msra.mxu0 %v167
    %1529 = vmatmul.bf16.gmra.mxu0 %v1520
    %v1530 = vpop.f32.mrf.mxu0
    %v1531 = vadd.f32 0.0, %v1530
    %v1532 = vpop.f32.mrf.mxu0
    %1533 = vdwg.mxu0
    %1534 = vmatpush.bf16.msra.mxu0 %v196
    %1535 = vmatpush.bf16.msra.mxu0 %v192
    %1536 = vmatpush.bf16.msra.mxu0 %v188
    %1537 = vmatpush.bf16.msra.mxu0 %v184
    %1538 = vmatpush.bf16.msra.mxu0 %v180
    %1539 = vmatpush.bf16.msra.mxu0 %v176
    %1540 = vmatpush.bf16.msra.mxu0 %v172
    %1541 = vmatpush.bf16.msra.mxu0 %v168
    %1542 = vmatmul.bf16.gmra.mxu0 %v1520
    %v1543 = vpop.f32.mrf.mxu0
    %v1544 = vadd.f32 0.0, %v1543
    %v1545 = vpop.f32.mrf.mxu0
    %1546 = vdwg.mxu0
    %1547 = vmatpush.bf16.msra.mxu0 %v197
    %1548 = vmatpush.bf16.msra.mxu0 %v193
    %1549 = vmatpush.bf16.msra.mxu0 %v189
    %1550 = vmatpush.bf16.msra.mxu0 %v185
    %1551 = vmatpush.bf16.msra.mxu0 %v181
    %1552 = vmatpush.bf16.msra.mxu0 %v177
    %1553 = vmatpush.bf16.msra.mxu0 %v173
    %1554 = vmatpush.bf16.msra.mxu0 %v169
    %1555 = vmatmul.bf16.gmra.mxu0 %v1520
    %v1556 = vpop.f32.mrf.mxu0
    %v1557 = vadd.f32 0.0, %v1556
    %v1558 = vpop.f32.mrf.mxu0
    %1559 = vdwg.mxu0
    %1560 = vmatpush.bf16.msra.mxu0 %v198
    %1561 = vmatpush.bf16.msra.mxu0 %v194
    %1562 = vmatpush.bf16.msra.mxu0 %v190
    %1563 = vmatpush.bf16.msra.mxu0 %v186
    %1564 = vmatpush.bf16.msra.mxu0 %v182
    %1565 = vmatpush.bf16.msra.mxu0 %v178
    %1566 = vmatpush.bf16.msra.mxu0 %v174
    %1567 = vmatpush.bf16.msra.mxu0 %v170
    %1568 = vmatmul.bf16.gmra.mxu0 %v1520
    %v1569 = vpop.f32.mrf.mxu0
    %v1570 = vadd.f32 0.0, %v1569
    %v1571 = vpop.f32.mrf.mxu0
    %1572 = vdwg.mxu0
    %v1573 = vadd.f32 %v1516, %v1531
    %v1574 = vadd.f32 %v1517, %v1544
    %v1575 = vadd.f32 %v1518, %v1557
    %v1576 = vadd.f32 %v1519, %v1570
    %v1577 = vxor.u32 %v1573, 2147483648
    %v1578 = vxor.u32 %v1574, 2147483648
    %v1579 = vxor.u32 %v1575, 2147483648
    %v1580 = vmul.f32 %v1577, 1.442695
    %v1581 = vpow.pop %v1580
    %v1582 = vmul.f32 %v1578, 1.442695
    %v1583 = vpow.pop %v1582
    %v1584 = vmul.f32 %v1579, 1.442695
    %v1585 = vpow.pop %v1584
    %v1586 = vadd.f32 %v1581, 1.0
    %v1587 = vadd.f32 %v1583, 1.0
    %v1588 = vadd.f32 %v1585, 1.0
    %v1589 = vrcp.pop %v1586
    %v1590 = vmul.f32 %v1586, %v1589
    %v1591 = vsub.f32 1.0, %v1590
    %v1592 = vmul.f32 %v1589, %v1591
    %v1593 = vadd.f32 %v1589, %v1592
    %vm1594 = vweird.f32 %v1586
    %vm1595 = vweird.f32 %v1589
    %vm1596 = vmor %vm1594, %vm1595
    %v1597 = vsel %vm1596, %v1589, %v1593
    %v1598 = vand.u32 2147483647, %v1586
    %vm1599 = vcmp.eq.f32.partialorder %v1598, 8.507059e+37
    %v1600 = vand.u32 %v1586, 2147483648
    %v1601 = vor.u32 1.1754944e-38, %v1600
    %v1602 = vsel %vm1599, %v1601, %v1597
    %v1603 = vmul.f32 1.0, %v1602
    %v1604 = vrcp.pop %v1587
    %v1605 = vmul.f32 %v1587, %v1604
    %v1606 = vsub.f32 1.0, %v1605
    %v1607 = vmul.f32 %v1604, %v1606
    %v1608 = vadd.f32 %v1604, %v1607
    %vm1609 = vweird.f32 %v1587
    %vm1610 = vweird.f32 %v1604
    %vm1611 = vmor %vm1609, %vm1610
    %v1612 = vsel %vm1611, %v1604, %v1608
    %v1613 = vand.u32 2147483647, %v1587
    %vm1614 = vcmp.eq.f32.partialorder %v1613, 8.507059e+37
    %v1615 = vand.u32 %v1587, 2147483648
    %v1616 = vor.u32 1.1754944e-38, %v1615
    %v1617 = vsel %vm1614, %v1616, %v1612
    %v1618 = vmul.f32 1.0, %v1617
    %v1619 = vrcp.pop %v1588
    %v1620 = vmul.f32 %v1588, %v1619
    %v1621 = vsub.f32 1.0, %v1620
    %v1622 = vmul.f32 %v1619, %v1621
    %v1623 = vadd.f32 %v1619, %v1622
    %vm1624 = vweird.f32 %v1588
    %vm1625 = vweird.f32 %v1619
    %vm1626 = vmor %vm1624, %vm1625
    %v1627 = vsel %vm1626, %v1619, %v1623
    %v1628 = vand.u32 2147483647, %v1588
    %vm1629 = vcmp.eq.f32.partialorder %v1628, 8.507059e+37
    %v1630 = vand.u32 %v1588, 2147483648
    %v1631 = vor.u32 1.1754944e-38, %v1630
    %v1632 = vsel %vm1629, %v1631, %v1627
    %v1633 = vmul.f32 1.0, %v1632
    %v1634 = vtanh.pop %v1576
    %v1635 = vmul.f32 %v1618, %v1508
    %v1636 = vmul.f32 %v1603, %v1634
    %v1637 = vadd.f32 %v1635, %v1636
    %v1638 = vtanh.pop %v1637
    %v1639 = vmul.f32 %v1633, %v1638
    %s1640 = sld [smem:[#allocation3 + $0xa]]
    %v1641 = vstv %s1640
    %v1642 = vmul.f32 %v1641, %v1639
    %v1643 = vadd.f32 %v1514, %v1642
    %s1644 = scalar_lea.vmem %s0, 352
    %v1645 = vld [vmem:[%s1644] sm:$0xff]
    %v1646 = vld [vmem:[%s1644 + $0x8] sm:$0xff]
    %v1647 = vld [vmem:[%s1644 + $0x10] sm:$0xff]
    %v1648 = vld [vmem:[%s1644 + $0x18] sm:$0xff]
    %v1649 = vpack.c.bf16 %v1639, %v1639
    %1650 = vmatpush.bf16.msra.mxu0 %v195
    %1651 = vmatpush.bf16.msra.mxu0 %v191
    %1652 = vmatpush.bf16.msra.mxu0 %v187
    %1653 = vmatpush.bf16.msra.mxu0 %v183
    %1654 = vmatpush.bf16.msra.mxu0 %v179
    %1655 = vmatpush.bf16.msra.mxu0 %v175
    %1656 = vmatpush.bf16.msra.mxu0 %v171
    %1657 = vmatpush.bf16.msra.mxu0 %v167
    %1658 = vmatmul.bf16.gmra.mxu0 %v1649
    %v1659 = vpop.f32.mrf.mxu0
    %v1660 = vadd.f32 0.0, %v1659
    %v1661 = vpop.f32.mrf.mxu0
    %1662 = vdwg.mxu0
    %1663 = vmatpush.bf16.msra.mxu0 %v196
    %1664 = vmatpush.bf16.msra.mxu0 %v192
    %1665 = vmatpush.bf16.msra.mxu0 %v188
    %1666 = vmatpush.bf16.msra.mxu0 %v184
    %1667 = vmatpush.bf16.msra.mxu0 %v180
    %1668 = vmatpush.bf16.msra.mxu0 %v176
    %1669 = vmatpush.bf16.msra.mxu0 %v172
    %1670 = vmatpush.bf16.msra.mxu0 %v168
    %1671 = vmatmul.bf16.gmra.mxu0 %v1649
    %v1672 = vpop.f32.mrf.mxu0
    %v1673 = vadd.f32 0.0, %v1672
    %v1674 = vpop.f32.mrf.mxu0
    %1675 = vdwg.mxu0
    %1676 = vmatpush.bf16.msra.mxu0 %v197
    %1677 = vmatpush.bf16.msra.mxu0 %v193
    %1678 = vmatpush.bf16.msra.mxu0 %v189
    %1679 = vmatpush.bf16.msra.mxu0 %v185
    %1680 = vmatpush.bf16.msra.mxu0 %v181
    %1681 = vmatpush.bf16.msra.mxu0 %v177
    %1682 = vmatpush.bf16.msra.mxu0 %v173
    %1683 = vmatpush.bf16.msra.mxu0 %v169
    %1684 = vmatmul.bf16.gmra.mxu0 %v1649
    %v1685 = vpop.f32.mrf.mxu0
    %v1686 = vadd.f32 0.0, %v1685
    %v1687 = vpop.f32.mrf.mxu0
    %1688 = vdwg.mxu0
    %1689 = vmatpush.bf16.msra.mxu0 %v198
    %1690 = vmatpush.bf16.msra.mxu0 %v194
    %1691 = vmatpush.bf16.msra.mxu0 %v190
    %1692 = vmatpush.bf16.msra.mxu0 %v186
    %1693 = vmatpush.bf16.msra.mxu0 %v182
    %1694 = vmatpush.bf16.msra.mxu0 %v178
    %1695 = vmatpush.bf16.msra.mxu0 %v174
    %1696 = vmatpush.bf16.msra.mxu0 %v170
    %1697 = vmatmul.bf16.gmra.mxu0 %v1649
    %v1698 = vpop.f32.mrf.mxu0
    %v1699 = vadd.f32 0.0, %v1698
    %v1700 = vpop.f32.mrf.mxu0
    %1701 = vdwg.mxu0
    %v1702 = vadd.f32 %v1645, %v1660
    %v1703 = vadd.f32 %v1646, %v1673
    %v1704 = vadd.f32 %v1647, %v1686
    %v1705 = vadd.f32 %v1648, %v1699
    %v1706 = vxor.u32 %v1702, 2147483648
    %v1707 = vxor.u32 %v1703, 2147483648
    %v1708 = vxor.u32 %v1704, 2147483648
    %v1709 = vmul.f32 %v1706, 1.442695
    %v1710 = vpow.pop %v1709
    %v1711 = vmul.f32 %v1707, 1.442695
    %v1712 = vpow.pop %v1711
    %v1713 = vmul.f32 %v1708, 1.442695
    %v1714 = vpow.pop %v1713
    %v1715 = vadd.f32 %v1710, 1.0
    %v1716 = vadd.f32 %v1712, 1.0
    %v1717 = vadd.f32 %v1714, 1.0
    %v1718 = vrcp.pop %v1715
    %v1719 = vmul.f32 %v1715, %v1718
    %v1720 = vsub.f32 1.0, %v1719
    %v1721 = vmul.f32 %v1718, %v1720
    %v1722 = vadd.f32 %v1718, %v1721
    %vm1723 = vweird.f32 %v1715
    %vm1724 = vweird.f32 %v1718
    %vm1725 = vmor %vm1723, %vm1724
    %v1726 = vsel %vm1725, %v1718, %v1722
    %v1727 = vand.u32 2147483647, %v1715
    %vm1728 = vcmp.eq.f32.partialorder %v1727, 8.507059e+37
    %v1729 = vand.u32 %v1715, 2147483648
    %v1730 = vor.u32 1.1754944e-38, %v1729
    %v1731 = vsel %vm1728, %v1730, %v1726
    %v1732 = vmul.f32 1.0, %v1731
    %v1733 = vrcp.pop %v1716
    %v1734 = vmul.f32 %v1716, %v1733
    %v1735 = vsub.f32 1.0, %v1734
    %v1736 = vmul.f32 %v1733, %v1735
    %v1737 = vadd.f32 %v1733, %v1736
    %vm1738 = vweird.f32 %v1716
    %vm1739 = vweird.f32 %v1733
    %vm1740 = vmor %vm1738, %vm1739
    %v1741 = vsel %vm1740, %v1733, %v1737
    %v1742 = vand.u32 2147483647, %v1716
    %vm1743 = vcmp.eq.f32.partialorder %v1742, 8.507059e+37
    %v1744 = vand.u32 %v1716, 2147483648
    %v1745 = vor.u32 1.1754944e-38, %v1744
    %v1746 = vsel %vm1743, %v1745, %v1741
    %v1747 = vmul.f32 1.0, %v1746
    %v1748 = vrcp.pop %v1717
    %v1749 = vmul.f32 %v1717, %v1748
    %v1750 = vsub.f32 1.0, %v1749
    %v1751 = vmul.f32 %v1748, %v1750
    %v1752 = vadd.f32 %v1748, %v1751
    %vm1753 = vweird.f32 %v1717
    %vm1754 = vweird.f32 %v1748
    %vm1755 = vmor %vm1753, %vm1754
    %v1756 = vsel %vm1755, %v1748, %v1752
    %v1757 = vand.u32 2147483647, %v1717
    %vm1758 = vcmp.eq.f32.partialorder %v1757, 8.507059e+37
    %v1759 = vand.u32 %v1717, 2147483648
    %v1760 = vor.u32 1.1754944e-38, %v1759
    %v1761 = vsel %vm1758, %v1760, %v1756
    %v1762 = vmul.f32 1.0, %v1761
    %v1763 = vtanh.pop %v1705
    %v1764 = vmul.f32 %v1747, %v1637
    %v1765 = vmul.f32 %v1732, %v1763
    %v1766 = vadd.f32 %v1764, %v1765
    %v1767 = vtanh.pop %v1766
    %v1768 = vmul.f32 %v1762, %v1767
    %s1769 = sld [smem:[#allocation3 + $0xb]]
    %v1770 = vstv %s1769
    %v1771 = vmul.f32 %v1770, %v1768
    %v1772 = vadd.f32 %v1643, %v1771
    %s1773 = scalar_lea.vmem %s0, 384
    %v1774 = vld [vmem:[%s1773] sm:$0xff]
    %v1775 = vld [vmem:[%s1773 + $0x8] sm:$0xff]
    %v1776 = vld [vmem:[%s1773 + $0x10] sm:$0xff]
    %v1777 = vld [vmem:[%s1773 + $0x18] sm:$0xff]
    %v1778 = vpack.c.bf16 %v1768, %v1768
    %1779 = vmatpush.bf16.msra.mxu0 %v195
    %1780 = vmatpush.bf16.msra.mxu0 %v191
    %1781 = vmatpush.bf16.msra.mxu0 %v187
    %1782 = vmatpush.bf16.msra.mxu0 %v183
    %1783 = vmatpush.bf16.msra.mxu0 %v179
    %1784 = vmatpush.bf16.msra.mxu0 %v175
    %1785 = vmatpush.bf16.msra.mxu0 %v171
    %1786 = vmatpush.bf16.msra.mxu0 %v167
    %1787 = vmatmul.bf16.gmra.mxu0 %v1778
    %v1788 = vpop.f32.mrf.mxu0
    %v1789 = vadd.f32 0.0, %v1788
    %v1790 = vpop.f32.mrf.mxu0
    %1791 = vdwg.mxu0
    %1792 = vmatpush.bf16.msra.mxu0 %v196
    %1793 = vmatpush.bf16.msra.mxu0 %v192
    %1794 = vmatpush.bf16.msra.mxu0 %v188
    %1795 = vmatpush.bf16.msra.mxu0 %v184
    %1796 = vmatpush.bf16.msra.mxu0 %v180
    %1797 = vmatpush.bf16.msra.mxu0 %v176
    %1798 = vmatpush.bf16.msra.mxu0 %v172
    %1799 = vmatpush.bf16.msra.mxu0 %v168
    %1800 = vmatmul.bf16.gmra.mxu0 %v1778
    %v1801 = vpop.f32.mrf.mxu0
    %v1802 = vadd.f32 0.0, %v1801
    %v1803 = vpop.f32.mrf.mxu0
    %1804 = vdwg.mxu0
    %1805 = vmatpush.bf16.msra.mxu0 %v197
    %1806 = vmatpush.bf16.msra.mxu0 %v193
    %1807 = vmatpush.bf16.msra.mxu0 %v189
    %1808 = vmatpush.bf16.msra.mxu0 %v185
    %1809 = vmatpush.bf16.msra.mxu0 %v181
    %1810 = vmatpush.bf16.msra.mxu0 %v177
    %1811 = vmatpush.bf16.msra.mxu0 %v173
    %1812 = vmatpush.bf16.msra.mxu0 %v169
    %1813 = vmatmul.bf16.gmra.mxu0 %v1778
    %v1814 = vpop.f32.mrf.mxu0
    %v1815 = vadd.f32 0.0, %v1814
    %v1816 = vpop.f32.mrf.mxu0
    %1817 = vdwg.mxu0
    %1818 = vmatpush.bf16.msra.mxu0 %v198
    %1819 = vmatpush.bf16.msra.mxu0 %v194
    %1820 = vmatpush.bf16.msra.mxu0 %v190
    %1821 = vmatpush.bf16.msra.mxu0 %v186
    %1822 = vmatpush.bf16.msra.mxu0 %v182
    %1823 = vmatpush.bf16.msra.mxu0 %v178
    %1824 = vmatpush.bf16.msra.mxu0 %v174
    %1825 = vmatpush.bf16.msra.mxu0 %v170
    %1826 = vmatmul.bf16.gmra.mxu0 %v1778
    %v1827 = vpop.f32.mrf.mxu0
    %v1828 = vadd.f32 0.0, %v1827
    %v1829 = vpop.f32.mrf.mxu0
    %1830 = vdwg.mxu0
    %v1831 = vadd.f32 %v1774, %v1789
    %v1832 = vadd.f32 %v1775, %v1802
    %v1833 = vadd.f32 %v1776, %v1815
    %v1834 = vadd.f32 %v1777, %v1828
    %v1835 = vxor.u32 %v1831, 2147483648
    %v1836 = vxor.u32 %v1832, 2147483648
    %v1837 = vxor.u32 %v1833, 2147483648
    %v1838 = vmul.f32 %v1835, 1.442695
    %v1839 = vpow.pop %v1838
    %v1840 = vmul.f32 %v1836, 1.442695
    %v1841 = vpow.pop %v1840
    %v1842 = vmul.f32 %v1837, 1.442695
    %v1843 = vpow.pop %v1842
    %v1844 = vadd.f32 %v1839, 1.0
    %v1845 = vadd.f32 %v1841, 1.0
    %v1846 = vadd.f32 %v1843, 1.0
    %v1847 = vrcp.pop %v1844
    %v1848 = vmul.f32 %v1844, %v1847
    %v1849 = vsub.f32 1.0, %v1848
    %v1850 = vmul.f32 %v1847, %v1849
    %v1851 = vadd.f32 %v1847, %v1850
    %vm1852 = vweird.f32 %v1844
    %vm1853 = vweird.f32 %v1847
    %vm1854 = vmor %vm1852, %vm1853
    %v1855 = vsel %vm1854, %v1847, %v1851
    %v1856 = vand.u32 2147483647, %v1844
    %vm1857 = vcmp.eq.f32.partialorder %v1856, 8.507059e+37
    %v1858 = vand.u32 %v1844, 2147483648
    %v1859 = vor.u32 1.1754944e-38, %v1858
    %v1860 = vsel %vm1857, %v1859, %v1855
    %v1861 = vmul.f32 1.0, %v1860
    %v1862 = vrcp.pop %v1845
    %v1863 = vmul.f32 %v1845, %v1862
    %v1864 = vsub.f32 1.0, %v1863
    %v1865 = vmul.f32 %v1862, %v1864
    %v1866 = vadd.f32 %v1862, %v1865
    %vm1867 = vweird.f32 %v1845
    %vm1868 = vweird.f32 %v1862
    %vm1869 = vmor %vm1867, %vm1868
    %v1870 = vsel %vm1869, %v1862, %v1866
    %v1871 = vand.u32 2147483647, %v1845
    %vm1872 = vcmp.eq.f32.partialorder %v1871, 8.507059e+37
    %v1873 = vand.u32 %v1845, 2147483648
    %v1874 = vor.u32 1.1754944e-38, %v1873
    %v1875 = vsel %vm1872, %v1874, %v1870
    %v1876 = vmul.f32 1.0, %v1875
    %v1877 = vrcp.pop %v1846
    %v1878 = vmul.f32 %v1846, %v1877
    %v1879 = vsub.f32 1.0, %v1878
    %v1880 = vmul.f32 %v1877, %v1879
    %v1881 = vadd.f32 %v1877, %v1880
    %vm1882 = vweird.f32 %v1846
    %vm1883 = vweird.f32 %v1877
    %vm1884 = vmor %vm1882, %vm1883
    %v1885 = vsel %vm1884, %v1877, %v1881
    %v1886 = vand.u32 2147483647, %v1846
    %vm1887 = vcmp.eq.f32.partialorder %v1886, 8.507059e+37
    %v1888 = vand.u32 %v1846, 2147483648
    %v1889 = vor.u32 1.1754944e-38, %v1888
    %v1890 = vsel %vm1887, %v1889, %v1885
    %v1891 = vmul.f32 1.0, %v1890
    %v1892 = vtanh.pop %v1834
    %v1893 = vmul.f32 %v1876, %v1766
    %v1894 = vmul.f32 %v1861, %v1892
    %v1895 = vadd.f32 %v1893, %v1894
    %v1896 = vtanh.pop %v1895
    %v1897 = vmul.f32 %v1891, %v1896
    %s1898 = sld [smem:[#allocation3 + $0xc]]
    %v1899 = vstv %s1898
    %v1900 = vmul.f32 %v1899, %v1897
    %v1901 = vadd.f32 %v1772, %v1900
    %s1902 = scalar_lea.vmem %s0, 416
    %v1903 = vld [vmem:[%s1902] sm:$0xff]
    %v1904 = vld [vmem:[%s1902 + $0x8] sm:$0xff]
    %v1905 = vld [vmem:[%s1902 + $0x10] sm:$0xff]
    %v1906 = vld [vmem:[%s1902 + $0x18] sm:$0xff]
    %v1907 = vpack.c.bf16 %v1897, %v1897
    %1908 = vmatpush.bf16.msra.mxu0 %v195
    %1909 = vmatpush.bf16.msra.mxu0 %v191
    %1910 = vmatpush.bf16.msra.mxu0 %v187
    %1911 = vmatpush.bf16.msra.mxu0 %v183
    %1912 = vmatpush.bf16.msra.mxu0 %v179
    %1913 = vmatpush.bf16.msra.mxu0 %v175
    %1914 = vmatpush.bf16.msra.mxu0 %v171
    %1915 = vmatpush.bf16.msra.mxu0 %v167
    %1916 = vmatmul.bf16.gmra.mxu0 %v1907
    %v1917 = vpop.f32.mrf.mxu0
    %v1918 = vadd.f32 0.0, %v1917
    %v1919 = vpop.f32.mrf.mxu0
    %1920 = vdwg.mxu0
    %1921 = vmatpush.bf16.msra.mxu0 %v196
    %1922 = vmatpush.bf16.msra.mxu0 %v192
    %1923 = vmatpush.bf16.msra.mxu0 %v188
    %1924 = vmatpush.bf16.msra.mxu0 %v184
    %1925 = vmatpush.bf16.msra.mxu0 %v180
    %1926 = vmatpush.bf16.msra.mxu0 %v176
    %1927 = vmatpush.bf16.msra.mxu0 %v172
    %1928 = vmatpush.bf16.msra.mxu0 %v168
    %1929 = vmatmul.bf16.gmra.mxu0 %v1907
    %v1930 = vpop.f32.mrf.mxu0
    %v1931 = vadd.f32 0.0, %v1930
    %v1932 = vpop.f32.mrf.mxu0
    %1933 = vdwg.mxu0
    %1934 = vmatpush.bf16.msra.mxu0 %v197
    %1935 = vmatpush.bf16.msra.mxu0 %v193
    %1936 = vmatpush.bf16.msra.mxu0 %v189
    %1937 = vmatpush.bf16.msra.mxu0 %v185
    %1938 = vmatpush.bf16.msra.mxu0 %v181
    %1939 = vmatpush.bf16.msra.mxu0 %v177
    %1940 = vmatpush.bf16.msra.mxu0 %v173
    %1941 = vmatpush.bf16.msra.mxu0 %v169
    %1942 = vmatmul.bf16.gmra.mxu0 %v1907
    %v1943 = vpop.f32.mrf.mxu0
    %v1944 = vadd.f32 0.0, %v1943
    %v1945 = vpop.f32.mrf.mxu0
    %1946 = vdwg.mxu0
    %1947 = vmatpush.bf16.msra.mxu0 %v198
    %1948 = vmatpush.bf16.msra.mxu0 %v194
    %1949 = vmatpush.bf16.msra.mxu0 %v190
    %1950 = vmatpush.bf16.msra.mxu0 %v186
    %1951 = vmatpush.bf16.msra.mxu0 %v182
    %1952 = vmatpush.bf16.msra.mxu0 %v178
    %1953 = vmatpush.bf16.msra.mxu0 %v174
    %1954 = vmatpush.bf16.msra.mxu0 %v170
    %1955 = vmatmul.bf16.gmra.mxu0 %v1907
    %v1956 = vpop.f32.mrf.mxu0
    %v1957 = vadd.f32 0.0, %v1956
    %v1958 = vpop.f32.mrf.mxu0
    %1959 = vdwg.mxu0
    %v1960 = vadd.f32 %v1903, %v1918
    %v1961 = vadd.f32 %v1904, %v1931
    %v1962 = vadd.f32 %v1905, %v1944
    %v1963 = vadd.f32 %v1906, %v1957
    %v1964 = vxor.u32 %v1960, 2147483648
    %v1965 = vxor.u32 %v1961, 2147483648
    %v1966 = vxor.u32 %v1962, 2147483648
    %v1967 = vmul.f32 %v1964, 1.442695
    %v1968 = vpow.pop %v1967
    %v1969 = vmul.f32 %v1965, 1.442695
    %v1970 = vpow.pop %v1969
    %v1971 = vmul.f32 %v1966, 1.442695
    %v1972 = vpow.pop %v1971
    %v1973 = vadd.f32 %v1968, 1.0
    %v1974 = vadd.f32 %v1970, 1.0
    %v1975 = vadd.f32 %v1972, 1.0
    %v1976 = vrcp.pop %v1973
    %v1977 = vmul.f32 %v1973, %v1976
    %v1978 = vsub.f32 1.0, %v1977
    %v1979 = vmul.f32 %v1976, %v1978
    %v1980 = vadd.f32 %v1976, %v1979
    %vm1981 = vweird.f32 %v1973
    %vm1982 = vweird.f32 %v1976
    %vm1983 = vmor %vm1981, %vm1982
    %v1984 = vsel %vm1983, %v1976, %v1980
    %v1985 = vand.u32 2147483647, %v1973
    %vm1986 = vcmp.eq.f32.partialorder %v1985, 8.507059e+37
    %v1987 = vand.u32 %v1973, 2147483648
    %v1988 = vor.u32 1.1754944e-38, %v1987
    %v1989 = vsel %vm1986, %v1988, %v1984
    %v1990 = vmul.f32 1.0, %v1989
    %v1991 = vrcp.pop %v1974
    %v1992 = vmul.f32 %v1974, %v1991
    %v1993 = vsub.f32 1.0, %v1992
    %v1994 = vmul.f32 %v1991, %v1993
    %v1995 = vadd.f32 %v1991, %v1994
    %vm1996 = vweird.f32 %v1974
    %vm1997 = vweird.f32 %v1991
    %vm1998 = vmor %vm1996, %vm1997
    %v1999 = vsel %vm1998, %v1991, %v1995
    %v2000 = vand.u32 2147483647, %v1974
    %vm2001 = vcmp.eq.f32.partialorder %v2000, 8.507059e+37
    %v2002 = vand.u32 %v1974, 2147483648
    %v2003 = vor.u32 1.1754944e-38, %v2002
    %v2004 = vsel %vm2001, %v2003, %v1999
    %v2005 = vmul.f32 1.0, %v2004
    %v2006 = vrcp.pop %v1975
    %v2007 = vmul.f32 %v1975, %v2006
    %v2008 = vsub.f32 1.0, %v2007
    %v2009 = vmul.f32 %v2006, %v2008
    %v2010 = vadd.f32 %v2006, %v2009
    %vm2011 = vweird.f32 %v1975
    %vm2012 = vweird.f32 %v2006
    %vm2013 = vmor %vm2011, %vm2012
    %v2014 = vsel %vm2013, %v2006, %v2010
    %v2015 = vand.u32 2147483647, %v1975
    %vm2016 = vcmp.eq.f32.partialorder %v2015, 8.507059e+37
    %v2017 = vand.u32 %v1975, 2147483648
    %v2018 = vor.u32 1.1754944e-38, %v2017
    %v2019 = vsel %vm2016, %v2018, %v2014
    %v2020 = vmul.f32 1.0, %v2019
    %v2021 = vtanh.pop %v1963
    %v2022 = vmul.f32 %v2005, %v1895
    %v2023 = vmul.f32 %v1990, %v2021
    %v2024 = vadd.f32 %v2022, %v2023
    %v2025 = vtanh.pop %v2024
    %v2026 = vmul.f32 %v2020, %v2025
    %s2027 = sld [smem:[#allocation3 + $0xd]]
    %v2028 = vstv %s2027
    %v2029 = vmul.f32 %v2028, %v2026
    %v2030 = vadd.f32 %v1901, %v2029
    %s2031 = scalar_lea.vmem %s0, 448
    %v2032 = vld [vmem:[%s2031] sm:$0xff]
    %v2033 = vld [vmem:[%s2031 + $0x8] sm:$0xff]
    %v2034 = vld [vmem:[%s2031 + $0x10] sm:$0xff]
    %v2035 = vld [vmem:[%s2031 + $0x18] sm:$0xff]
    %v2036 = vpack.c.bf16 %v2026, %v2026
    %2037 = vmatpush.bf16.msra.mxu0 %v195
    %2038 = vmatpush.bf16.msra.mxu0 %v191
    %2039 = vmatpush.bf16.msra.mxu0 %v187
    %2040 = vmatpush.bf16.msra.mxu0 %v183
    %2041 = vmatpush.bf16.msra.mxu0 %v179
    %2042 = vmatpush.bf16.msra.mxu0 %v175
    %2043 = vmatpush.bf16.msra.mxu0 %v171
    %2044 = vmatpush.bf16.msra.mxu0 %v167
    %2045 = vmatmul.bf16.gmra.mxu0 %v2036
    %v2046 = vpop.f32.mrf.mxu0
    %v2047 = vadd.f32 0.0, %v2046
    %v2048 = vpop.f32.mrf.mxu0
    %2049 = vdwg.mxu0
    %2050 = vmatpush.bf16.msra.mxu0 %v196
    %2051 = vmatpush.bf16.msra.mxu0 %v192
    %2052 = vmatpush.bf16.msra.mxu0 %v188
    %2053 = vmatpush.bf16.msra.mxu0 %v184
    %2054 = vmatpush.bf16.msra.mxu0 %v180
    %2055 = vmatpush.bf16.msra.mxu0 %v176
    %2056 = vmatpush.bf16.msra.mxu0 %v172
    %2057 = vmatpush.bf16.msra.mxu0 %v168
    %2058 = vmatmul.bf16.gmra.mxu0 %v2036
    %v2059 = vpop.f32.mrf.mxu0
    %v2060 = vadd.f32 0.0, %v2059
    %v2061 = vpop.f32.mrf.mxu0
    %2062 = vdwg.mxu0
    %2063 = vmatpush.bf16.msra.mxu0 %v197
    %2064 = vmatpush.bf16.msra.mxu0 %v193
    %2065 = vmatpush.bf16.msra.mxu0 %v189
    %2066 = vmatpush.bf16.msra.mxu0 %v185
    %2067 = vmatpush.bf16.msra.mxu0 %v181
    %2068 = vmatpush.bf16.msra.mxu0 %v177
    %2069 = vmatpush.bf16.msra.mxu0 %v173
    %2070 = vmatpush.bf16.msra.mxu0 %v169
    %2071 = vmatmul.bf16.gmra.mxu0 %v2036
    %v2072 = vpop.f32.mrf.mxu0
    %v2073 = vadd.f32 0.0, %v2072
    %v2074 = vpop.f32.mrf.mxu0
    %2075 = vdwg.mxu0
    %2076 = vmatpush.bf16.msra.mxu0 %v198
    %2077 = vmatpush.bf16.msra.mxu0 %v194
    %2078 = vmatpush.bf16.msra.mxu0 %v190
    %2079 = vmatpush.bf16.msra.mxu0 %v186
    %2080 = vmatpush.bf16.msra.mxu0 %v182
    %2081 = vmatpush.bf16.msra.mxu0 %v178
    %2082 = vmatpush.bf16.msra.mxu0 %v174
    %2083 = vmatpush.bf16.msra.mxu0 %v170
    %2084 = vmatmul.bf16.gmra.mxu0 %v2036
    %v2085 = vpop.f32.mrf.mxu0
    %v2086 = vadd.f32 0.0, %v2085
    %v2087 = vpop.f32.mrf.mxu0
    %2088 = vdwg.mxu0
    %v2089 = vadd.f32 %v2032, %v2047
    %v2090 = vadd.f32 %v2033, %v2060
    %v2091 = vadd.f32 %v2034, %v2073
    %v2092 = vadd.f32 %v2035, %v2086
    %v2093 = vxor.u32 %v2089, 2147483648
    %v2094 = vxor.u32 %v2090, 2147483648
    %v2095 = vxor.u32 %v2091, 2147483648
    %v2096 = vmul.f32 %v2093, 1.442695
    %v2097 = vpow.pop %v2096
    %v2098 = vmul.f32 %v2094, 1.442695
    %v2099 = vpow.pop %v2098
    %v2100 = vmul.f32 %v2095, 1.442695
    %v2101 = vpow.pop %v2100
    %v2102 = vadd.f32 %v2097, 1.0
    %v2103 = vadd.f32 %v2099, 1.0
    %v2104 = vadd.f32 %v2101, 1.0
    %v2105 = vrcp.pop %v2102
    %v2106 = vmul.f32 %v2102, %v2105
    %v2107 = vsub.f32 1.0, %v2106
    %v2108 = vmul.f32 %v2105, %v2107
    %v2109 = vadd.f32 %v2105, %v2108
    %vm2110 = vweird.f32 %v2102
    %vm2111 = vweird.f32 %v2105
    %vm2112 = vmor %vm2110, %vm2111
    %v2113 = vsel %vm2112, %v2105, %v2109
    %v2114 = vand.u32 2147483647, %v2102
    %vm2115 = vcmp.eq.f32.partialorder %v2114, 8.507059e+37
    %v2116 = vand.u32 %v2102, 2147483648
    %v2117 = vor.u32 1.1754944e-38, %v2116
    %v2118 = vsel %vm2115, %v2117, %v2113
    %v2119 = vmul.f32 1.0, %v2118
    %v2120 = vrcp.pop %v2103
    %v2121 = vmul.f32 %v2103, %v2120
    %v2122 = vsub.f32 1.0, %v2121
    %v2123 = vmul.f32 %v2120, %v2122
    %v2124 = vadd.f32 %v2120, %v2123
    %vm2125 = vweird.f32 %v2103
    %vm2126 = vweird.f32 %v2120
    %vm2127 = vmor %vm2125, %vm2126
    %v2128 = vsel %vm2127, %v2120, %v2124
    %v2129 = vand.u32 2147483647, %v2103
    %vm2130 = vcmp.eq.f32.partialorder %v2129, 8.507059e+37
    %v2131 = vand.u32 %v2103, 2147483648
    %v2132 = vor.u32 1.1754944e-38, %v2131
    %v2133 = vsel %vm2130, %v2132, %v2128
    %v2134 = vmul.f32 1.0, %v2133
    %v2135 = vrcp.pop %v2104
    %v2136 = vmul.f32 %v2104, %v2135
    %v2137 = vsub.f32 1.0, %v2136
    %v2138 = vmul.f32 %v2135, %v2137
    %v2139 = vadd.f32 %v2135, %v2138
    %vm2140 = vweird.f32 %v2104
    %vm2141 = vweird.f32 %v2135
    %vm2142 = vmor %vm2140, %vm2141
    %v2143 = vsel %vm2142, %v2135, %v2139
    %v2144 = vand.u32 2147483647, %v2104
    %vm2145 = vcmp.eq.f32.partialorder %v2144, 8.507059e+37
    %v2146 = vand.u32 %v2104, 2147483648
    %v2147 = vor.u32 1.1754944e-38, %v2146
    %v2148 = vsel %vm2145, %v2147, %v2143
    %v2149 = vmul.f32 1.0, %v2148
    %v2150 = vtanh.pop %v2092
    %v2151 = vmul.f32 %v2134, %v2024
    %v2152 = vmul.f32 %v2119, %v2150
    %v2153 = vadd.f32 %v2151, %v2152
    %v2154 = vtanh.pop %v2153
    %v2155 = vmul.f32 %v2149, %v2154
    %s2156 = sld [smem:[#allocation3 + $0xe]]
    %v2157 = vstv %s2156
    %v2158 = vmul.f32 %v2157, %v2155
    %v2159 = vadd.f32 %v2030, %v2158
    %s2160 = scalar_lea.vmem %s0, 480
    %v2161 = vld [vmem:[%s2160] sm:$0xff]
    %v2162 = vld [vmem:[%s2160 + $0x8] sm:$0xff]
    %v2163 = vld [vmem:[%s2160 + $0x10] sm:$0xff]
    %v2164 = vld [vmem:[%s2160 + $0x18] sm:$0xff]
    %v2165 = vpack.c.bf16 %v2155, %v2155
    %2166 = vmatpush.bf16.msra.mxu0 %v195
    %2167 = vmatpush.bf16.msra.mxu0 %v191
    %2168 = vmatpush.bf16.msra.mxu0 %v187
    %2169 = vmatpush.bf16.msra.mxu0 %v183
    %2170 = vmatpush.bf16.msra.mxu0 %v179
    %2171 = vmatpush.bf16.msra.mxu0 %v175
    %2172 = vmatpush.bf16.msra.mxu0 %v171
    %2173 = vmatpush.bf16.msra.mxu0 %v167
    %2174 = vmatmul.bf16.gmra.mxu0 %v2165
    %v2175 = vpop.f32.mrf.mxu0
    %v2176 = vadd.f32 0.0, %v2175
    %v2177 = vpop.f32.mrf.mxu0
    %2178 = vdwg.mxu0
    %2179 = vmatpush.bf16.msra.mxu0 %v196
    %2180 = vmatpush.bf16.msra.mxu0 %v192
    %2181 = vmatpush.bf16.msra.mxu0 %v188
    %2182 = vmatpush.bf16.msra.mxu0 %v184
    %2183 = vmatpush.bf16.msra.mxu0 %v180
    %2184 = vmatpush.bf16.msra.mxu0 %v176
    %2185 = vmatpush.bf16.msra.mxu0 %v172
    %2186 = vmatpush.bf16.msra.mxu0 %v168
    %2187 = vmatmul.bf16.gmra.mxu0 %v2165
    %v2188 = vpop.f32.mrf.mxu0
    %v2189 = vadd.f32 0.0, %v2188
    %v2190 = vpop.f32.mrf.mxu0
    %2191 = vdwg.mxu0
    %2192 = vmatpush.bf16.msra.mxu0 %v197
    %2193 = vmatpush.bf16.msra.mxu0 %v193
    %2194 = vmatpush.bf16.msra.mxu0 %v189
    %2195 = vmatpush.bf16.msra.mxu0 %v185
    %2196 = vmatpush.bf16.msra.mxu0 %v181
    %2197 = vmatpush.bf16.msra.mxu0 %v177
    %2198 = vmatpush.bf16.msra.mxu0 %v173
    %2199 = vmatpush.bf16.msra.mxu0 %v169
    %2200 = vmatmul.bf16.gmra.mxu0 %v2165
    %v2201 = vpop.f32.mrf.mxu0
    %v2202 = vadd.f32 0.0, %v2201
    %v2203 = vpop.f32.mrf.mxu0
    %2204 = vdwg.mxu0
    %2205 = vmatpush.bf16.msra.mxu0 %v198
    %2206 = vmatpush.bf16.msra.mxu0 %v194
    %2207 = vmatpush.bf16.msra.mxu0 %v190
    %2208 = vmatpush.bf16.msra.mxu0 %v186
    %2209 = vmatpush.bf16.msra.mxu0 %v182
    %2210 = vmatpush.bf16.msra.mxu0 %v178
    %2211 = vmatpush.bf16.msra.mxu0 %v174
    %2212 = vmatpush.bf16.msra.mxu0 %v170
    %2213 = vmatmul.bf16.gmra.mxu0 %v2165
    %v2214 = vpop.f32.mrf.mxu0
    %v2215 = vadd.f32 0.0, %v2214
    %v2216 = vpop.f32.mrf.mxu0
    %2217 = vdwg.mxu0
    %v2218 = vadd.f32 %v2161, %v2176
    %v2219 = vadd.f32 %v2162, %v2189
    %v2220 = vadd.f32 %v2163, %v2202
    %v2221 = vadd.f32 %v2164, %v2215
    %v2222 = vxor.u32 %v2218, 2147483648
    %v2223 = vxor.u32 %v2219, 2147483648
    %v2224 = vxor.u32 %v2220, 2147483648
    %v2225 = vmul.f32 %v2222, 1.442695
    %v2226 = vpow.pop %v2225
    %v2227 = vmul.f32 %v2223, 1.442695
    %v2228 = vpow.pop %v2227
    %v2229 = vmul.f32 %v2224, 1.442695
    %v2230 = vpow.pop %v2229
    %v2231 = vadd.f32 %v2226, 1.0
    %v2232 = vadd.f32 %v2228, 1.0
    %v2233 = vadd.f32 %v2230, 1.0
    %v2234 = vrcp.pop %v2231
    %v2235 = vmul.f32 %v2231, %v2234
    %v2236 = vsub.f32 1.0, %v2235
    %v2237 = vmul.f32 %v2234, %v2236
    %v2238 = vadd.f32 %v2234, %v2237
    %vm2239 = vweird.f32 %v2231
    %vm2240 = vweird.f32 %v2234
    %vm2241 = vmor %vm2239, %vm2240
    %v2242 = vsel %vm2241, %v2234, %v2238
    %v2243 = vand.u32 2147483647, %v2231
    %vm2244 = vcmp.eq.f32.partialorder %v2243, 8.507059e+37
    %v2245 = vand.u32 %v2231, 2147483648
    %v2246 = vor.u32 1.1754944e-38, %v2245
    %v2247 = vsel %vm2244, %v2246, %v2242
    %v2248 = vmul.f32 1.0, %v2247
    %v2249 = vrcp.pop %v2232
    %v2250 = vmul.f32 %v2232, %v2249
    %v2251 = vsub.f32 1.0, %v2250
    %v2252 = vmul.f32 %v2249, %v2251
    %v2253 = vadd.f32 %v2249, %v2252
    %vm2254 = vweird.f32 %v2232
    %vm2255 = vweird.f32 %v2249
    %vm2256 = vmor %vm2254, %vm2255
    %v2257 = vsel %vm2256, %v2249, %v2253
    %v2258 = vand.u32 2147483647, %v2232
    %vm2259 = vcmp.eq.f32.partialorder %v2258, 8.507059e+37
    %v2260 = vand.u32 %v2232, 2147483648
    %v2261 = vor.u32 1.1754944e-38, %v2260
    %v2262 = vsel %vm2259, %v2261, %v2257
    %v2263 = vmul.f32 1.0, %v2262
    %v2264 = vrcp.pop %v2233
    %v2265 = vmul.f32 %v2233, %v2264
    %v2266 = vsub.f32 1.0, %v2265
    %v2267 = vmul.f32 %v2264, %v2266
    %v2268 = vadd.f32 %v2264, %v2267
    %vm2269 = vweird.f32 %v2233
    %vm2270 = vweird.f32 %v2264
    %vm2271 = vmor %vm2269, %vm2270
    %v2272 = vsel %vm2271, %v2264, %v2268
    %v2273 = vand.u32 2147483647, %v2233
    %vm2274 = vcmp.eq.f32.partialorder %v2273, 8.507059e+37
    %v2275 = vand.u32 %v2233, 2147483648
    %v2276 = vor.u32 1.1754944e-38, %v2275
    %v2277 = vsel %vm2274, %v2276, %v2272
    %v2278 = vmul.f32 1.0, %v2277
    %v2279 = vtanh.pop %v2221
    %v2280 = vmul.f32 %v2263, %v2153
    %v2281 = vmul.f32 %v2248, %v2279
    %v2282 = vadd.f32 %v2280, %v2281
    %v2283 = vtanh.pop %v2282
    %v2284 = vmul.f32 %v2278, %v2283
    %s2285 = sld [smem:[#allocation3 + $0xf]]
    %v2286 = vstv %s2285
    %v2287 = vmul.f32 %v2286, %v2284
    %v2288 = vadd.f32 %v2159, %v2287
    %s2289 = scalar_lea.vmem %s0, 512
    %v2290 = vld [vmem:[%s2289] sm:$0xff]
    %v2291 = vld [vmem:[%s2289 + $0x8] sm:$0xff]
    %v2292 = vld [vmem:[%s2289 + $0x10] sm:$0xff]
    %v2293 = vld [vmem:[%s2289 + $0x18] sm:$0xff]
    %v2294 = vpack.c.bf16 %v2284, %v2284
    %2295 = vmatpush.bf16.msra.mxu0 %v195
    %2296 = vmatpush.bf16.msra.mxu0 %v191
    %2297 = vmatpush.bf16.msra.mxu0 %v187
    %2298 = vmatpush.bf16.msra.mxu0 %v183
    %2299 = vmatpush.bf16.msra.mxu0 %v179
    %2300 = vmatpush.bf16.msra.mxu0 %v175
    %2301 = vmatpush.bf16.msra.mxu0 %v171
    %2302 = vmatpush.bf16.msra.mxu0 %v167
    %2303 = vmatmul.bf16.gmra.mxu0 %v2294
    %v2304 = vpop.f32.mrf.mxu0
    %v2305 = vadd.f32 0.0, %v2304
    %v2306 = vpop.f32.mrf.mxu0
    %2307 = vdwg.mxu0
    %2308 = vmatpush.bf16.msra.mxu0 %v196
    %2309 = vmatpush.bf16.msra.mxu0 %v192
    %2310 = vmatpush.bf16.msra.mxu0 %v188
    %2311 = vmatpush.bf16.msra.mxu0 %v184
    %2312 = vmatpush.bf16.msra.mxu0 %v180
    %2313 = vmatpush.bf16.msra.mxu0 %v176
    %2314 = vmatpush.bf16.msra.mxu0 %v172
    %2315 = vmatpush.bf16.msra.mxu0 %v168
    %2316 = vmatmul.bf16.gmra.mxu0 %v2294
    %v2317 = vpop.f32.mrf.mxu0
    %v2318 = vadd.f32 0.0, %v2317
    %v2319 = vpop.f32.mrf.mxu0
    %2320 = vdwg.mxu0
    %2321 = vmatpush.bf16.msra.mxu0 %v197
    %2322 = vmatpush.bf16.msra.mxu0 %v193
    %2323 = vmatpush.bf16.msra.mxu0 %v189
    %2324 = vmatpush.bf16.msra.mxu0 %v185
    %2325 = vmatpush.bf16.msra.mxu0 %v181
    %2326 = vmatpush.bf16.msra.mxu0 %v177
    %2327 = vmatpush.bf16.msra.mxu0 %v173
    %2328 = vmatpush.bf16.msra.mxu0 %v169
    %2329 = vmatmul.bf16.gmra.mxu0 %v2294
    %v2330 = vpop.f32.mrf.mxu0
    %v2331 = vadd.f32 0.0, %v2330
    %v2332 = vpop.f32.mrf.mxu0
    %2333 = vdwg.mxu0
    %2334 = vmatpush.bf16.msra.mxu0 %v198
    %2335 = vmatpush.bf16.msra.mxu0 %v194
    %2336 = vmatpush.bf16.msra.mxu0 %v190
    %2337 = vmatpush.bf16.msra.mxu0 %v186
    %2338 = vmatpush.bf16.msra.mxu0 %v182
    %2339 = vmatpush.bf16.msra.mxu0 %v178
    %2340 = vmatpush.bf16.msra.mxu0 %v174
    %2341 = vmatpush.bf16.msra.mxu0 %v170
    %2342 = vmatmul.bf16.gmra.mxu0 %v2294
    %v2343 = vpop.f32.mrf.mxu0
    %v2344 = vadd.f32 0.0, %v2343
    %v2345 = vpop.f32.mrf.mxu0
    %2346 = vdwg.mxu0
    %v2347 = vadd.f32 %v2290, %v2305
    %v2348 = vadd.f32 %v2291, %v2318
    %v2349 = vadd.f32 %v2292, %v2331
    %v2350 = vadd.f32 %v2293, %v2344
    %v2351 = vxor.u32 %v2347, 2147483648
    %v2352 = vxor.u32 %v2348, 2147483648
    %v2353 = vxor.u32 %v2349, 2147483648
    %v2354 = vmul.f32 %v2351, 1.442695
    %v2355 = vpow.pop %v2354
    %v2356 = vmul.f32 %v2352, 1.442695
    %v2357 = vpow.pop %v2356
    %v2358 = vmul.f32 %v2353, 1.442695
    %v2359 = vpow.pop %v2358
    %v2360 = vadd.f32 %v2355, 1.0
    %v2361 = vadd.f32 %v2357, 1.0
    %v2362 = vadd.f32 %v2359, 1.0
    %v2363 = vrcp.pop %v2360
    %v2364 = vmul.f32 %v2360, %v2363
    %v2365 = vsub.f32 1.0, %v2364
    %v2366 = vmul.f32 %v2363, %v2365
    %v2367 = vadd.f32 %v2363, %v2366
    %vm2368 = vweird.f32 %v2360
    %vm2369 = vweird.f32 %v2363
    %vm2370 = vmor %vm2368, %vm2369
    %v2371 = vsel %vm2370, %v2363, %v2367
    %v2372 = vand.u32 2147483647, %v2360
    %vm2373 = vcmp.eq.f32.partialorder %v2372, 8.507059e+37
    %v2374 = vand.u32 %v2360, 2147483648
    %v2375 = vor.u32 1.1754944e-38, %v2374
    %v2376 = vsel %vm2373, %v2375, %v2371
    %v2377 = vmul.f32 1.0, %v2376
    %v2378 = vrcp.pop %v2361
    %v2379 = vmul.f32 %v2361, %v2378
    %v2380 = vsub.f32 1.0, %v2379
    %v2381 = vmul.f32 %v2378, %v2380
    %v2382 = vadd.f32 %v2378, %v2381
    %vm2383 = vweird.f32 %v2361
    %vm2384 = vweird.f32 %v2378
    %vm2385 = vmor %vm2383, %vm2384
    %v2386 = vsel %vm2385, %v2378, %v2382
    %v2387 = vand.u32 2147483647, %v2361
    %vm2388 = vcmp.eq.f32.partialorder %v2387, 8.507059e+37
    %v2389 = vand.u32 %v2361, 2147483648
    %v2390 = vor.u32 1.1754944e-38, %v2389
    %v2391 = vsel %vm2388, %v2390, %v2386
    %v2392 = vmul.f32 1.0, %v2391
    %v2393 = vrcp.pop %v2362
    %v2394 = vmul.f32 %v2362, %v2393
    %v2395 = vsub.f32 1.0, %v2394
    %v2396 = vmul.f32 %v2393, %v2395
    %v2397 = vadd.f32 %v2393, %v2396
    %vm2398 = vweird.f32 %v2362
    %vm2399 = vweird.f32 %v2393
    %vm2400 = vmor %vm2398, %vm2399
    %v2401 = vsel %vm2400, %v2393, %v2397
    %v2402 = vand.u32 2147483647, %v2362
    %vm2403 = vcmp.eq.f32.partialorder %v2402, 8.507059e+37
    %v2404 = vand.u32 %v2362, 2147483648
    %v2405 = vor.u32 1.1754944e-38, %v2404
    %v2406 = vsel %vm2403, %v2405, %v2401
    %v2407 = vmul.f32 1.0, %v2406
    %v2408 = vtanh.pop %v2350
    %v2409 = vmul.f32 %v2392, %v2282
    %v2410 = vmul.f32 %v2377, %v2408
    %v2411 = vadd.f32 %v2409, %v2410
    %v2412 = vtanh.pop %v2411
    %v2413 = vmul.f32 %v2407, %v2412
    %s2414 = sld [smem:[#allocation3 + $0x10]]
    %v2415 = vstv %s2414
    %v2416 = vmul.f32 %v2415, %v2413
    %v2417 = vadd.f32 %v2288, %v2416
    %s2418 = scalar_lea.vmem %s0, 544
    %v2419 = vld [vmem:[%s2418] sm:$0xff]
    %v2420 = vld [vmem:[%s2418 + $0x8] sm:$0xff]
    %v2421 = vld [vmem:[%s2418 + $0x10] sm:$0xff]
    %v2422 = vld [vmem:[%s2418 + $0x18] sm:$0xff]
    %v2423 = vpack.c.bf16 %v2413, %v2413
    %2424 = vmatpush.bf16.msra.mxu0 %v195
    %2425 = vmatpush.bf16.msra.mxu0 %v191
    %2426 = vmatpush.bf16.msra.mxu0 %v187
    %2427 = vmatpush.bf16.msra.mxu0 %v183
    %2428 = vmatpush.bf16.msra.mxu0 %v179
    %2429 = vmatpush.bf16.msra.mxu0 %v175
    %2430 = vmatpush.bf16.msra.mxu0 %v171
    %2431 = vmatpush.bf16.msra.mxu0 %v167
    %2432 = vmatmul.bf16.gmra.mxu0 %v2423
    %v2433 = vpop.f32.mrf.mxu0
    %v2434 = vadd.f32 0.0, %v2433
    %v2435 = vpop.f32.mrf.mxu0
    %2436 = vdwg.mxu0
    %2437 = vmatpush.bf16.msra.mxu0 %v196
    %2438 = vmatpush.bf16.msra.mxu0 %v192
    %2439 = vmatpush.bf16.msra.mxu0 %v188
    %2440 = vmatpush.bf16.msra.mxu0 %v184
    %2441 = vmatpush.bf16.msra.mxu0 %v180
    %2442 = vmatpush.bf16.msra.mxu0 %v176
    %2443 = vmatpush.bf16.msra.mxu0 %v172
    %2444 = vmatpush.bf16.msra.mxu0 %v168
    %2445 = vmatmul.bf16.gmra.mxu0 %v2423
    %v2446 = vpop.f32.mrf.mxu0
    %v2447 = vadd.f32 0.0, %v2446
    %v2448 = vpop.f32.mrf.mxu0
    %2449 = vdwg.mxu0
    %2450 = vmatpush.bf16.msra.mxu0 %v197
    %2451 = vmatpush.bf16.msra.mxu0 %v193
    %2452 = vmatpush.bf16.msra.mxu0 %v189
    %2453 = vmatpush.bf16.msra.mxu0 %v185
    %2454 = vmatpush.bf16.msra.mxu0 %v181
    %2455 = vmatpush.bf16.msra.mxu0 %v177
    %2456 = vmatpush.bf16.msra.mxu0 %v173
    %2457 = vmatpush.bf16.msra.mxu0 %v169
    %2458 = vmatmul.bf16.gmra.mxu0 %v2423
    %v2459 = vpop.f32.mrf.mxu0
    %v2460 = vadd.f32 0.0, %v2459
    %v2461 = vpop.f32.mrf.mxu0
    %2462 = vdwg.mxu0
    %2463 = vmatpush.bf16.msra.mxu0 %v198
    %2464 = vmatpush.bf16.msra.mxu0 %v194
    %2465 = vmatpush.bf16.msra.mxu0 %v190
    %2466 = vmatpush.bf16.msra.mxu0 %v186
    %2467 = vmatpush.bf16.msra.mxu0 %v182
    %2468 = vmatpush.bf16.msra.mxu0 %v178
    %2469 = vmatpush.bf16.msra.mxu0 %v174
    %2470 = vmatpush.bf16.msra.mxu0 %v170
    %2471 = vmatmul.bf16.gmra.mxu0 %v2423
    %v2472 = vpop.f32.mrf.mxu0
    %v2473 = vadd.f32 0.0, %v2472
    %v2474 = vpop.f32.mrf.mxu0
    %2475 = vdwg.mxu0
    %v2476 = vadd.f32 %v2419, %v2434
    %v2477 = vadd.f32 %v2420, %v2447
    %v2478 = vadd.f32 %v2421, %v2460
    %v2479 = vadd.f32 %v2422, %v2473
    %v2480 = vxor.u32 %v2476, 2147483648
    %v2481 = vxor.u32 %v2477, 2147483648
    %v2482 = vxor.u32 %v2478, 2147483648
    %v2483 = vmul.f32 %v2480, 1.442695
    %v2484 = vpow.pop %v2483
    %v2485 = vmul.f32 %v2481, 1.442695
    %v2486 = vpow.pop %v2485
    %v2487 = vmul.f32 %v2482, 1.442695
    %v2488 = vpow.pop %v2487
    %v2489 = vadd.f32 %v2484, 1.0
    %v2490 = vadd.f32 %v2486, 1.0
    %v2491 = vadd.f32 %v2488, 1.0
    %v2492 = vrcp.pop %v2489
    %v2493 = vmul.f32 %v2489, %v2492
    %v2494 = vsub.f32 1.0, %v2493
    %v2495 = vmul.f32 %v2492, %v2494
    %v2496 = vadd.f32 %v2492, %v2495
    %vm2497 = vweird.f32 %v2489
    %vm2498 = vweird.f32 %v2492
    %vm2499 = vmor %vm2497, %vm2498
    %v2500 = vsel %vm2499, %v2492, %v2496
    %v2501 = vand.u32 2147483647, %v2489
    %vm2502 = vcmp.eq.f32.partialorder %v2501, 8.507059e+37
    %v2503 = vand.u32 %v2489, 2147483648
    %v2504 = vor.u32 1.1754944e-38, %v2503
    %v2505 = vsel %vm2502, %v2504, %v2500
    %v2506 = vmul.f32 1.0, %v2505
    %v2507 = vrcp.pop %v2490
    %v2508 = vmul.f32 %v2490, %v2507
    %v2509 = vsub.f32 1.0, %v2508
    %v2510 = vmul.f32 %v2507, %v2509
    %v2511 = vadd.f32 %v2507, %v2510
    %vm2512 = vweird.f32 %v2490
    %vm2513 = vweird.f32 %v2507
    %vm2514 = vmor %vm2512, %vm2513
    %v2515 = vsel %vm2514, %v2507, %v2511
    %v2516 = vand.u32 2147483647, %v2490
    %vm2517 = vcmp.eq.f32.partialorder %v2516, 8.507059e+37
    %v2518 = vand.u32 %v2490, 2147483648
    %v2519 = vor.u32 1.1754944e-38, %v2518
    %v2520 = vsel %vm2517, %v2519, %v2515
    %v2521 = vmul.f32 1.0, %v2520
    %v2522 = vrcp.pop %v2491
    %v2523 = vmul.f32 %v2491, %v2522
    %v2524 = vsub.f32 1.0, %v2523
    %v2525 = vmul.f32 %v2522, %v2524
    %v2526 = vadd.f32 %v2522, %v2525
    %vm2527 = vweird.f32 %v2491
    %vm2528 = vweird.f32 %v2522
    %vm2529 = vmor %vm2527, %vm2528
    %v2530 = vsel %vm2529, %v2522, %v2526
    %v2531 = vand.u32 2147483647, %v2491
    %vm2532 = vcmp.eq.f32.partialorder %v2531, 8.507059e+37
    %v2533 = vand.u32 %v2491, 2147483648
    %v2534 = vor.u32 1.1754944e-38, %v2533
    %v2535 = vsel %vm2532, %v2534, %v2530
    %v2536 = vmul.f32 1.0, %v2535
    %v2537 = vtanh.pop %v2479
    %v2538 = vmul.f32 %v2521, %v2411
    %v2539 = vmul.f32 %v2506, %v2537
    %v2540 = vadd.f32 %v2538, %v2539
    %v2541 = vtanh.pop %v2540
    %v2542 = vmul.f32 %v2536, %v2541
    %s2543 = sld [smem:[#allocation3 + $0x11]]
    %v2544 = vstv %s2543
    %v2545 = vmul.f32 %v2544, %v2542
    %v2546 = vadd.f32 %v2417, %v2545
    %s2547 = scalar_lea.vmem %s0, 576
    %v2548 = vld [vmem:[%s2547] sm:$0xff]
    %v2549 = vld [vmem:[%s2547 + $0x8] sm:$0xff]
    %v2550 = vld [vmem:[%s2547 + $0x10] sm:$0xff]
    %v2551 = vld [vmem:[%s2547 + $0x18] sm:$0xff]
    %v2552 = vpack.c.bf16 %v2542, %v2542
    %2553 = vmatpush.bf16.msra.mxu0 %v195
    %2554 = vmatpush.bf16.msra.mxu0 %v191
    %2555 = vmatpush.bf16.msra.mxu0 %v187
    %2556 = vmatpush.bf16.msra.mxu0 %v183
    %2557 = vmatpush.bf16.msra.mxu0 %v179
    %2558 = vmatpush.bf16.msra.mxu0 %v175
    %2559 = vmatpush.bf16.msra.mxu0 %v171
    %2560 = vmatpush.bf16.msra.mxu0 %v167
    %2561 = vmatmul.bf16.gmra.mxu0 %v2552
    %v2562 = vpop.f32.mrf.mxu0
    %v2563 = vadd.f32 0.0, %v2562
    %v2564 = vpop.f32.mrf.mxu0
    %2565 = vdwg.mxu0
    %2566 = vmatpush.bf16.msra.mxu0 %v196
    %2567 = vmatpush.bf16.msra.mxu0 %v192
    %2568 = vmatpush.bf16.msra.mxu0 %v188
    %2569 = vmatpush.bf16.msra.mxu0 %v184
    %2570 = vmatpush.bf16.msra.mxu0 %v180
    %2571 = vmatpush.bf16.msra.mxu0 %v176
    %2572 = vmatpush.bf16.msra.mxu0 %v172
    %2573 = vmatpush.bf16.msra.mxu0 %v168
    %2574 = vmatmul.bf16.gmra.mxu0 %v2552
    %v2575 = vpop.f32.mrf.mxu0
    %v2576 = vadd.f32 0.0, %v2575
    %v2577 = vpop.f32.mrf.mxu0
    %2578 = vdwg.mxu0
    %2579 = vmatpush.bf16.msra.mxu0 %v197
    %2580 = vmatpush.bf16.msra.mxu0 %v193
    %2581 = vmatpush.bf16.msra.mxu0 %v189
    %2582 = vmatpush.bf16.msra.mxu0 %v185
    %2583 = vmatpush.bf16.msra.mxu0 %v181
    %2584 = vmatpush.bf16.msra.mxu0 %v177
    %2585 = vmatpush.bf16.msra.mxu0 %v173
    %2586 = vmatpush.bf16.msra.mxu0 %v169
    %2587 = vmatmul.bf16.gmra.mxu0 %v2552
    %v2588 = vpop.f32.mrf.mxu0
    %v2589 = vadd.f32 0.0, %v2588
    %v2590 = vpop.f32.mrf.mxu0
    %2591 = vdwg.mxu0
    %2592 = vmatpush.bf16.msra.mxu0 %v198
    %2593 = vmatpush.bf16.msra.mxu0 %v194
    %2594 = vmatpush.bf16.msra.mxu0 %v190
    %2595 = vmatpush.bf16.msra.mxu0 %v186
    %2596 = vmatpush.bf16.msra.mxu0 %v182
    %2597 = vmatpush.bf16.msra.mxu0 %v178
    %2598 = vmatpush.bf16.msra.mxu0 %v174
    %2599 = vmatpush.bf16.msra.mxu0 %v170
    %2600 = vmatmul.bf16.gmra.mxu0 %v2552
    %v2601 = vpop.f32.mrf.mxu0
    %v2602 = vadd.f32 0.0, %v2601
    %v2603 = vpop.f32.mrf.mxu0
    %2604 = vdwg.mxu0
    %v2605 = vadd.f32 %v2548, %v2563
    %v2606 = vadd.f32 %v2549, %v2576
    %v2607 = vadd.f32 %v2550, %v2589
    %v2608 = vadd.f32 %v2551, %v2602
    %v2609 = vxor.u32 %v2605, 2147483648
    %v2610 = vxor.u32 %v2606, 2147483648
    %v2611 = vxor.u32 %v2607, 2147483648
    %v2612 = vmul.f32 %v2609, 1.442695
    %v2613 = vpow.pop %v2612
    %v2614 = vmul.f32 %v2610, 1.442695
    %v2615 = vpow.pop %v2614
    %v2616 = vmul.f32 %v2611, 1.442695
    %v2617 = vpow.pop %v2616
    %v2618 = vadd.f32 %v2613, 1.0
    %v2619 = vadd.f32 %v2615, 1.0
    %v2620 = vadd.f32 %v2617, 1.0
    %v2621 = vrcp.pop %v2618
    %v2622 = vmul.f32 %v2618, %v2621
    %v2623 = vsub.f32 1.0, %v2622
    %v2624 = vmul.f32 %v2621, %v2623
    %v2625 = vadd.f32 %v2621, %v2624
    %vm2626 = vweird.f32 %v2618
    %vm2627 = vweird.f32 %v2621
    %vm2628 = vmor %vm2626, %vm2627
    %v2629 = vsel %vm2628, %v2621, %v2625
    %v2630 = vand.u32 2147483647, %v2618
    %vm2631 = vcmp.eq.f32.partialorder %v2630, 8.507059e+37
    %v2632 = vand.u32 %v2618, 2147483648
    %v2633 = vor.u32 1.1754944e-38, %v2632
    %v2634 = vsel %vm2631, %v2633, %v2629
    %v2635 = vmul.f32 1.0, %v2634
    %v2636 = vrcp.pop %v2619
    %v2637 = vmul.f32 %v2619, %v2636
    %v2638 = vsub.f32 1.0, %v2637
    %v2639 = vmul.f32 %v2636, %v2638
    %v2640 = vadd.f32 %v2636, %v2639
    %vm2641 = vweird.f32 %v2619
    %vm2642 = vweird.f32 %v2636
    %vm2643 = vmor %vm2641, %vm2642
    %v2644 = vsel %vm2643, %v2636, %v2640
    %v2645 = vand.u32 2147483647, %v2619
    %vm2646 = vcmp.eq.f32.partialorder %v2645, 8.507059e+37
    %v2647 = vand.u32 %v2619, 2147483648
    %v2648 = vor.u32 1.1754944e-38, %v2647
    %v2649 = vsel %vm2646, %v2648, %v2644
    %v2650 = vmul.f32 1.0, %v2649
    %v2651 = vrcp.pop %v2620
    %v2652 = vmul.f32 %v2620, %v2651
    %v2653 = vsub.f32 1.0, %v2652
    %v2654 = vmul.f32 %v2651, %v2653
    %v2655 = vadd.f32 %v2651, %v2654
    %vm2656 = vweird.f32 %v2620
    %vm2657 = vweird.f32 %v2651
    %vm2658 = vmor %vm2656, %vm2657
    %v2659 = vsel %vm2658, %v2651, %v2655
    %v2660 = vand.u32 2147483647, %v2620
    %vm2661 = vcmp.eq.f32.partialorder %v2660, 8.507059e+37
    %v2662 = vand.u32 %v2620, 2147483648
    %v2663 = vor.u32 1.1754944e-38, %v2662
    %v2664 = vsel %vm2661, %v2663, %v2659
    %v2665 = vmul.f32 1.0, %v2664
    %v2666 = vtanh.pop %v2608
    %v2667 = vmul.f32 %v2650, %v2540
    %v2668 = vmul.f32 %v2635, %v2666
    %v2669 = vadd.f32 %v2667, %v2668
    %v2670 = vtanh.pop %v2669
    %v2671 = vmul.f32 %v2665, %v2670
    %s2672 = sld [smem:[#allocation3 + $0x12]]
    %v2673 = vstv %s2672
    %v2674 = vmul.f32 %v2673, %v2671
    %v2675 = vadd.f32 %v2546, %v2674
    %s2676 = scalar_lea.vmem %s0, 608
    %v2677 = vld [vmem:[%s2676] sm:$0xff]
    %v2678 = vld [vmem:[%s2676 + $0x8] sm:$0xff]
    %v2679 = vld [vmem:[%s2676 + $0x10] sm:$0xff]
    %v2680 = vld [vmem:[%s2676 + $0x18] sm:$0xff]
    %v2681 = vpack.c.bf16 %v2671, %v2671
    %2682 = vmatpush.bf16.msra.mxu0 %v195
    %2683 = vmatpush.bf16.msra.mxu0 %v191
    %2684 = vmatpush.bf16.msra.mxu0 %v187
    %2685 = vmatpush.bf16.msra.mxu0 %v183
    %2686 = vmatpush.bf16.msra.mxu0 %v179
    %2687 = vmatpush.bf16.msra.mxu0 %v175
    %2688 = vmatpush.bf16.msra.mxu0 %v171
    %2689 = vmatpush.bf16.msra.mxu0 %v167
    %2690 = vmatmul.bf16.gmra.mxu0 %v2681
    %v2691 = vpop.f32.mrf.mxu0
    %v2692 = vadd.f32 0.0, %v2691
    %v2693 = vpop.f32.mrf.mxu0
    %2694 = vdwg.mxu0
    %2695 = vmatpush.bf16.msra.mxu0 %v196
    %2696 = vmatpush.bf16.msra.mxu0 %v192
    %2697 = vmatpush.bf16.msra.mxu0 %v188
    %2698 = vmatpush.bf16.msra.mxu0 %v184
    %2699 = vmatpush.bf16.msra.mxu0 %v180
    %2700 = vmatpush.bf16.msra.mxu0 %v176
    %2701 = vmatpush.bf16.msra.mxu0 %v172
    %2702 = vmatpush.bf16.msra.mxu0 %v168
    %2703 = vmatmul.bf16.gmra.mxu0 %v2681
    %v2704 = vpop.f32.mrf.mxu0
    %v2705 = vadd.f32 0.0, %v2704
    %v2706 = vpop.f32.mrf.mxu0
    %2707 = vdwg.mxu0
    %2708 = vmatpush.bf16.msra.mxu0 %v197
    %2709 = vmatpush.bf16.msra.mxu0 %v193
    %2710 = vmatpush.bf16.msra.mxu0 %v189
    %2711 = vmatpush.bf16.msra.mxu0 %v185
    %2712 = vmatpush.bf16.msra.mxu0 %v181
    %2713 = vmatpush.bf16.msra.mxu0 %v177
    %2714 = vmatpush.bf16.msra.mxu0 %v173
    %2715 = vmatpush.bf16.msra.mxu0 %v169
    %2716 = vmatmul.bf16.gmra.mxu0 %v2681
    %v2717 = vpop.f32.mrf.mxu0
    %v2718 = vadd.f32 0.0, %v2717
    %v2719 = vpop.f32.mrf.mxu0
    %2720 = vdwg.mxu0
    %2721 = vmatpush.bf16.msra.mxu0 %v198
    %2722 = vmatpush.bf16.msra.mxu0 %v194
    %2723 = vmatpush.bf16.msra.mxu0 %v190
    %2724 = vmatpush.bf16.msra.mxu0 %v186
    %2725 = vmatpush.bf16.msra.mxu0 %v182
    %2726 = vmatpush.bf16.msra.mxu0 %v178
    %2727 = vmatpush.bf16.msra.mxu0 %v174
    %2728 = vmatpush.bf16.msra.mxu0 %v170
    %2729 = vmatmul.bf16.gmra.mxu0 %v2681
    %v2730 = vpop.f32.mrf.mxu0
    %v2731 = vadd.f32 0.0, %v2730
    %v2732 = vpop.f32.mrf.mxu0
    %2733 = vdwg.mxu0
    %v2734 = vadd.f32 %v2677, %v2692
    %v2735 = vadd.f32 %v2678, %v2705
    %v2736 = vadd.f32 %v2679, %v2718
    %v2737 = vadd.f32 %v2680, %v2731
    %v2738 = vxor.u32 %v2734, 2147483648
    %v2739 = vxor.u32 %v2735, 2147483648
    %v2740 = vxor.u32 %v2736, 2147483648
    %v2741 = vmul.f32 %v2738, 1.442695
    %v2742 = vpow.pop %v2741
    %v2743 = vmul.f32 %v2739, 1.442695
    %v2744 = vpow.pop %v2743
    %v2745 = vmul.f32 %v2740, 1.442695
    %v2746 = vpow.pop %v2745
    %v2747 = vadd.f32 %v2742, 1.0
    %v2748 = vadd.f32 %v2744, 1.0
    %v2749 = vadd.f32 %v2746, 1.0
    %v2750 = vrcp.pop %v2747
    %v2751 = vmul.f32 %v2747, %v2750
    %v2752 = vsub.f32 1.0, %v2751
    %v2753 = vmul.f32 %v2750, %v2752
    %v2754 = vadd.f32 %v2750, %v2753
    %vm2755 = vweird.f32 %v2747
    %vm2756 = vweird.f32 %v2750
    %vm2757 = vmor %vm2755, %vm2756
    %v2758 = vsel %vm2757, %v2750, %v2754
    %v2759 = vand.u32 2147483647, %v2747
    %vm2760 = vcmp.eq.f32.partialorder %v2759, 8.507059e+37
    %v2761 = vand.u32 %v2747, 2147483648
    %v2762 = vor.u32 1.1754944e-38, %v2761
    %v2763 = vsel %vm2760, %v2762, %v2758
    %v2764 = vmul.f32 1.0, %v2763
    %v2765 = vrcp.pop %v2748
    %v2766 = vmul.f32 %v2748, %v2765
    %v2767 = vsub.f32 1.0, %v2766
    %v2768 = vmul.f32 %v2765, %v2767
    %v2769 = vadd.f32 %v2765, %v2768
    %vm2770 = vweird.f32 %v2748
    %vm2771 = vweird.f32 %v2765
    %vm2772 = vmor %vm2770, %vm2771
    %v2773 = vsel %vm2772, %v2765, %v2769
    %v2774 = vand.u32 2147483647, %v2748
    %vm2775 = vcmp.eq.f32.partialorder %v2774, 8.507059e+37
    %v2776 = vand.u32 %v2748, 2147483648
    %v2777 = vor.u32 1.1754944e-38, %v2776
    %v2778 = vsel %vm2775, %v2777, %v2773
    %v2779 = vmul.f32 1.0, %v2778
    %v2780 = vrcp.pop %v2749
    %v2781 = vmul.f32 %v2749, %v2780
    %v2782 = vsub.f32 1.0, %v2781
    %v2783 = vmul.f32 %v2780, %v2782
    %v2784 = vadd.f32 %v2780, %v2783
    %vm2785 = vweird.f32 %v2749
    %vm2786 = vweird.f32 %v2780
    %vm2787 = vmor %vm2785, %vm2786
    %v2788 = vsel %vm2787, %v2780, %v2784
    %v2789 = vand.u32 2147483647, %v2749
    %vm2790 = vcmp.eq.f32.partialorder %v2789, 8.507059e+37
    %v2791 = vand.u32 %v2749, 2147483648
    %v2792 = vor.u32 1.1754944e-38, %v2791
    %v2793 = vsel %vm2790, %v2792, %v2788
    %v2794 = vmul.f32 1.0, %v2793
    %v2795 = vtanh.pop %v2737
    %v2796 = vmul.f32 %v2779, %v2669
    %v2797 = vmul.f32 %v2764, %v2795
    %v2798 = vadd.f32 %v2796, %v2797
    %v2799 = vtanh.pop %v2798
    %v2800 = vmul.f32 %v2794, %v2799
    %s2801 = sld [smem:[#allocation3 + $0x13]]
    %v2802 = vstv %s2801
    %v2803 = vmul.f32 %v2802, %v2800
    %v2804 = vadd.f32 %v2675, %v2803
    %s2805 = scalar_lea.vmem %s0, 640
    %v2806 = vld [vmem:[%s2805] sm:$0xff]
    %v2807 = vld [vmem:[%s2805 + $0x8] sm:$0xff]
    %v2808 = vld [vmem:[%s2805 + $0x10] sm:$0xff]
    %v2809 = vld [vmem:[%s2805 + $0x18] sm:$0xff]
    %v2810 = vpack.c.bf16 %v2800, %v2800
    %2811 = vmatpush.bf16.msra.mxu0 %v195
    %2812 = vmatpush.bf16.msra.mxu0 %v191
    %2813 = vmatpush.bf16.msra.mxu0 %v187
    %2814 = vmatpush.bf16.msra.mxu0 %v183
    %2815 = vmatpush.bf16.msra.mxu0 %v179
    %2816 = vmatpush.bf16.msra.mxu0 %v175
    %2817 = vmatpush.bf16.msra.mxu0 %v171
    %2818 = vmatpush.bf16.msra.mxu0 %v167
    %2819 = vmatmul.bf16.gmra.mxu0 %v2810
    %v2820 = vpop.f32.mrf.mxu0
    %v2821 = vadd.f32 0.0, %v2820
    %v2822 = vpop.f32.mrf.mxu0
    %2823 = vdwg.mxu0
    %2824 = vmatpush.bf16.msra.mxu0 %v196
    %2825 = vmatpush.bf16.msra.mxu0 %v192
    %2826 = vmatpush.bf16.msra.mxu0 %v188
    %2827 = vmatpush.bf16.msra.mxu0 %v184
    %2828 = vmatpush.bf16.msra.mxu0 %v180
    %2829 = vmatpush.bf16.msra.mxu0 %v176
    %2830 = vmatpush.bf16.msra.mxu0 %v172
    %2831 = vmatpush.bf16.msra.mxu0 %v168
    %2832 = vmatmul.bf16.gmra.mxu0 %v2810
    %v2833 = vpop.f32.mrf.mxu0
    %v2834 = vadd.f32 0.0, %v2833
    %v2835 = vpop.f32.mrf.mxu0
    %2836 = vdwg.mxu0
    %2837 = vmatpush.bf16.msra.mxu0 %v197
    %2838 = vmatpush.bf16.msra.mxu0 %v193
    %2839 = vmatpush.bf16.msra.mxu0 %v189
    %2840 = vmatpush.bf16.msra.mxu0 %v185
    %2841 = vmatpush.bf16.msra.mxu0 %v181
    %2842 = vmatpush.bf16.msra.mxu0 %v177
    %2843 = vmatpush.bf16.msra.mxu0 %v173
    %2844 = vmatpush.bf16.msra.mxu0 %v169
    %2845 = vmatmul.bf16.gmra.mxu0 %v2810
    %v2846 = vpop.f32.mrf.mxu0
    %v2847 = vadd.f32 0.0, %v2846
    %v2848 = vpop.f32.mrf.mxu0
    %2849 = vdwg.mxu0
    %2850 = vmatpush.bf16.msra.mxu0 %v198
    %2851 = vmatpush.bf16.msra.mxu0 %v194
    %2852 = vmatpush.bf16.msra.mxu0 %v190
    %2853 = vmatpush.bf16.msra.mxu0 %v186
    %2854 = vmatpush.bf16.msra.mxu0 %v182
    %2855 = vmatpush.bf16.msra.mxu0 %v178
    %2856 = vmatpush.bf16.msra.mxu0 %v174
    %2857 = vmatpush.bf16.msra.mxu0 %v170
    %2858 = vmatmul.bf16.gmra.mxu0 %v2810
    %v2859 = vpop.f32.mrf.mxu0
    %v2860 = vadd.f32 0.0, %v2859
    %v2861 = vpop.f32.mrf.mxu0
    %2862 = vdwg.mxu0
    %v2863 = vadd.f32 %v2806, %v2821
    %v2864 = vadd.f32 %v2807, %v2834
    %v2865 = vadd.f32 %v2808, %v2847
    %v2866 = vadd.f32 %v2809, %v2860
    %v2867 = vxor.u32 %v2863, 2147483648
    %v2868 = vxor.u32 %v2864, 2147483648
    %v2869 = vxor.u32 %v2865, 2147483648
    %v2870 = vmul.f32 %v2867, 1.442695
    %v2871 = vpow.pop %v2870
    %v2872 = vmul.f32 %v2868, 1.442695
    %v2873 = vpow.pop %v2872
    %v2874 = vmul.f32 %v2869, 1.442695
    %v2875 = vpow.pop %v2874
    %v2876 = vadd.f32 %v2871, 1.0
    %v2877 = vadd.f32 %v2873, 1.0
    %v2878 = vadd.f32 %v2875, 1.0
    %v2879 = vrcp.pop %v2876
    %v2880 = vmul.f32 %v2876, %v2879
    %v2881 = vsub.f32 1.0, %v2880
    %v2882 = vmul.f32 %v2879, %v2881
    %v2883 = vadd.f32 %v2879, %v2882
    %vm2884 = vweird.f32 %v2876
    %vm2885 = vweird.f32 %v2879
    %vm2886 = vmor %vm2884, %vm2885
    %v2887 = vsel %vm2886, %v2879, %v2883
    %v2888 = vand.u32 2147483647, %v2876
    %vm2889 = vcmp.eq.f32.partialorder %v2888, 8.507059e+37
    %v2890 = vand.u32 %v2876, 2147483648
    %v2891 = vor.u32 1.1754944e-38, %v2890
    %v2892 = vsel %vm2889, %v2891, %v2887
    %v2893 = vmul.f32 1.0, %v2892
    %v2894 = vrcp.pop %v2877
    %v2895 = vmul.f32 %v2877, %v2894
    %v2896 = vsub.f32 1.0, %v2895
    %v2897 = vmul.f32 %v2894, %v2896
    %v2898 = vadd.f32 %v2894, %v2897
    %vm2899 = vweird.f32 %v2877
    %vm2900 = vweird.f32 %v2894
    %vm2901 = vmor %vm2899, %vm2900
    %v2902 = vsel %vm2901, %v2894, %v2898
    %v2903 = vand.u32 2147483647, %v2877
    %vm2904 = vcmp.eq.f32.partialorder %v2903, 8.507059e+37
    %v2905 = vand.u32 %v2877, 2147483648
    %v2906 = vor.u32 1.1754944e-38, %v2905
    %v2907 = vsel %vm2904, %v2906, %v2902
    %v2908 = vmul.f32 1.0, %v2907
    %v2909 = vrcp.pop %v2878
    %v2910 = vmul.f32 %v2878, %v2909
    %v2911 = vsub.f32 1.0, %v2910
    %v2912 = vmul.f32 %v2909, %v2911
    %v2913 = vadd.f32 %v2909, %v2912
    %vm2914 = vweird.f32 %v2878
    %vm2915 = vweird.f32 %v2909
    %vm2916 = vmor %vm2914, %vm2915
    %v2917 = vsel %vm2916, %v2909, %v2913
    %v2918 = vand.u32 2147483647, %v2878
    %vm2919 = vcmp.eq.f32.partialorder %v2918, 8.507059e+37
    %v2920 = vand.u32 %v2878, 2147483648
    %v2921 = vor.u32 1.1754944e-38, %v2920
    %v2922 = vsel %vm2919, %v2921, %v2917
    %v2923 = vmul.f32 1.0, %v2922
    %v2924 = vtanh.pop %v2866
    %v2925 = vmul.f32 %v2908, %v2798
    %v2926 = vmul.f32 %v2893, %v2924
    %v2927 = vadd.f32 %v2925, %v2926
    %v2928 = vtanh.pop %v2927
    %v2929 = vmul.f32 %v2923, %v2928
    %s2930 = sld [smem:[#allocation3 + $0x14]]
    %v2931 = vstv %s2930
    %v2932 = vmul.f32 %v2931, %v2929
    %v2933 = vadd.f32 %v2804, %v2932
    %s2934 = scalar_lea.vmem %s0, 672
    %v2935 = vld [vmem:[%s2934] sm:$0xff]
    %v2936 = vld [vmem:[%s2934 + $0x8] sm:$0xff]
    %v2937 = vld [vmem:[%s2934 + $0x10] sm:$0xff]
    %v2938 = vld [vmem:[%s2934 + $0x18] sm:$0xff]
    %v2939 = vpack.c.bf16 %v2929, %v2929
    %2940 = vmatpush.bf16.msra.mxu0 %v195
    %2941 = vmatpush.bf16.msra.mxu0 %v191
    %2942 = vmatpush.bf16.msra.mxu0 %v187
    %2943 = vmatpush.bf16.msra.mxu0 %v183
    %2944 = vmatpush.bf16.msra.mxu0 %v179
    %2945 = vmatpush.bf16.msra.mxu0 %v175
    %2946 = vmatpush.bf16.msra.mxu0 %v171
    %2947 = vmatpush.bf16.msra.mxu0 %v167
    %2948 = vmatmul.bf16.gmra.mxu0 %v2939
    %v2949 = vpop.f32.mrf.mxu0
    %v2950 = vadd.f32 0.0, %v2949
    %v2951 = vpop.f32.mrf.mxu0
    %2952 = vdwg.mxu0
    %2953 = vmatpush.bf16.msra.mxu0 %v196
    %2954 = vmatpush.bf16.msra.mxu0 %v192
    %2955 = vmatpush.bf16.msra.mxu0 %v188
    %2956 = vmatpush.bf16.msra.mxu0 %v184
    %2957 = vmatpush.bf16.msra.mxu0 %v180
    %2958 = vmatpush.bf16.msra.mxu0 %v176
    %2959 = vmatpush.bf16.msra.mxu0 %v172
    %2960 = vmatpush.bf16.msra.mxu0 %v168
    %2961 = vmatmul.bf16.gmra.mxu0 %v2939
    %v2962 = vpop.f32.mrf.mxu0
    %v2963 = vadd.f32 0.0, %v2962
    %v2964 = vpop.f32.mrf.mxu0
    %2965 = vdwg.mxu0
    %2966 = vmatpush.bf16.msra.mxu0 %v197
    %2967 = vmatpush.bf16.msra.mxu0 %v193
    %2968 = vmatpush.bf16.msra.mxu0 %v189
    %2969 = vmatpush.bf16.msra.mxu0 %v185
    %2970 = vmatpush.bf16.msra.mxu0 %v181
    %2971 = vmatpush.bf16.msra.mxu0 %v177
    %2972 = vmatpush.bf16.msra.mxu0 %v173
    %2973 = vmatpush.bf16.msra.mxu0 %v169
    %2974 = vmatmul.bf16.gmra.mxu0 %v2939
    %v2975 = vpop.f32.mrf.mxu0
    %v2976 = vadd.f32 0.0, %v2975
    %v2977 = vpop.f32.mrf.mxu0
    %2978 = vdwg.mxu0
    %2979 = vmatpush.bf16.msra.mxu0 %v198
    %2980 = vmatpush.bf16.msra.mxu0 %v194
    %2981 = vmatpush.bf16.msra.mxu0 %v190
    %2982 = vmatpush.bf16.msra.mxu0 %v186
    %2983 = vmatpush.bf16.msra.mxu0 %v182
    %2984 = vmatpush.bf16.msra.mxu0 %v178
    %2985 = vmatpush.bf16.msra.mxu0 %v174
    %2986 = vmatpush.bf16.msra.mxu0 %v170
    %2987 = vmatmul.bf16.gmra.mxu0 %v2939
    %v2988 = vpop.f32.mrf.mxu0
    %v2989 = vadd.f32 0.0, %v2988
    %v2990 = vpop.f32.mrf.mxu0
    %2991 = vdwg.mxu0
    %v2992 = vadd.f32 %v2935, %v2950
    %v2993 = vadd.f32 %v2936, %v2963
    %v2994 = vadd.f32 %v2937, %v2976
    %v2995 = vadd.f32 %v2938, %v2989
    %v2996 = vxor.u32 %v2992, 2147483648
    %v2997 = vxor.u32 %v2993, 2147483648
    %v2998 = vxor.u32 %v2994, 2147483648
    %v2999 = vmul.f32 %v2996, 1.442695
    %v3000 = vpow.pop %v2999
    %v3001 = vmul.f32 %v2997, 1.442695
    %v3002 = vpow.pop %v3001
    %v3003 = vmul.f32 %v2998, 1.442695
    %v3004 = vpow.pop %v3003
    %v3005 = vadd.f32 %v3000, 1.0
    %v3006 = vadd.f32 %v3002, 1.0
    %v3007 = vadd.f32 %v3004, 1.0
    %v3008 = vrcp.pop %v3005
    %v3009 = vmul.f32 %v3005, %v3008
    %v3010 = vsub.f32 1.0, %v3009
    %v3011 = vmul.f32 %v3008, %v3010
    %v3012 = vadd.f32 %v3008, %v3011
    %vm3013 = vweird.f32 %v3005
    %vm3014 = vweird.f32 %v3008
    %vm3015 = vmor %vm3013, %vm3014
    %v3016 = vsel %vm3015, %v3008, %v3012
    %v3017 = vand.u32 2147483647, %v3005
    %vm3018 = vcmp.eq.f32.partialorder %v3017, 8.507059e+37
    %v3019 = vand.u32 %v3005, 2147483648
    %v3020 = vor.u32 1.1754944e-38, %v3019
    %v3021 = vsel %vm3018, %v3020, %v3016
    %v3022 = vmul.f32 1.0, %v3021
    %v3023 = vrcp.pop %v3006
    %v3024 = vmul.f32 %v3006, %v3023
    %v3025 = vsub.f32 1.0, %v3024
    %v3026 = vmul.f32 %v3023, %v3025
    %v3027 = vadd.f32 %v3023, %v3026
    %vm3028 = vweird.f32 %v3006
    %vm3029 = vweird.f32 %v3023
    %vm3030 = vmor %vm3028, %vm3029
    %v3031 = vsel %vm3030, %v3023, %v3027
    %v3032 = vand.u32 2147483647, %v3006
    %vm3033 = vcmp.eq.f32.partialorder %v3032, 8.507059e+37
    %v3034 = vand.u32 %v3006, 2147483648
    %v3035 = vor.u32 1.1754944e-38, %v3034
    %v3036 = vsel %vm3033, %v3035, %v3031
    %v3037 = vmul.f32 1.0, %v3036
    %v3038 = vrcp.pop %v3007
    %v3039 = vmul.f32 %v3007, %v3038
    %v3040 = vsub.f32 1.0, %v3039
    %v3041 = vmul.f32 %v3038, %v3040
    %v3042 = vadd.f32 %v3038, %v3041
    %vm3043 = vweird.f32 %v3007
    %vm3044 = vweird.f32 %v3038
    %vm3045 = vmor %vm3043, %vm3044
    %v3046 = vsel %vm3045, %v3038, %v3042
    %v3047 = vand.u32 2147483647, %v3007
    %vm3048 = vcmp.eq.f32.partialorder %v3047, 8.507059e+37
    %v3049 = vand.u32 %v3007, 2147483648
    %v3050 = vor.u32 1.1754944e-38, %v3049
    %v3051 = vsel %vm3048, %v3050, %v3046
    %v3052 = vmul.f32 1.0, %v3051
    %v3053 = vtanh.pop %v2995
    %v3054 = vmul.f32 %v3037, %v2927
    %v3055 = vmul.f32 %v3022, %v3053
    %v3056 = vadd.f32 %v3054, %v3055
    %v3057 = vtanh.pop %v3056
    %v3058 = vmul.f32 %v3052, %v3057
    %s3059 = sld [smem:[#allocation3 + $0x15]]
    %v3060 = vstv %s3059
    %v3061 = vmul.f32 %v3060, %v3058
    %v3062 = vadd.f32 %v2933, %v3061
    %s3063 = scalar_lea.vmem %s0, 704
    %v3064 = vld [vmem:[%s3063] sm:$0xff]
    %v3065 = vld [vmem:[%s3063 + $0x8] sm:$0xff]
    %v3066 = vld [vmem:[%s3063 + $0x10] sm:$0xff]
    %v3067 = vld [vmem:[%s3063 + $0x18] sm:$0xff]
    %v3068 = vpack.c.bf16 %v3058, %v3058
    %3069 = vmatpush.bf16.msra.mxu0 %v195
    %3070 = vmatpush.bf16.msra.mxu0 %v191
    %3071 = vmatpush.bf16.msra.mxu0 %v187
    %3072 = vmatpush.bf16.msra.mxu0 %v183
    %3073 = vmatpush.bf16.msra.mxu0 %v179
    %3074 = vmatpush.bf16.msra.mxu0 %v175
    %3075 = vmatpush.bf16.msra.mxu0 %v171
    %3076 = vmatpush.bf16.msra.mxu0 %v167
    %3077 = vmatmul.bf16.gmra.mxu0 %v3068
    %v3078 = vpop.f32.mrf.mxu0
    %v3079 = vadd.f32 0.0, %v3078
    %v3080 = vpop.f32.mrf.mxu0
    %3081 = vdwg.mxu0
    %3082 = vmatpush.bf16.msra.mxu0 %v196
    %3083 = vmatpush.bf16.msra.mxu0 %v192
    %3084 = vmatpush.bf16.msra.mxu0 %v188
    %3085 = vmatpush.bf16.msra.mxu0 %v184
    %3086 = vmatpush.bf16.msra.mxu0 %v180
    %3087 = vmatpush.bf16.msra.mxu0 %v176
    %3088 = vmatpush.bf16.msra.mxu0 %v172
    %3089 = vmatpush.bf16.msra.mxu0 %v168
    %3090 = vmatmul.bf16.gmra.mxu0 %v3068
    %v3091 = vpop.f32.mrf.mxu0
    %v3092 = vadd.f32 0.0, %v3091
    %v3093 = vpop.f32.mrf.mxu0
    %3094 = vdwg.mxu0
    %3095 = vmatpush.bf16.msra.mxu0 %v197
    %3096 = vmatpush.bf16.msra.mxu0 %v193
    %3097 = vmatpush.bf16.msra.mxu0 %v189
    %3098 = vmatpush.bf16.msra.mxu0 %v185
    %3099 = vmatpush.bf16.msra.mxu0 %v181
    %3100 = vmatpush.bf16.msra.mxu0 %v177
    %3101 = vmatpush.bf16.msra.mxu0 %v173
    %3102 = vmatpush.bf16.msra.mxu0 %v169
    %3103 = vmatmul.bf16.gmra.mxu0 %v3068
    %v3104 = vpop.f32.mrf.mxu0
    %v3105 = vadd.f32 0.0, %v3104
    %v3106 = vpop.f32.mrf.mxu0
    %3107 = vdwg.mxu0
    %3108 = vmatpush.bf16.msra.mxu0 %v198
    %3109 = vmatpush.bf16.msra.mxu0 %v194
    %3110 = vmatpush.bf16.msra.mxu0 %v190
    %3111 = vmatpush.bf16.msra.mxu0 %v186
    %3112 = vmatpush.bf16.msra.mxu0 %v182
    %3113 = vmatpush.bf16.msra.mxu0 %v178
    %3114 = vmatpush.bf16.msra.mxu0 %v174
    %3115 = vmatpush.bf16.msra.mxu0 %v170
    %3116 = vmatmul.bf16.gmra.mxu0 %v3068
    %v3117 = vpop.f32.mrf.mxu0
    %v3118 = vadd.f32 0.0, %v3117
    %v3119 = vpop.f32.mrf.mxu0
    %3120 = vdwg.mxu0
    %v3121 = vadd.f32 %v3064, %v3079
    %v3122 = vadd.f32 %v3065, %v3092
    %v3123 = vadd.f32 %v3066, %v3105
    %v3124 = vadd.f32 %v3067, %v3118
    %v3125 = vxor.u32 %v3121, 2147483648
    %v3126 = vxor.u32 %v3122, 2147483648
    %v3127 = vxor.u32 %v3123, 2147483648
    %v3128 = vmul.f32 %v3125, 1.442695
    %v3129 = vpow.pop %v3128
    %v3130 = vmul.f32 %v3126, 1.442695
    %v3131 = vpow.pop %v3130
    %v3132 = vmul.f32 %v3127, 1.442695
    %v3133 = vpow.pop %v3132
    %v3134 = vadd.f32 %v3129, 1.0
    %v3135 = vadd.f32 %v3131, 1.0
    %v3136 = vadd.f32 %v3133, 1.0
    %v3137 = vrcp.pop %v3134
    %v3138 = vmul.f32 %v3134, %v3137
    %v3139 = vsub.f32 1.0, %v3138
    %v3140 = vmul.f32 %v3137, %v3139
    %v3141 = vadd.f32 %v3137, %v3140
    %vm3142 = vweird.f32 %v3134
    %vm3143 = vweird.f32 %v3137
    %vm3144 = vmor %vm3142, %vm3143
    %v3145 = vsel %vm3144, %v3137, %v3141
    %v3146 = vand.u32 2147483647, %v3134
    %vm3147 = vcmp.eq.f32.partialorder %v3146, 8.507059e+37
    %v3148 = vand.u32 %v3134, 2147483648
    %v3149 = vor.u32 1.1754944e-38, %v3148
    %v3150 = vsel %vm3147, %v3149, %v3145
    %v3151 = vmul.f32 1.0, %v3150
    %v3152 = vrcp.pop %v3135
    %v3153 = vmul.f32 %v3135, %v3152
    %v3154 = vsub.f32 1.0, %v3153
    %v3155 = vmul.f32 %v3152, %v3154
    %v3156 = vadd.f32 %v3152, %v3155
    %vm3157 = vweird.f32 %v3135
    %vm3158 = vweird.f32 %v3152
    %vm3159 = vmor %vm3157, %vm3158
    %v3160 = vsel %vm3159, %v3152, %v3156
    %v3161 = vand.u32 2147483647, %v3135
    %vm3162 = vcmp.eq.f32.partialorder %v3161, 8.507059e+37
    %v3163 = vand.u32 %v3135, 2147483648
    %v3164 = vor.u32 1.1754944e-38, %v3163
    %v3165 = vsel %vm3162, %v3164, %v3160
    %v3166 = vmul.f32 1.0, %v3165
    %v3167 = vrcp.pop %v3136
    %v3168 = vmul.f32 %v3136, %v3167
    %v3169 = vsub.f32 1.0, %v3168
    %v3170 = vmul.f32 %v3167, %v3169
    %v3171 = vadd.f32 %v3167, %v3170
    %vm3172 = vweird.f32 %v3136
    %vm3173 = vweird.f32 %v3167
    %vm3174 = vmor %vm3172, %vm3173
    %v3175 = vsel %vm3174, %v3167, %v3171
    %v3176 = vand.u32 2147483647, %v3136
    %vm3177 = vcmp.eq.f32.partialorder %v3176, 8.507059e+37
    %v3178 = vand.u32 %v3136, 2147483648
    %v3179 = vor.u32 1.1754944e-38, %v3178
    %v3180 = vsel %vm3177, %v3179, %v3175
    %v3181 = vmul.f32 1.0, %v3180
    %v3182 = vtanh.pop %v3124
    %v3183 = vmul.f32 %v3166, %v3056
    %v3184 = vmul.f32 %v3151, %v3182
    %v3185 = vadd.f32 %v3183, %v3184
    %v3186 = vtanh.pop %v3185
    %v3187 = vmul.f32 %v3181, %v3186
    %s3188 = sld [smem:[#allocation3 + $0x16]]
    %v3189 = vstv %s3188
    %v3190 = vmul.f32 %v3189, %v3187
    %v3191 = vadd.f32 %v3062, %v3190
    %s3192 = scalar_lea.vmem %s0, 736
    %v3193 = vld [vmem:[%s3192] sm:$0xff]
    %v3194 = vld [vmem:[%s3192 + $0x8] sm:$0xff]
    %v3195 = vld [vmem:[%s3192 + $0x10] sm:$0xff]
    %v3196 = vld [vmem:[%s3192 + $0x18] sm:$0xff]
    %v3197 = vpack.c.bf16 %v3187, %v3187
    %3198 = vmatpush.bf16.msra.mxu0 %v195
    %3199 = vmatpush.bf16.msra.mxu0 %v191
    %3200 = vmatpush.bf16.msra.mxu0 %v187
    %3201 = vmatpush.bf16.msra.mxu0 %v183
    %3202 = vmatpush.bf16.msra.mxu0 %v179
    %3203 = vmatpush.bf16.msra.mxu0 %v175
    %3204 = vmatpush.bf16.msra.mxu0 %v171
    %3205 = vmatpush.bf16.msra.mxu0 %v167
    %3206 = vmatmul.bf16.gmra.mxu0 %v3197
    %v3207 = vpop.f32.mrf.mxu0
    %v3208 = vadd.f32 0.0, %v3207
    %v3209 = vpop.f32.mrf.mxu0
    %3210 = vdwg.mxu0
    %3211 = vmatpush.bf16.msra.mxu0 %v196
    %3212 = vmatpush.bf16.msra.mxu0 %v192
    %3213 = vmatpush.bf16.msra.mxu0 %v188
    %3214 = vmatpush.bf16.msra.mxu0 %v184
    %3215 = vmatpush.bf16.msra.mxu0 %v180
    %3216 = vmatpush.bf16.msra.mxu0 %v176
    %3217 = vmatpush.bf16.msra.mxu0 %v172
    %3218 = vmatpush.bf16.msra.mxu0 %v168
    %3219 = vmatmul.bf16.gmra.mxu0 %v3197
    %v3220 = vpop.f32.mrf.mxu0
    %v3221 = vadd.f32 0.0, %v3220
    %v3222 = vpop.f32.mrf.mxu0
    %3223 = vdwg.mxu0
    %3224 = vmatpush.bf16.msra.mxu0 %v197
    %3225 = vmatpush.bf16.msra.mxu0 %v193
    %3226 = vmatpush.bf16.msra.mxu0 %v189
    %3227 = vmatpush.bf16.msra.mxu0 %v185
    %3228 = vmatpush.bf16.msra.mxu0 %v181
    %3229 = vmatpush.bf16.msra.mxu0 %v177
    %3230 = vmatpush.bf16.msra.mxu0 %v173
    %3231 = vmatpush.bf16.msra.mxu0 %v169
    %3232 = vmatmul.bf16.gmra.mxu0 %v3197
    %v3233 = vpop.f32.mrf.mxu0
    %v3234 = vadd.f32 0.0, %v3233
    %v3235 = vpop.f32.mrf.mxu0
    %3236 = vdwg.mxu0
    %3237 = vmatpush.bf16.msra.mxu0 %v198
    %3238 = vmatpush.bf16.msra.mxu0 %v194
    %3239 = vmatpush.bf16.msra.mxu0 %v190
    %3240 = vmatpush.bf16.msra.mxu0 %v186
    %3241 = vmatpush.bf16.msra.mxu0 %v182
    %3242 = vmatpush.bf16.msra.mxu0 %v178
    %3243 = vmatpush.bf16.msra.mxu0 %v174
    %3244 = vmatpush.bf16.msra.mxu0 %v170
    %3245 = vmatmul.bf16.gmra.mxu0 %v3197
    %v3246 = vpop.f32.mrf.mxu0
    %v3247 = vadd.f32 0.0, %v3246
    %v3248 = vpop.f32.mrf.mxu0
    %3249 = vdwg.mxu0
    %v3250 = vadd.f32 %v3193, %v3208
    %v3251 = vadd.f32 %v3194, %v3221
    %v3252 = vadd.f32 %v3195, %v3234
    %v3253 = vadd.f32 %v3196, %v3247
    %v3254 = vxor.u32 %v3250, 2147483648
    %v3255 = vxor.u32 %v3251, 2147483648
    %v3256 = vxor.u32 %v3252, 2147483648
    %v3257 = vmul.f32 %v3254, 1.442695
    %v3258 = vpow.pop %v3257
    %v3259 = vmul.f32 %v3255, 1.442695
    %v3260 = vpow.pop %v3259
    %v3261 = vmul.f32 %v3256, 1.442695
    %v3262 = vpow.pop %v3261
    %v3263 = vadd.f32 %v3258, 1.0
    %v3264 = vadd.f32 %v3260, 1.0
    %v3265 = vadd.f32 %v3262, 1.0
    %v3266 = vrcp.pop %v3263
    %v3267 = vmul.f32 %v3263, %v3266
    %v3268 = vsub.f32 1.0, %v3267
    %v3269 = vmul.f32 %v3266, %v3268
    %v3270 = vadd.f32 %v3266, %v3269
    %vm3271 = vweird.f32 %v3263
    %vm3272 = vweird.f32 %v3266
    %vm3273 = vmor %vm3271, %vm3272
    %v3274 = vsel %vm3273, %v3266, %v3270
    %v3275 = vand.u32 2147483647, %v3263
    %vm3276 = vcmp.eq.f32.partialorder %v3275, 8.507059e+37
    %v3277 = vand.u32 %v3263, 2147483648
    %v3278 = vor.u32 1.1754944e-38, %v3277
    %v3279 = vsel %vm3276, %v3278, %v3274
    %v3280 = vmul.f32 1.0, %v3279
    %v3281 = vrcp.pop %v3264
    %v3282 = vmul.f32 %v3264, %v3281
    %v3283 = vsub.f32 1.0, %v3282
    %v3284 = vmul.f32 %v3281, %v3283
    %v3285 = vadd.f32 %v3281, %v3284
    %vm3286 = vweird.f32 %v3264
    %vm3287 = vweird.f32 %v3281
    %vm3288 = vmor %vm3286, %vm3287
    %v3289 = vsel %vm3288, %v3281, %v3285
    %v3290 = vand.u32 2147483647, %v3264
    %vm3291 = vcmp.eq.f32.partialorder %v3290, 8.507059e+37
    %v3292 = vand.u32 %v3264, 2147483648
    %v3293 = vor.u32 1.1754944e-38, %v3292
    %v3294 = vsel %vm3291, %v3293, %v3289
    %v3295 = vmul.f32 1.0, %v3294
    %v3296 = vrcp.pop %v3265
    %v3297 = vmul.f32 %v3265, %v3296
    %v3298 = vsub.f32 1.0, %v3297
    %v3299 = vmul.f32 %v3296, %v3298
    %v3300 = vadd.f32 %v3296, %v3299
    %vm3301 = vweird.f32 %v3265
    %vm3302 = vweird.f32 %v3296
    %vm3303 = vmor %vm3301, %vm3302
    %v3304 = vsel %vm3303, %v3296, %v3300
    %v3305 = vand.u32 2147483647, %v3265
    %vm3306 = vcmp.eq.f32.partialorder %v3305, 8.507059e+37
    %v3307 = vand.u32 %v3265, 2147483648
    %v3308 = vor.u32 1.1754944e-38, %v3307
    %v3309 = vsel %vm3306, %v3308, %v3304
    %v3310 = vmul.f32 1.0, %v3309
    %v3311 = vtanh.pop %v3253
    %v3312 = vmul.f32 %v3295, %v3185
    %v3313 = vmul.f32 %v3280, %v3311
    %v3314 = vadd.f32 %v3312, %v3313
    %v3315 = vtanh.pop %v3314
    %v3316 = vmul.f32 %v3310, %v3315
    %s3317 = sld [smem:[#allocation3 + $0x17]]
    %v3318 = vstv %s3317
    %v3319 = vmul.f32 %v3318, %v3316
    %v3320 = vadd.f32 %v3191, %v3319
    %s3321 = scalar_lea.vmem %s0, 768
    %v3322 = vld [vmem:[%s3321] sm:$0xff]
    %v3323 = vld [vmem:[%s3321 + $0x8] sm:$0xff]
    %v3324 = vld [vmem:[%s3321 + $0x10] sm:$0xff]
    %v3325 = vld [vmem:[%s3321 + $0x18] sm:$0xff]
    %v3326 = vpack.c.bf16 %v3316, %v3316
    %3327 = vmatpush.bf16.msra.mxu0 %v195
    %3328 = vmatpush.bf16.msra.mxu0 %v191
    %3329 = vmatpush.bf16.msra.mxu0 %v187
    %3330 = vmatpush.bf16.msra.mxu0 %v183
    %3331 = vmatpush.bf16.msra.mxu0 %v179
    %3332 = vmatpush.bf16.msra.mxu0 %v175
    %3333 = vmatpush.bf16.msra.mxu0 %v171
    %3334 = vmatpush.bf16.msra.mxu0 %v167
    %3335 = vmatmul.bf16.gmra.mxu0 %v3326
    %v3336 = vpop.f32.mrf.mxu0
    %v3337 = vadd.f32 0.0, %v3336
    %v3338 = vpop.f32.mrf.mxu0
    %3339 = vdwg.mxu0
    %3340 = vmatpush.bf16.msra.mxu0 %v196
    %3341 = vmatpush.bf16.msra.mxu0 %v192
    %3342 = vmatpush.bf16.msra.mxu0 %v188
    %3343 = vmatpush.bf16.msra.mxu0 %v184
    %3344 = vmatpush.bf16.msra.mxu0 %v180
    %3345 = vmatpush.bf16.msra.mxu0 %v176
    %3346 = vmatpush.bf16.msra.mxu0 %v172
    %3347 = vmatpush.bf16.msra.mxu0 %v168
    %3348 = vmatmul.bf16.gmra.mxu0 %v3326
    %v3349 = vpop.f32.mrf.mxu0
    %v3350 = vadd.f32 0.0, %v3349
    %v3351 = vpop.f32.mrf.mxu0
    %3352 = vdwg.mxu0
    %3353 = vmatpush.bf16.msra.mxu0 %v197
    %3354 = vmatpush.bf16.msra.mxu0 %v193
    %3355 = vmatpush.bf16.msra.mxu0 %v189
    %3356 = vmatpush.bf16.msra.mxu0 %v185
    %3357 = vmatpush.bf16.msra.mxu0 %v181
    %3358 = vmatpush.bf16.msra.mxu0 %v177
    %3359 = vmatpush.bf16.msra.mxu0 %v173
    %3360 = vmatpush.bf16.msra.mxu0 %v169
    %3361 = vmatmul.bf16.gmra.mxu0 %v3326
    %v3362 = vpop.f32.mrf.mxu0
    %v3363 = vadd.f32 0.0, %v3362
    %v3364 = vpop.f32.mrf.mxu0
    %3365 = vdwg.mxu0
    %3366 = vmatpush.bf16.msra.mxu0 %v198
    %3367 = vmatpush.bf16.msra.mxu0 %v194
    %3368 = vmatpush.bf16.msra.mxu0 %v190
    %3369 = vmatpush.bf16.msra.mxu0 %v186
    %3370 = vmatpush.bf16.msra.mxu0 %v182
    %3371 = vmatpush.bf16.msra.mxu0 %v178
    %3372 = vmatpush.bf16.msra.mxu0 %v174
    %3373 = vmatpush.bf16.msra.mxu0 %v170
    %3374 = vmatmul.bf16.gmra.mxu0 %v3326
    %v3375 = vpop.f32.mrf.mxu0
    %v3376 = vadd.f32 0.0, %v3375
    %v3377 = vpop.f32.mrf.mxu0
    %3378 = vdwg.mxu0
    %v3379 = vadd.f32 %v3322, %v3337
    %v3380 = vadd.f32 %v3323, %v3350
    %v3381 = vadd.f32 %v3324, %v3363
    %v3382 = vadd.f32 %v3325, %v3376
    %v3383 = vxor.u32 %v3379, 2147483648
    %v3384 = vxor.u32 %v3380, 2147483648
    %v3385 = vxor.u32 %v3381, 2147483648
    %v3386 = vmul.f32 %v3383, 1.442695
    %v3387 = vpow.pop %v3386
    %v3388 = vmul.f32 %v3384, 1.442695
    %v3389 = vpow.pop %v3388
    %v3390 = vmul.f32 %v3385, 1.442695
    %v3391 = vpow.pop %v3390
    %v3392 = vadd.f32 %v3387, 1.0
    %v3393 = vadd.f32 %v3389, 1.0
    %v3394 = vadd.f32 %v3391, 1.0
    %v3395 = vrcp.pop %v3392
    %v3396 = vmul.f32 %v3392, %v3395
    %v3397 = vsub.f32 1.0, %v3396
    %v3398 = vmul.f32 %v3395, %v3397
    %v3399 = vadd.f32 %v3395, %v3398
    %vm3400 = vweird.f32 %v3392
    %vm3401 = vweird.f32 %v3395
    %vm3402 = vmor %vm3400, %vm3401
    %v3403 = vsel %vm3402, %v3395, %v3399
    %v3404 = vand.u32 2147483647, %v3392
    %vm3405 = vcmp.eq.f32.partialorder %v3404, 8.507059e+37
    %v3406 = vand.u32 %v3392, 2147483648
    %v3407 = vor.u32 1.1754944e-38, %v3406
    %v3408 = vsel %vm3405, %v3407, %v3403
    %v3409 = vmul.f32 1.0, %v3408
    %v3410 = vrcp.pop %v3393
    %v3411 = vmul.f32 %v3393, %v3410
    %v3412 = vsub.f32 1.0, %v3411
    %v3413 = vmul.f32 %v3410, %v3412
    %v3414 = vadd.f32 %v3410, %v3413
    %vm3415 = vweird.f32 %v3393
    %vm3416 = vweird.f32 %v3410
    %vm3417 = vmor %vm3415, %vm3416
    %v3418 = vsel %vm3417, %v3410, %v3414
    %v3419 = vand.u32 2147483647, %v3393
    %vm3420 = vcmp.eq.f32.partialorder %v3419, 8.507059e+37
    %v3421 = vand.u32 %v3393, 2147483648
    %v3422 = vor.u32 1.1754944e-38, %v3421
    %v3423 = vsel %vm3420, %v3422, %v3418
    %v3424 = vmul.f32 1.0, %v3423
    %v3425 = vrcp.pop %v3394
    %v3426 = vmul.f32 %v3394, %v3425
    %v3427 = vsub.f32 1.0, %v3426
    %v3428 = vmul.f32 %v3425, %v3427
    %v3429 = vadd.f32 %v3425, %v3428
    %vm3430 = vweird.f32 %v3394
    %vm3431 = vweird.f32 %v3425
    %vm3432 = vmor %vm3430, %vm3431
    %v3433 = vsel %vm3432, %v3425, %v3429
    %v3434 = vand.u32 2147483647, %v3394
    %vm3435 = vcmp.eq.f32.partialorder %v3434, 8.507059e+37
    %v3436 = vand.u32 %v3394, 2147483648
    %v3437 = vor.u32 1.1754944e-38, %v3436
    %v3438 = vsel %vm3435, %v3437, %v3433
    %v3439 = vmul.f32 1.0, %v3438
    %v3440 = vtanh.pop %v3382
    %v3441 = vmul.f32 %v3424, %v3314
    %v3442 = vmul.f32 %v3409, %v3440
    %v3443 = vadd.f32 %v3441, %v3442
    %v3444 = vtanh.pop %v3443
    %v3445 = vmul.f32 %v3439, %v3444
    %s3446 = sld [smem:[#allocation3 + $0x18]]
    %v3447 = vstv %s3446
    %v3448 = vmul.f32 %v3447, %v3445
    %v3449 = vadd.f32 %v3320, %v3448
    %3450 = vst [vmem:[%s5] sm:$0xff] %v3445
    %3451 = vst [vmem:[%s6] sm:$0xff] %v3443
    %s3452 = sld [smem:[#allocation2]]
    %v3453 = vstv %s3452
    %v3454 = vadd.f32 %v3449, %v3453
    %v3455 = vxor.u32 %v3454, 2147483648
    %v3456 = vmul.f32 %v3455, 1.442695
    %v3457 = vpow.pop %v3456
    %v3458 = vadd.f32 %v3457, 1.0
    %v3459 = vrcp.pop %v3458
    %v3460 = vmul.f32 %v3458, %v3459
    %v3461 = vsub.f32 1.0, %v3460
    %v3462 = vmul.f32 %v3459, %v3461
    %v3463 = vadd.f32 %v3459, %v3462
    %vm3464 = vweird.f32 %v3458
    %vm3465 = vweird.f32 %v3459
    %vm3466 = vmor %vm3464, %vm3465
    %v3467 = vsel %vm3466, %v3459, %v3463
    %v3468 = vand.u32 2147483647, %v3458
    %vm3469 = vcmp.eq.f32.partialorder %v3468, 8.507059e+37
    %v3470 = vand.u32 %v3458, 2147483648
    %v3471 = vor.u32 1.1754944e-38, %v3470
    %v3472 = vsel %vm3469, %v3471, %v3467
    %v3473 = vmul.f32 1.0, %v3472
    %3475 = vrot.lane.b32.xlu0 %v3473, 104
    %v3476 = vpop.permute.xlu0 %3475
    %vm3478 = vcmask 7168
    %3479 = vst.msk [vmem:[%s4] sm:$0xff] %vm3478, %v3476
    // Predicated region
    $region22: #{rnn_forward.1} parent=1 // pred_check
      _
    $region23: #{rnn_forward.1} parent=1 // pred_check_branch
      %3481 = sbr.rel (0) target = $region25
    $region24: #{rnn_forward.1} parent=1 // pred_region
      _
    $region25: #{rnn_forward.1} parent=1 // pred_fallthru
      _
    // Predicated region
    $region26: #{rnn_forward.1} parent=1 // pred_check
      _
    $region27: #{rnn_forward.1} parent=1 // pred_check_branch
      %3483 = sbr.rel (0) target = $region29
    $region28: #{rnn_forward.1} parent=1 // pred_region
      _
    $region29: #{rnn_forward.1} parent=1 // pred_fallthru
      _
    // Predicated region
    $region30: #{rnn_forward.1} parent=1 // pred_check
      _
    $region31: #{rnn_forward.1} parent=1 // pred_check_branch
      %3485 = sbr.rel (0) target = $region33
    $region32: #{rnn_forward.1} parent=1 // pred_region
      _
    $region33: #{rnn_forward.1} parent=1 // pred_fallthru
      _
    // Predicated region
    $region34: #{rnn_forward.1} parent=1 // pred_check
      _
    $region35: #{rnn_forward.1} parent=1 // pred_check_branch
      %3487 = sbr.rel (0) target = $region37
    $region36: #{rnn_forward.1} parent=1 // pred_region
      _
    $region37: #{rnn_forward.1} parent=1 // pred_fallthru
      _
    // Predicated region
    $region38: #{rnn_forward.1} parent=1 // pred_check
      _
    $region39: #{rnn_forward.1} parent=1 // pred_check_branch
      %3489 = sbr.rel (0) target = $region41
    $region40: #{rnn_forward.1} parent=1 // pred_region
      _
    $region41: #{rnn_forward.1} parent=1 // pred_fallthru
      _
    // Predicated region
    $region42: #{rnn_forward.1} parent=1 // pred_check
      _
    $region43: #{rnn_forward.1} parent=1 // pred_check_branch
      %3491 = sbr.rel (0) target = $region45
    $region44: #{rnn_forward.1} parent=1 // pred_region
      _
    $region45: #{rnn_forward.1} parent=1 // pred_fallthru
      _
    %3492 = vsyncpa [#allocation4], 1

</llo_original>
